<compile_context>
chip_gen: v5e
topology: v5e:2x2
jax: 0.10.0
libtpu: 0.0.40
codegen_flags: <defaults>
</compile_context>

<pallas_src>
import jax
import jax.numpy as jnp
from jax.experimental import pallas as pl
from jax.experimental.pallas import tpu as pltpu


_VMEM_LIMIT = 32 * 1024 * 1024  # scoped-VMEM budget, safe on v5e/v6e/v7x


def _round_up(x, m):
    return ((x + m - 1) // m) * m


def _cdiv(a, b):
    return -(-a // b)


def _pick_row_tiling(m, target):
    """Grid length + row tile so padded M == tile * steps ~= round_up(M, 8).

    Keeps the step count even when > 1 so v7x's two TensorCores split evenly.
    """
    nsteps = max(1, _cdiv(m, target))
    if nsteps > 1 and nsteps % 2:
        nsteps += 1
    tm = _round_up(_cdiv(m, nsteps), 8)
    return nsteps, tm, tm * nsteps


# ----------------------------------------------------------------------------
# Pallas kernels
# ----------------------------------------------------------------------------
def _conv_relu_pool_kernel(x_ref, w_ref, b_ref, o_ref):
    """Fused im2col-matmul + bias + ReLU + 2x2 max-pool.

    x_ref: (4, tm, Kp) bf16 -- the four pooling-quadrant patches of tm pooled
    output positions.  w_ref: (Kp, OCp) bf16.  b_ref: (1, OCp) f32.
    o_ref: (tm, OCp) bf16 -- pooled activations, lane-dense 128-wide store.
    """
    w = w_ref[...]
    b = b_ref[...]

    def quad(q):
        y = jnp.dot(x_ref[q], w, preferred_element_type=jnp.float32)
        return jnp.maximum(y + b, 0.0)

    y = jnp.maximum(jnp.maximum(quad(0), quad(1)),
                    jnp.maximum(quad(2), quad(3)))
    o_ref[...] = y.astype(o_ref.dtype)


def _mlp_kernel(x_ref, w1_ref, b1_ref, w2_ref, b2_ref, w3_ref, b3_ref, o_ref):
    """Fused fc1+ReLU -> fc2+ReLU -> fc3; intermediates never leave VMEM."""
    h = jnp.dot(x_ref[...], w1_ref[...], preferred_element_type=jnp.float32)
    h = jnp.maximum(h + b1_ref[...], 0.0)
    h = jnp.dot(h.astype(jnp.bfloat16), w2_ref[...],
                preferred_element_type=jnp.float32)
    h = jnp.maximum(h + b2_ref[...], 0.0)
    h = jnp.dot(h.astype(jnp.bfloat16), w3_ref[...],
                preferred_element_type=jnp.float32)
    o_ref[...] = (h + b3_ref[...]).astype(o_ref.dtype)


# ----------------------------------------------------------------------------
# Wrappers
# ----------------------------------------------------------------------------
def conv2d_relu_pool_nhwc(x, w_p, b_p, *, cin, kh, kw, tm_target=1024):
    """'valid' conv (stride 1) + ReLU + 2x2/2 max-pool, NHWC, fused in Pallas.

    x:   (N, H, W, C>=cin); only the first `cin` channels are used.
    w_p: (Kp, OCp) bf16 with rows in (kh, kw, cin) order, zero-padded.
    b_p: (1, OCp) f32, zero-padded.
    Returns (N, PH, PW, OCp) bf16 with PH = (H-kh+1)//2, PW = (W-kw+1)//2;
    padded output channels are exact zeros (zero weights + zero bias + ReLU).
    """
    x = x.astype(jnp.bfloat16)
    n, h, wd, _ = x.shape
    kp, ocp = w_p.shape
    k = kh * kw * cin
    oh, ow = h - kh + 1, wd - kw + 1
    ph, pw = oh // 2, ow // 2

    # Quadrant im2col: quadrant (di, dj) holds the patch of conv output
    # position (2p+di, 2q+dj) at pooled position (p, q).  Channel slice
    # (:cin), K->Kp zero padding and the bf16 cast all happen in this single
    # concatenate pass.
    quads = []
    for di in (0, 1):
        for dj in (0, 1):
            cols = [
                x[:, di + ki: di + ki + 2 * ph: 2,
                     dj + kj: dj + kj + 2 * pw: 2, :cin]
                for ki in range(kh) for kj in range(kw)
            ]
            if kp > k:
                cols.append(jnp.zeros((n, ph, pw, kp - k), jnp.bfloat16))
            quads.append(jnp.concatenate(cols, axis=-1))
    p4 = jnp.stack(quads, axis=0).reshape(4, n * ph * pw, kp)

    m = n * ph * pw
    nsteps, tm, mp = _pick_row_tiling(m, tm_target)
    if mp != m:
        p4 = jnp.pad(p4, ((0, 0), (0, mp - m), (0, 0)))

    out = pl.pallas_call(
        _conv_relu_pool_kernel,
        out_shape=jax.ShapeDtypeStruct((mp, ocp), jnp.bfloat16),
        grid=(nsteps,),
        in_specs=[
            pl.BlockSpec((4, tm, kp), lambda i: (0, i, 0)),
            pl.BlockSpec((kp, ocp), lambda i: (0, 0)),
            pl.BlockSpec((1, ocp), lambda i: (0, 0)),
        ],
        out_specs=pl.BlockSpec((tm, ocp), lambda i: (i, 0)),
        compiler_params=pltpu.CompilerParams(
            dimension_semantics=("parallel",),
            vmem_limit_bytes=_VMEM_LIMIT,
        ),
    )(p4, w_p, b_p)
    if mp != m:
        out = out[:m]
    return out.reshape(n, ph, pw, ocp)


def mlp_head(x, w1, b1, w2, b2, w3, b3, *, num_classes, tb_target=512):
    """x: (B, K) with K a multiple of 128; weights pre-padded (in, out) bf16."""
    bsz, k = x.shape
    n1, n2, n3 = w1.shape[1], w2.shape[1], w3.shape[1]
    assert k == w1.shape[0] and k % 128 == 0
    nsteps, tb, bp = _pick_row_tiling(bsz, tb_target)
    xp = x.astype(jnp.bfloat16)
    if bp != bsz:
        xp = jnp.pad(xp, ((0, bp - bsz), (0, 0)))

    const = lambda i: (0, 0)
    out = pl.pallas_call(
        _mlp_kernel,
        out_shape=jax.ShapeDtypeStruct((bp, n3), jnp.float32),
        grid=(nsteps,),
        in_specs=[
            pl.BlockSpec((tb, k), lambda i: (i, 0)),
            pl.BlockSpec((k, n1), const), pl.BlockSpec((1, n1), const),
            pl.BlockSpec((n1, n2), const), pl.BlockSpec((1, n2), const),
            pl.BlockSpec((n2, n3), const), pl.BlockSpec((1, n3), const),
        ],
        out_specs=pl.BlockSpec((tb, n3), lambda i: (i, 0)),
        compiler_params=pltpu.CompilerParams(
            dimension_semantics=("parallel",),
            vmem_limit_bytes=_VMEM_LIMIT,
        ),
    )(xp, w1, b1, w2, b2, w3, b3)
    return out[:bsz, :num_classes]


def adaptive_avg_pool2d_nhwc(x, out_h, out_w):
    """Adaptive average pool on NHWC. Identity on the 5x5 -> 5x5 (32x32) path."""
    n, h, w, c = x.shape
    if (h, w) == (out_h, out_w):
        return x
    dt = x.dtype
    if h % out_h == 0 and w % out_w == 0:
        xr = x.reshape(n, out_h, h // out_h, out_w, w // out_w, c)
        return xr.mean(axis=(2, 4), dtype=jnp.float32).astype(dt)
    rows = []
    for i in range(out_h):
        hs, he = (i * h) // out_h, _cdiv((i + 1) * h, out_h)
        cols = []
        for j in range(out_w):
            ws, we = (j * w) // out_w, _cdiv((j + 1) * w, out_w)
            cols.append(x[:, hs:he, ws:we, :].mean(axis=(1, 2), dtype=jnp.float32))
        rows.append(jnp.stack(cols, axis=1))
    return jnp.stack(rows, axis=1).astype(dt)


# ----------------------------------------------------------------------------
# Parameters: PyTorch-style init + one-time kernel-layout preparation
# ----------------------------------------------------------------------------
def init_params(key, num_classes=10):
    def uniform(k, shape, fan_in):
        bound = 1.0 / jnp.sqrt(jnp.float32(fan_in))
        return jax.random.uniform(k, shape, jnp.float32, -bound, bound)

    ks = jax.random.split(key, 10)
    return {
        "conv1_w": uniform(ks[0], (6, 3, 5, 5), 3 * 5 * 5),
        "conv1_b": uniform(ks[1], (6,), 3 * 5 * 5),
        "conv2_w": uniform(ks[2], (16, 6, 5, 5), 6 * 5 * 5),
        "conv2_b": uniform(ks[3], (16,), 6 * 5 * 5),
        # NB: fc weights here are (in, out); PyTorch nn.Linear checkpoints are
        # (out, in) and would need a transpose before prepare_params.
        "fc1_w": uniform(ks[4], (16 * 5 * 5, 120), 16 * 5 * 5),
        "fc1_b": uniform(ks[5], (120,), 16 * 5 * 5),
        "fc2_w": uniform(ks[6], (120, 84), 120),
        "fc2_b": uniform(ks[7], (84,), 120),
        "fc3_w": uniform(ks[8], (84, num_classes), 84),
        "fc3_b": uniform(ks[9], (num_classes,), 84),
    }


def prepare_params(params):
    """One-time pad/cast/permute of all weights into the kernels' layouts."""
    f32, bf16 = jnp.float32, jnp.bfloat16

    def conv_wb(w, b):
        oc, cin, kh, kw = w.shape
        k, kp, ocp = kh * kw * cin, _round_up(kh * kw * cin, 128), _round_up(oc, 128)
        wp = jnp.transpose(w, (2, 3, 1, 0)).reshape(k, oc)   # rows in (kh, kw, cin) order
        wp = jnp.pad(wp, ((0, kp - k), (0, ocp - oc))).astype(bf16)
        bp = jnp.pad(b, (0, ocp - oc)).astype(f32).reshape(1, ocp)
        return wp, bp

    def fc_wb(w, b):
        kin, nout = w.shape
        kp, npd = _round_up(kin, 128), _round_up(nout, 128)
        wp = jnp.pad(w, ((0, kp - kin), (0, npd - nout))).astype(bf16)
        bp = jnp.pad(b, (0, npd - nout)).astype(f32).reshape(1, npd)
        return wp, bp

    c1w, c1b = conv_wb(params["conv1_w"], params["conv1_b"])
    c2w, c2b = conv_wb(params["conv2_w"], params["conv2_b"])

    # fc1: PyTorch flattens (C, H, W); our pooled NHWC tensor flattens (free
    # reshape) as (H, W, Cpadded).  Scatter fc1 rows into that order once so
    # the forward needs no transpose / channel slice.  Padded channels are
    # exact zeros downstream of the zero-padded conv weights, so zero rows
    # here keep the result identical.
    c_used = params["conv2_w"].shape[0]              # 16
    c_pad = _round_up(c_used, 128)                   # 128
    w1 = params["fc1_w"]                             # (16*5*5, 120)
    n1 = _round_up(w1.shape[1], 128)
    w1 = w1.reshape(c_used, 5, 5, -1).transpose(1, 2, 0, 3)     # (H, W, C, out)
    w1f = jnp.zeros((5, 5, c_pad, n1), f32).at[:, :, :c_used, :w1.shape[-1]].set(w1)
    w1f = w1f.reshape(5 * 5 * c_pad, n1).astype(bf16)
    b1f = jnp.pad(params["fc1_b"],
                  (0, n1 - params["fc1_b"].shape[0])).astype(f32).reshape(1, n1)

    w2f, b2f = fc_wb(params["fc2_w"], params["fc2_b"])
    w3f, b3f = fc_wb(params["fc3_w"], params["fc3_b"])

    return {
        "conv1_w": c1w, "conv1_b": c1b,
        "conv2_w": c2w, "conv2_b": c2b,
        "fc1_w": w1f, "fc1_b": b1f,
        "fc2_w": w2f, "fc2_b": b2f,
        "fc3_w": w3f, "fc3_b": b3f,
    }


# ----------------------------------------------------------------------------
# Forward pass
# ----------------------------------------------------------------------------
def imagenet_forward(prepared, x, *, num_classes=10):
    # x: (N, 3, H, W) NCHW like PyTorch; one boundary transpose + bf16 cast.
    x = jnp.transpose(x, (0, 2, 3, 1)).astype(jnp.bfloat16)

    x = conv2d_relu_pool_nhwc(x, prepared["conv1_w"], prepared["conv1_b"],
                              cin=3, kh=5, kw=5)       # (N, 14, 14, 128) bf16
    x = conv2d_relu_pool_nhwc(x, prepared["conv2_w"], prepared["conv2_b"],
                              cin=6, kh=5, kw=5)       # (N, 5, 5, 128) bf16
    x = adaptive_avg_pool2d_nhwc(x, 5, 5)              # identity on the 32x32 path
    x = x.reshape(x.shape[0], -1)                      # (N, 3200), free reshape

    return mlp_head(x, prepared["fc1_w"], prepared["fc1_b"],
                    prepared["fc2_w"], prepared["fc2_b"],
                    prepared["fc3_w"], prepared["fc3_b"],
                    num_classes=num_classes)


if __name__ == "__main__":
    key = jax.random.PRNGKey(0)
    kx, kparam = jax.random.split(key)
    x = jax.random.normal(kx, (2, 3, 32, 32), dtype=jnp.float32)
    params = init_params(kparam, num_classes=10)
    prepared = prepare_params(params)          # one-time weight reshuffle

    fwd = jax.jit(imagenet_forward)
    out = fwd(prepared, x)
    jax.block_until_ready(out)

    assert out.shape == (2, 10), out.shape
    assert bool(jnp.isfinite(out).all())
    print("KERNEL_OK")
</pallas_src>

<mosaic_0001>
module attributes {stable_mosaic.version = 11 : i64} {
  func.func @_conv_relu_pool_kernel(%arg0: i32, %arg1: memref<4x392x128xbf16, #tpu.memory_space<vmem>>, %arg2: memref<128x128xbf16, #tpu.memory_space<vmem>>, %arg3: memref<1x128xf32, #tpu.memory_space<vmem>>, %arg4: memref<392x128xbf16, #tpu.memory_space<vmem>>) attributes {dimension_semantics = [#tpu.dimension_semantics<parallel>], iteration_bounds = array<i64: 1>, scalar_prefetch = 0 : i64, scratch_operands = 0 : i64, tpu.core_type = #tpu.core_type<tc>, window_params = [{transform_indices = @transform_0, window_bounds = array<i64: 4, 392, 128>}, {pipeline_mode = #tpu.pipeline_mode<synchronous>, transform_indices = @transform_1, window_bounds = array<i64: 128, 128>}, {pipeline_mode = #tpu.pipeline_mode<synchronous>, transform_indices = @transform_2, window_bounds = array<i64: 1, 128>}, {transform_indices = @transform_3, window_bounds = array<i64: 392, 128>}]} {
    %c0 = arith.constant 0 : index
    %c0_0 = arith.constant 0 : index
    %0 = vector.load %arg2[%c0, %c0_0] : memref<128x128xbf16, #tpu.memory_space<vmem>>, vector<128x128xbf16>
    %c0_1 = arith.constant 0 : index
    %c0_2 = arith.constant 0 : index
    %1 = vector.load %arg3[%c0_1, %c0_2] : memref<1x128xf32, #tpu.memory_space<vmem>>, vector<1x128xf32>
    %c0_3 = arith.constant 0 : index
    %c0_4 = arith.constant 0 : index
    %c0_5 = arith.constant 0 : index
    %2 = vector.load %arg1[%c0_3, %c0_4, %c0_5] : memref<4x392x128xbf16, #tpu.memory_space<vmem>>, vector<1x392x128xbf16>
    %3 = vector.shape_cast %2 : vector<1x392x128xbf16> to vector<392x128xbf16>
    %cst = arith.constant dense<0.000000e+00> : vector<392x128xf32>
    %4 = tpu.matmul %3, %0, %cst {dimension_numbers = #tpu.dot_dimension_numbers<[1], [0], [0], [1], [0, 0, 1, 1], [], []>} : vector<392x128xbf16>, vector<128x128xbf16>, vector<392x128xf32> -> vector<392x128xf32>
    %5 = vector.broadcast %1 : vector<1x128xf32> to vector<392x128xf32>
    %6 = arith.addf %4, %5 : vector<392x128xf32>
    %cst_6 = arith.constant 0.000000e+00 : f32
    %7 = vector.broadcast %cst_6 : f32 to vector<392x128xf32>
    %8 = arith.maximumf %6, %7 : vector<392x128xf32>
    %c1 = arith.constant 1 : index
    %c0_7 = arith.constant 0 : index
    %c0_8 = arith.constant 0 : index
    %9 = vector.load %arg1[%c1, %c0_7, %c0_8] : memref<4x392x128xbf16, #tpu.memory_space<vmem>>, vector<1x392x128xbf16>
    %10 = vector.shape_cast %9 : vector<1x392x128xbf16> to vector<392x128xbf16>
    %cst_9 = arith.constant dense<0.000000e+00> : vector<392x128xf32>
    %11 = tpu.matmul %10, %0, %cst_9 {dimension_numbers = #tpu.dot_dimension_numbers<[1], [0], [0], [1], [0, 0, 1, 1], [], []>} : vector<392x128xbf16>, vector<128x128xbf16>, vector<392x128xf32> -> vector<392x128xf32>
    %12 = vector.broadcast %1 : vector<1x128xf32> to vector<392x128xf32>
    %13 = arith.addf %11, %12 : vector<392x128xf32>
    %cst_10 = arith.constant 0.000000e+00 : f32
    %14 = vector.broadcast %cst_10 : f32 to vector<392x128xf32>
    %15 = arith.maximumf %13, %14 : vector<392x128xf32>
    %16 = arith.maximumf %8, %15 : vector<392x128xf32>
    %c2 = arith.constant 2 : index
    %c0_11 = arith.constant 0 : index
    %c0_12 = arith.constant 0 : index
    %17 = vector.load %arg1[%c2, %c0_11, %c0_12] : memref<4x392x128xbf16, #tpu.memory_space<vmem>>, vector<1x392x128xbf16>
    %18 = vector.shape_cast %17 : vector<1x392x128xbf16> to vector<392x128xbf16>
    %cst_13 = arith.constant dense<0.000000e+00> : vector<392x128xf32>
    %19 = tpu.matmul %18, %0, %cst_13 {dimension_numbers = #tpu.dot_dimension_numbers<[1], [0], [0], [1], [0, 0, 1, 1], [], []>} : vector<392x128xbf16>, vector<128x128xbf16>, vector<392x128xf32> -> vector<392x128xf32>
    %20 = vector.broadcast %1 : vector<1x128xf32> to vector<392x128xf32>
    %21 = arith.addf %19, %20 : vector<392x128xf32>
    %cst_14 = arith.constant 0.000000e+00 : f32
    %22 = vector.broadcast %cst_14 : f32 to vector<392x128xf32>
    %23 = arith.maximumf %21, %22 : vector<392x128xf32>
    %c3 = arith.constant 3 : index
    %c0_15 = arith.constant 0 : index
    %c0_16 = arith.constant 0 : index
    %24 = vector.load %arg1[%c3, %c0_15, %c0_16] : memref<4x392x128xbf16, #tpu.memory_space<vmem>>, vector<1x392x128xbf16>
    %25 = vector.shape_cast %24 : vector<1x392x128xbf16> to vector<392x128xbf16>
    %cst_17 = arith.constant dense<0.000000e+00> : vector<392x128xf32>
    %26 = tpu.matmul %25, %0, %cst_17 {dimension_numbers = #tpu.dot_dimension_numbers<[1], [0], [0], [1], [0, 0, 1, 1], [], []>} : vector<392x128xbf16>, vector<128x128xbf16>, vector<392x128xf32> -> vector<392x128xf32>
    %27 = vector.broadcast %1 : vector<1x128xf32> to vector<392x128xf32>
    %28 = arith.addf %26, %27 : vector<392x128xf32>
    %cst_18 = arith.constant 0.000000e+00 : f32
    %29 = vector.broadcast %cst_18 : f32 to vector<392x128xf32>
    %30 = arith.maximumf %28, %29 : vector<392x128xf32>
    %31 = arith.maximumf %23, %30 : vector<392x128xf32>
    %32 = arith.maximumf %16, %31 : vector<392x128xf32>
    %33 = arith.truncf %32 : vector<392x128xf32> to vector<392x128xbf16>
    %c0_19 = arith.constant 0 : index
    %c0_20 = arith.constant 0 : index
    %34 = vector.load %arg4[%c0_19, %c0_20] : memref<392x128xbf16, #tpu.memory_space<vmem>>, vector<392x128xbf16>
    tpu.vector_store %arg4[%c0_19, %c0_20], %33 {strides = array<i32>} : memref<392x128xbf16, #tpu.memory_space<vmem>>, vector<392x128xbf16>,
    return
  }
  func.func @transform_0(%arg0: i32) -> (i32, i32, i32) {
    %c0_i32 = arith.constant 0 : i32
    %c0_i32_0 = arith.constant 0 : i32
    %c0_i32_1 = arith.constant 0 : i32
    return %c0_i32, %arg0, %c0_i32_0 : i32, i32, i32
  }
  func.func @transform_1(%arg0: i32) -> (i32, i32) {
    %c0_i32 = arith.constant 0 : i32
    %c0_i32_0 = arith.constant 0 : i32
    %c0_i32_1 = arith.constant 0 : i32
    return %c0_i32, %c0_i32_0 : i32, i32
  }
  func.func @transform_2(%arg0: i32) -> (i32, i32) {
    %c0_i32 = arith.constant 0 : i32
    %c0_i32_0 = arith.constant 0 : i32
    %c0_i32_1 = arith.constant 0 : i32
    return %c0_i32, %c0_i32_0 : i32, i32
  }
  func.func @transform_3(%arg0: i32) -> (i32, i32) {
    %c0_i32 = arith.constant 0 : i32
    %c0_i32_0 = arith.constant 0 : i32
    return %arg0, %c0_i32 : i32, i32
  }
}

module attributes {stable_mosaic.version = 11 : i64} {
  func.func @_conv_relu_pool_kernel(%arg0: i32, %arg1: memref<4x56x256xbf16, #tpu.memory_space<vmem>>, %arg2: memref<256x128xbf16, #tpu.memory_space<vmem>>, %arg3: memref<1x128xf32, #tpu.memory_space<vmem>>, %arg4: memref<56x128xbf16, #tpu.memory_space<vmem>>) attributes {dimension_semantics = [#tpu.dimension_semantics<parallel>], iteration_bounds = array<i64: 1>, scalar_prefetch = 0 : i64, scratch_operands = 0 : i64, tpu.core_type = #tpu.core_type<tc>, window_params = [{transform_indices = @transform_0, window_bounds = array<i64: 4, 56, 256>}, {pipeline_mode = #tpu.pipeline_mode<synchronous>, transform_indices = @transform_1, window_bounds = array<i64: 256, 128>}, {pipeline_mode = #tpu.pipeline_mode<synchronous>, transform_indices = @transform_2, window_bounds = array<i64: 1, 128>}, {transform_indices = @transform_3, window_bounds = array<i64: 56, 128>}]} {
    %c0 = arith.constant 0 : index
    %c0_0 = arith.constant 0 : index
    %0 = vector.load %arg2[%c0, %c0_0] : memref<256x128xbf16, #tpu.memory_space<vmem>>, vector<256x128xbf16>
    %c0_1 = arith.constant 0 : index
    %c0_2 = arith.constant 0 : index
    %1 = vector.load %arg3[%c0_1, %c0_2] : memref<1x128xf32, #tpu.memory_space<vmem>>, vector<1x128xf32>
    %c0_3 = arith.constant 0 : index
    %c0_4 = arith.constant 0 : index
    %c0_5 = arith.constant 0 : index
    %2 = vector.load %arg1[%c0_3, %c0_4, %c0_5] : memref<4x56x256xbf16, #tpu.memory_space<vmem>>, vector<1x56x256xbf16>
    %3 = vector.shape_cast %2 : vector<1x56x256xbf16> to vector<56x256xbf16>
    %cst = arith.constant dense<0.000000e+00> : vector<56x128xf32>
    %4 = tpu.matmul %3, %0, %cst {dimension_numbers = #tpu.dot_dimension_numbers<[1], [0], [0], [1], [0, 0, 1, 1], [], []>} : vector<56x256xbf16>, vector<256x128xbf16>, vector<56x128xf32> -> vector<56x128xf32>
    %5 = vector.broadcast %1 : vector<1x128xf32> to vector<56x128xf32>
    %6 = arith.addf %4, %5 : vector<56x128xf32>
    %cst_6 = arith.constant 0.000000e+00 : f32
    %7 = vector.broadcast %cst_6 : f32 to vector<56x128xf32>
    %8 = arith.maximumf %6, %7 : vector<56x128xf32>
    %c1 = arith.constant 1 : index
    %c0_7 = arith.constant 0 : index
    %c0_8 = arith.constant 0 : index
    %9 = vector.load %arg1[%c1, %c0_7, %c0_8] : memref<4x56x256xbf16, #tpu.memory_space<vmem>>, vector<1x56x256xbf16>
    %10 = vector.shape_cast %9 : vector<1x56x256xbf16> to vector<56x256xbf16>
    %cst_9 = arith.constant dense<0.000000e+00> : vector<56x128xf32>
    %11 = tpu.matmul %10, %0, %cst_9 {dimension_numbers = #tpu.dot_dimension_numbers<[1], [0], [0], [1], [0, 0, 1, 1], [], []>} : vector<56x256xbf16>, vector<256x128xbf16>, vector<56x128xf32> -> vector<56x128xf32>
    %12 = vector.broadcast %1 : vector<1x128xf32> to vector<56x128xf32>
    %13 = arith.addf %11, %12 : vector<56x128xf32>
    %cst_10 = arith.constant 0.000000e+00 : f32
    %14 = vector.broadcast %cst_10 : f32 to vector<56x128xf32>
    %15 = arith.maximumf %13, %14 : vector<56x128xf32>
    %16 = arith.maximumf %8, %15 : vector<56x128xf32>
    %c2 = arith.constant 2 : index
    %c0_11 = arith.constant 0 : index
    %c0_12 = arith.constant 0 : index
    %17 = vector.load %arg1[%c2, %c0_11, %c0_12] : memref<4x56x256xbf16, #tpu.memory_space<vmem>>, vector<1x56x256xbf16>
    %18 = vector.shape_cast %17 : vector<1x56x256xbf16> to vector<56x256xbf16>
    %cst_13 = arith.constant dense<0.000000e+00> : vector<56x128xf32>
    %19 = tpu.matmul %18, %0, %cst_13 {dimension_numbers = #tpu.dot_dimension_numbers<[1], [0], [0], [1], [0, 0, 1, 1], [], []>} : vector<56x256xbf16>, vector<256x128xbf16>, vector<56x128xf32> -> vector<56x128xf32>
    %20 = vector.broadcast %1 : vector<1x128xf32> to vector<56x128xf32>
    %21 = arith.addf %19, %20 : vector<56x128xf32>
    %cst_14 = arith.constant 0.000000e+00 : f32
    %22 = vector.broadcast %cst_14 : f32 to vector<56x128xf32>
    %23 = arith.maximumf %21, %22 : vector<56x128xf32>
    %c3 = arith.constant 3 : index
    %c0_15 = arith.constant 0 : index
    %c0_16 = arith.constant 0 : index
    %24 = vector.load %arg1[%c3, %c0_15, %c0_16] : memref<4x56x256xbf16, #tpu.memory_space<vmem>>, vector<1x56x256xbf16>
    %25 = vector.shape_cast %24 : vector<1x56x256xbf16> to vector<56x256xbf16>
    %cst_17 = arith.constant dense<0.000000e+00> : vector<56x128xf32>
    %26 = tpu.matmul %25, %0, %cst_17 {dimension_numbers = #tpu.dot_dimension_numbers<[1], [0], [0], [1], [0, 0, 1, 1], [], []>} : vector<56x256xbf16>, vector<256x128xbf16>, vector<56x128xf32> -> vector<56x128xf32>
    %27 = vector.broadcast %1 : vector<1x128xf32> to vector<56x128xf32>
    %28 = arith.addf %26, %27 : vector<56x128xf32>
    %cst_18 = arith.constant 0.000000e+00 : f32
    %29 = vector.broadcast %cst_18 : f32 to vector<56x128xf32>
    %30 = arith.maximumf %28, %29 : vector<56x128xf32>
    %31 = arith.maximumf %23, %30 : vector<56x128xf32>
    %32 = arith.maximumf %16, %31 : vector<56x128xf32>
    %33 = arith.truncf %32 : vector<56x128xf32> to vector<56x128xbf16>
    %c0_19 = arith.constant 0 : index
    %c0_20 = arith.constant 0 : index
    %34 = vector.load %arg4[%c0_19, %c0_20] : memref<56x128xbf16, #tpu.memory_space<vmem>>, vector<56x128xbf16>
    tpu.vector_store %arg4[%c0_19, %c0_20], %33 {strides = array<i32>} : memref<56x128xbf16, #tpu.memory_space<vmem>>, vector<56x128xbf16>,
    return
  }
  func.func @transform_0(%arg0: i32) -> (i32, i32, i32) {
    %c0_i32 = arith.constant 0 : i32
    %c0_i32_0 = arith.constant 0 : i32
    %c0_i32_1 = arith.constant 0 : i32
    return %c0_i32, %arg0, %c0_i32_0 : i32, i32, i32
  }
  func.func @transform_1(%arg0: i32) -> (i32, i32) {
    %c0_i32 = arith.constant 0 : i32
    %c0_i32_0 = arith.constant 0 : i32
    %c0_i32_1 = arith.constant 0 : i32
    return %c0_i32, %c0_i32_0 : i32, i32
  }
  func.func @transform_2(%arg0: i32) -> (i32, i32) {
    %c0_i32 = arith.constant 0 : i32
    %c0_i32_0 = arith.constant 0 : i32
    %c0_i32_1 = arith.constant 0 : i32
    return %c0_i32, %c0_i32_0 : i32, i32
  }
  func.func @transform_3(%arg0: i32) -> (i32, i32) {
    %c0_i32 = arith.constant 0 : i32
    %c0_i32_0 = arith.constant 0 : i32
    return %arg0, %c0_i32 : i32, i32
  }
}

module attributes {stable_mosaic.version = 11 : i64} {
  func.func @_mlp_kernel(%arg0: i32, %arg1: memref<8x3200xbf16, #tpu.memory_space<vmem>>, %arg2: memref<3200x128xbf16, #tpu.memory_space<vmem>>, %arg3: memref<1x128xf32, #tpu.memory_space<vmem>>, %arg4: memref<128x128xbf16, #tpu.memory_space<vmem>>, %arg5: memref<1x128xf32, #tpu.memory_space<vmem>>, %arg6: memref<128x128xbf16, #tpu.memory_space<vmem>>, %arg7: memref<1x128xf32, #tpu.memory_space<vmem>>, %arg8: memref<8x128xf32, #tpu.memory_space<vmem>>) attributes {dimension_semantics = [#tpu.dimension_semantics<parallel>], iteration_bounds = array<i64: 1>, scalar_prefetch = 0 : i64, scratch_operands = 0 : i64, tpu.core_type = #tpu.core_type<tc>, window_params = [{transform_indices = @transform_0, window_bounds = array<i64: 8, 3200>}, {pipeline_mode = #tpu.pipeline_mode<synchronous>, transform_indices = @transform_1, window_bounds = array<i64: 3200, 128>}, {pipeline_mode = #tpu.pipeline_mode<synchronous>, transform_indices = @transform_2, window_bounds = array<i64: 1, 128>}, {pipeline_mode = #tpu.pipeline_mode<synchronous>, transform_indices = @transform_3, window_bounds = array<i64: 128, 128>}, {pipeline_mode = #tpu.pipeline_mode<synchronous>, transform_indices = @transform_4, window_bounds = array<i64: 1, 128>}, {pipeline_mode = #tpu.pipeline_mode<synchronous>, transform_indices = @transform_5, window_bounds = array<i64: 128, 128>}, {pipeline_mode = #tpu.pipeline_mode<synchronous>, transform_indices = @transform_6, window_bounds = array<i64: 1, 128>}, {transform_indices = @transform_7, window_bounds = array<i64: 8, 128>}]} {
    %c0 = arith.constant 0 : index
    %c0_0 = arith.constant 0 : index
    %0 = vector.load %arg1[%c0, %c0_0] : memref<8x3200xbf16, #tpu.memory_space<vmem>>, vector<8x3200xbf16>
    %c0_1 = arith.constant 0 : index
    %c0_2 = arith.constant 0 : index
    %1 = vector.load %arg2[%c0_1, %c0_2] : memref<3200x128xbf16, #tpu.memory_space<vmem>>, vector<3200x128xbf16>
    %cst = arith.constant dense<0.000000e+00> : vector<8x128xf32>
    %2 = tpu.matmul %0, %1, %cst {dimension_numbers = #tpu.dot_dimension_numbers<[1], [0], [0], [1], [0, 0, 1, 1], [], []>} : vector<8x3200xbf16>, vector<3200x128xbf16>, vector<8x128xf32> -> vector<8x128xf32>
    %c0_3 = arith.constant 0 : index
    %c0_4 = arith.constant 0 : index
    %3 = vector.load %arg3[%c0_3, %c0_4] : memref<1x128xf32, #tpu.memory_space<vmem>>, vector<1x128xf32>
    %4 = vector.broadcast %3 : vector<1x128xf32> to vector<8x128xf32>
    %5 = arith.addf %2, %4 : vector<8x128xf32>
    %cst_5 = arith.constant 0.000000e+00 : f32
    %6 = vector.broadcast %cst_5 : f32 to vector<8x128xf32>
    %7 = arith.maximumf %5, %6 : vector<8x128xf32>
    %8 = arith.truncf %7 : vector<8x128xf32> to vector<8x128xbf16>
    %c0_6 = arith.constant 0 : index
    %c0_7 = arith.constant 0 : index
    %9 = vector.load %arg4[%c0_6, %c0_7] : memref<128x128xbf16, #tpu.memory_space<vmem>>, vector<128x128xbf16>
    %cst_8 = arith.constant dense<0.000000e+00> : vector<8x128xf32>
    %10 = tpu.matmul %8, %9, %cst_8 {dimension_numbers = #tpu.dot_dimension_numbers<[1], [0], [0], [1], [0, 0, 1, 1], [], []>} : vector<8x128xbf16>, vector<128x128xbf16>, vector<8x128xf32> -> vector<8x128xf32>
    %c0_9 = arith.constant 0 : index
    %c0_10 = arith.constant 0 : index
    %11 = vector.load %arg5[%c0_9, %c0_10] : memref<1x128xf32, #tpu.memory_space<vmem>>, vector<1x128xf32>
    %12 = vector.broadcast %11 : vector<1x128xf32> to vector<8x128xf32>
    %13 = arith.addf %10, %12 : vector<8x128xf32>
    %cst_11 = arith.constant 0.000000e+00 : f32
    %14 = vector.broadcast %cst_11 : f32 to vector<8x128xf32>
    %15 = arith.maximumf %13, %14 : vector<8x128xf32>
    %16 = arith.truncf %15 : vector<8x128xf32> to vector<8x128xbf16>
    %c0_12 = arith.constant 0 : index
    %c0_13 = arith.constant 0 : index
    %17 = vector.load %arg6[%c0_12, %c0_13] : memref<128x128xbf16, #tpu.memory_space<vmem>>, vector<128x128xbf16>
    %cst_14 = arith.constant dense<0.000000e+00> : vector<8x128xf32>
    %18 = tpu.matmul %16, %17, %cst_14 {dimension_numbers = #tpu.dot_dimension_numbers<[1], [0], [0], [1], [0, 0, 1, 1], [], []>} : vector<8x128xbf16>, vector<128x128xbf16>, vector<8x128xf32> -> vector<8x128xf32>
    %c0_15 = arith.constant 0 : index
    %c0_16 = arith.constant 0 : index
    %19 = vector.load %arg7[%c0_15, %c0_16] : memref<1x128xf32, #tpu.memory_space<vmem>>, vector<1x128xf32>
    %20 = vector.broadcast %19 : vector<1x128xf32> to vector<8x128xf32>
    %21 = arith.addf %18, %20 : vector<8x128xf32>
    %c0_17 = arith.constant 0 : index
    %c0_18 = arith.constant 0 : index
    %22 = vector.load %arg8[%c0_17, %c0_18] : memref<8x128xf32, #tpu.memory_space<vmem>>, vector<8x128xf32>
    tpu.vector_store %arg8[%c0_17, %c0_18], %21 {strides = array<i32>} : memref<8x128xf32, #tpu.memory_space<vmem>>, vector<8x128xf32>,
    return
  }
  func.func @transform_0(%arg0: i32) -> (i32, i32) {
    %c0_i32 = arith.constant 0 : i32
    %c0_i32_0 = arith.constant 0 : i32
    return %arg0, %c0_i32 : i32, i32
  }
  func.func @transform_1(%arg0: i32) -> (i32, i32) {
    %c0_i32 = arith.constant 0 : i32
    %c0_i32_0 = arith.constant 0 : i32
    %c0_i32_1 = arith.constant 0 : i32
    return %c0_i32, %c0_i32_0 : i32, i32
  }
  func.func @transform_2(%arg0: i32) -> (i32, i32) {
    %c0_i32 = arith.constant 0 : i32
    %c0_i32_0 = arith.constant 0 : i32
    %c0_i32_1 = arith.constant 0 : i32
    return %c0_i32, %c0_i32_0 : i32, i32
  }
  func.func @transform_3(%arg0: i32) -> (i32, i32) {
    %c0_i32 = arith.constant 0 : i32
    %c0_i32_0 = arith.constant 0 : i32
    %c0_i32_1 = arith.constant 0 : i32
    return %c0_i32, %c0_i32_0 : i32, i32
  }
  func.func @transform_4(%arg0: i32) -> (i32, i32) {
    %c0_i32 = arith.constant 0 : i32
    %c0_i32_0 = arith.constant 0 : i32
    %c0_i32_1 = arith.constant 0 : i32
    return %c0_i32, %c0_i32_0 : i32, i32
  }
  func.func @transform_5(%arg0: i32) -> (i32, i32) {
    %c0_i32 = arith.constant 0 : i32
    %c0_i32_0 = arith.constant 0 : i32
    %c0_i32_1 = arith.constant 0 : i32
    return %c0_i32, %c0_i32_0 : i32, i32
  }
  func.func @transform_6(%arg0: i32) -> (i32, i32) {
    %c0_i32 = arith.constant 0 : i32
    %c0_i32_0 = arith.constant 0 : i32
    %c0_i32_1 = arith.constant 0 : i32
    return %c0_i32, %c0_i32_0 : i32, i32
  }
  func.func @transform_7(%arg0: i32) -> (i32, i32) {
    %c0_i32 = arith.constant 0 : i32
    %c0_i32_0 = arith.constant 0 : i32
    return %arg0, %c0_i32 : i32, i32
  }
}

</mosaic_0001>

<llo_original>
// kernel: imagenet_forward.3
$region0: #{imagenet_forward.3}
  #allocation0 [shape = 'u32[]', space=smem, size = 0x4, offset = 0x4, fixed_abs, tag = 'smem constant byte address 0x4 - core index']
  #allocation1 [shape = 'u32[72,128]{1,0:T(1,128)}', space=vmem, size = 0x9000, scoped, tag = 'internal scratch']
  %s0 = inlined_call_operand.vmem [shape: bf16[4,392,128], index: 0, kind: input, shape index: {}]
  %s1 = inlined_call_operand.vmem [shape: bf16[128,128], index: 1, kind: input, shape index: {}]
  %s2 = inlined_call_operand.vmem [shape: f32[1,128], index: 2, kind: input, shape index: {}]
  %s3 = inlined_call_operand.vmem [shape: bf16[392,128], index: 3, kind: output, shape index: {}]
  %s4 = sld [smem:[#allocation0]]
  $region22: #{imagenet_forward.3} parent=0
    _
  %s6 = ssub.s32 1, %s4
  %s7 = scalar_select 0, %s6, %s4
  // Predicated region
  $region2: #{imagenet_forward.3} parent=0 // pred_check
    _
  $region3: #{imagenet_forward.3} parent=0 // pred_check_branch
    %9 = sbr.rel (0) target = $region5
  $region4: #{imagenet_forward.3} parent=0 // pred_region
    _
  $region5: #{imagenet_forward.3} parent=0 // pred_fallthru
    _
  // Predicated region
  $region6: #{imagenet_forward.3} parent=0 // pred_check
    _
  $region7: #{imagenet_forward.3} parent=0 // pred_check_branch
    %11 = sbr.rel (0) target = $region9
  $region8: #{imagenet_forward.3} parent=0 // pred_region
    _
  $region9: #{imagenet_forward.3} parent=0 // pred_fallthru
    _
  // Predicated region
  $region10: #{imagenet_forward.3} parent=0 // pred_check
    _
  $region11: #{imagenet_forward.3} parent=0 // pred_check_branch
    %13 = sbr.rel (0) target = $region13
  $region12: #{imagenet_forward.3} parent=0 // pred_region
    _
  $region13: #{imagenet_forward.3} parent=0 // pred_fallthru
    _
  %v14 = vld [vmem:[%s1] sm:$0xf]
  %v15 = vld [vmem:[%s1 + $0x4] sm:$0xf]
  %v16 = vld [vmem:[%s1 + $0x8] sm:$0xf]
  %v17 = vld [vmem:[%s1 + $0xc] sm:$0xf]
  %v18 = vld [vmem:[%s1 + $0x10] sm:$0xf]
  %v19 = vld [vmem:[%s1 + $0x14] sm:$0xf]
  %v20 = vld [vmem:[%s1 + $0x18] sm:$0xf]
  %v21 = vld [vmem:[%s1 + $0x1c] sm:$0xf]
  %v22 = vld [vmem:[%s1 + $0x20] sm:$0xf]
  %v23 = vld [vmem:[%s1 + $0x24] sm:$0xf]
  %v24 = vld [vmem:[%s1 + $0x28] sm:$0xf]
  %v25 = vld [vmem:[%s1 + $0x2c] sm:$0xf]
  %v26 = vld [vmem:[%s1 + $0x30] sm:$0xf]
  %v27 = vld [vmem:[%s1 + $0x34] sm:$0xf]
  %v28 = vld [vmem:[%s1 + $0x38] sm:$0xf]
  %v29 = vld [vmem:[%s1 + $0x3c] sm:$0xf]
  %v30 = vld [vmem:[%s2] sm:$0x1]
  %v31 = vld [vmem:[%s0] sm:$0xf]
  %v32 = vld [vmem:[%s0 + $0x4] sm:$0xf]
  %v33 = vld [vmem:[%s0 + $0x8] sm:$0xf]
  %v34 = vld [vmem:[%s0 + $0xc] sm:$0xf]
  %v35 = vld [vmem:[%s0 + $0x10] sm:$0xf]
  %v36 = vld [vmem:[%s0 + $0x14] sm:$0xf]
  %v37 = vld [vmem:[%s0 + $0x18] sm:$0xf]
  %v38 = vld [vmem:[%s0 + $0x1c] sm:$0xf]
  %v39 = vld [vmem:[%s0 + $0x20] sm:$0xf]
  %v40 = vld [vmem:[%s0 + $0x24] sm:$0xf]
  %v41 = vld [vmem:[%s0 + $0x28] sm:$0xf]
  %v42 = vld [vmem:[%s0 + $0x2c] sm:$0xf]
  %v43 = vld [vmem:[%s0 + $0x30] sm:$0xf]
  %v44 = vld [vmem:[%s0 + $0x34] sm:$0xf]
  %v45 = vld [vmem:[%s0 + $0x38] sm:$0xf]
  %v46 = vld [vmem:[%s0 + $0x3c] sm:$0xf]
  %v47 = vld [vmem:[%s0 + $0x40] sm:$0xf]
  %v48 = vld [vmem:[%s0 + $0x44] sm:$0xf]
  %v49 = vld [vmem:[%s0 + $0x48] sm:$0xf]
  %v50 = vld [vmem:[%s0 + $0x4c] sm:$0xf]
  %v51 = vld [vmem:[%s0 + $0x50] sm:$0xf]
  %v52 = vld [vmem:[%s0 + $0x54] sm:$0xf]
  %v53 = vld [vmem:[%s0 + $0x58] sm:$0xf]
  %v54 = vld [vmem:[%s0 + $0x5c] sm:$0xf]
  %v55 = vld [vmem:[%s0 + $0x60] sm:$0xf]
  %v56 = vld [vmem:[%s0 + $0x64] sm:$0xf]
  %v57 = vld [vmem:[%s0 + $0x68] sm:$0xf]
  %v58 = vld [vmem:[%s0 + $0x6c] sm:$0xf]
  %v59 = vld [vmem:[%s0 + $0x70] sm:$0xf]
  %v60 = vld [vmem:[%s0 + $0x74] sm:$0xf]
  %v61 = vld [vmem:[%s0 + $0x78] sm:$0xf]
  %v62 = vld [vmem:[%s0 + $0x7c] sm:$0xf]
  %v63 = vld [vmem:[%s0 + $0x80] sm:$0xf]
  %v64 = vld [vmem:[%s0 + $0x84] sm:$0xf]
  %v65 = vld [vmem:[%s0 + $0x88] sm:$0xf]
  %v66 = vld [vmem:[%s0 + $0x8c] sm:$0xf]
  %v67 = vld [vmem:[%s0 + $0x90] sm:$0xf]
  %v68 = vld [vmem:[%s0 + $0x94] sm:$0xf]
  %v69 = vld [vmem:[%s0 + $0x98] sm:$0xf]
  %v70 = vld [vmem:[%s0 + $0x9c] sm:$0xf]
  %v71 = vld [vmem:[%s0 + $0xa0] sm:$0xf]
  %v72 = vld [vmem:[%s0 + $0xa4] sm:$0xf]
  %v73 = vld [vmem:[%s0 + $0xa8] sm:$0xf]
  %v74 = vld [vmem:[%s0 + $0xac] sm:$0xf]
  %v75 = vld [vmem:[%s0 + $0xb0] sm:$0xf]
  %v76 = vld [vmem:[%s0 + $0xb4] sm:$0xf]
  %v77 = vld [vmem:[%s0 + $0xb8] sm:$0xf]
  %v78 = vld [vmem:[%s0 + $0xbc] sm:$0xf]
  %v79 = vld [vmem:[%s0 + $0xc0] sm:$0xf]
  %v81 = vperm.slane %v30, 0
  %v132 = vunpack.c.l.b16 %v31
  %v133 = vunpack.c.l.b16 %v32
  %v134 = vunpack.c.l.b16 %v33
  %v135 = vunpack.c.l.b16 %v34
  %v136 = vunpack.c.l.b16 %v35
  %v137 = vunpack.c.l.b16 %v36
  %v138 = vunpack.c.l.b16 %v37
  %v139 = vunpack.c.l.b16 %v38
  %v140 = vunpack.c.l.b16 %v39
  %v141 = vunpack.c.l.b16 %v40
  %v142 = vunpack.c.l.b16 %v41
  %v143 = vunpack.c.l.b16 %v42
  %v144 = vunpack.c.l.b16 %v43
  %v145 = vunpack.c.l.b16 %v44
  %v146 = vunpack.c.l.b16 %v45
  %v147 = vunpack.c.l.b16 %v46
  %v148 = vunpack.c.l.b16 %v47
  %v149 = vunpack.c.l.b16 %v48
  %v150 = vunpack.c.l.b16 %v49
  %v151 = vunpack.c.l.b16 %v50
  %v152 = vunpack.c.l.b16 %v51
  %v153 = vunpack.c.l.b16 %v52
  %v154 = vunpack.c.l.b16 %v53
  %v155 = vunpack.c.l.b16 %v54
  %v156 = vunpack.c.l.b16 %v55
  %v157 = vunpack.c.l.b16 %v56
  %v158 = vunpack.c.l.b16 %v57
  %v159 = vunpack.c.l.b16 %v58
  %v160 = vunpack.c.l.b16 %v59
  %v161 = vunpack.c.l.b16 %v60
  %v162 = vunpack.c.l.b16 %v61
  %v163 = vunpack.c.l.b16 %v62
  %v164 = vunpack.c.l.b16 %v63
  %v165 = vunpack.c.l.b16 %v64
  %v166 = vunpack.c.l.b16 %v65
  %v167 = vunpack.c.l.b16 %v66
  %v168 = vunpack.c.l.b16 %v67
  %v169 = vunpack.c.l.b16 %v68
  %v170 = vunpack.c.l.b16 %v69
  %v171 = vunpack.c.l.b16 %v70
  %v172 = vunpack.c.l.b16 %v71
  %v173 = vunpack.c.l.b16 %v72
  %v174 = vunpack.c.l.b16 %v73
  %v175 = vunpack.c.l.b16 %v74
  %v176 = vunpack.c.l.b16 %v75
  %v177 = vunpack.c.l.b16 %v76
  %v178 = vunpack.c.l.b16 %v77
  %v179 = vunpack.c.l.b16 %v78
  %v180 = vunpack.c.l.b16 %v79
  %v181 = vpack.c.b16 %v133, %v132
  %v182 = vpack.c.b16 %v135, %v134
  %v183 = vpack.c.b16 %v137, %v136
  %v184 = vpack.c.b16 %v139, %v138
  %v185 = vpack.c.b16 %v141, %v140
  %v186 = vpack.c.b16 %v143, %v142
  %v187 = vpack.c.b16 %v145, %v144
  %v188 = vpack.c.b16 %v147, %v146
  %v189 = vpack.c.b16 %v149, %v148
  %v190 = vpack.c.b16 %v151, %v150
  %v191 = vpack.c.b16 %v153, %v152
  %v192 = vpack.c.b16 %v155, %v154
  %v193 = vpack.c.b16 %v157, %v156
  %v194 = vpack.c.b16 %v159, %v158
  %v195 = vpack.c.b16 %v161, %v160
  %v196 = vpack.c.b16 %v163, %v162
  %v197 = vpack.c.b16 %v165, %v164
  %v198 = vpack.c.b16 %v167, %v166
  %v199 = vpack.c.b16 %v169, %v168
  %v200 = vpack.c.b16 %v171, %v170
  %v201 = vpack.c.b16 %v173, %v172
  %v202 = vpack.c.b16 %v175, %v174
  %v203 = vpack.c.b16 %v177, %v176
  %v204 = vpack.c.b16 %v179, %v178
  %v205 = vpack.c.b16 %v180, %v180
  %v247 = vunpack.c.l.b16 %v14
  %v248 = vunpack.c.l.b16 %v15
  %v249 = vunpack.c.l.b16 %v16
  %v250 = vunpack.c.l.b16 %v17
  %v251 = vunpack.c.l.b16 %v18
  %v252 = vunpack.c.l.b16 %v19
  %v253 = vunpack.c.l.b16 %v20
  %v254 = vunpack.c.l.b16 %v21
  %v255 = vunpack.c.l.b16 %v22
  %v256 = vunpack.c.l.b16 %v23
  %v257 = vunpack.c.l.b16 %v24
  %v258 = vunpack.c.l.b16 %v25
  %v259 = vunpack.c.l.b16 %v26
  %v260 = vunpack.c.l.b16 %v27
  %v261 = vunpack.c.l.b16 %v28
  %v262 = vunpack.c.l.b16 %v29
  %v263 = vpack.c.b16 %v248, %v247
  %v264 = vpack.c.b16 %v250, %v249
  %v265 = vpack.c.b16 %v252, %v251
  %v266 = vpack.c.b16 %v254, %v253
  %v267 = vpack.c.b16 %v256, %v255
  %v268 = vpack.c.b16 %v258, %v257
  %v269 = vpack.c.b16 %v260, %v259
  %v270 = vpack.c.b16 %v262, %v261
  %279 = vmatpush.bf16.msra.mxu0 %v270
  %280 = vmatpush.bf16.msra.mxu0 %v269
  %281 = vmatpush.bf16.msra.mxu0 %v268
  %282 = vmatpush.bf16.msra.mxu0 %v267
  %283 = vmatpush.bf16.msra.mxu0 %v266
  %284 = vmatpush.bf16.msra.mxu0 %v265
  %285 = vmatpush.bf16.msra.mxu0 %v264
  %286 = vmatpush.bf16.msra.mxu0 %v263
  %287 = vmatmul.bf16.gmra.mxu0 %v181
  %v288 = vpop.f32.mrf.mxu0
  %v289 = vadd.f32 %v81, %v288
  %v290 = vpop.f32.mrf.mxu0
  %v291 = vadd.f32 %v81, %v290
  %292 = vmatmul.bf16.gmra.mxu0 %v182
  %v293 = vpop.f32.mrf.mxu0
  %v294 = vadd.f32 %v81, %v293
  %v295 = vpop.f32.mrf.mxu0
  %v296 = vadd.f32 %v81, %v295
  %297 = vmatmul.bf16.gmra.mxu0 %v183
  %v298 = vpop.f32.mrf.mxu0
  %v299 = vadd.f32 %v81, %v298
  %v300 = vpop.f32.mrf.mxu0
  %v301 = vadd.f32 %v81, %v300
  %302 = vmatmul.bf16.gmra.mxu0 %v184
  %v303 = vpop.f32.mrf.mxu0
  %v304 = vadd.f32 %v81, %v303
  %v305 = vpop.f32.mrf.mxu0
  %v306 = vadd.f32 %v81, %v305
  %307 = vmatmul.bf16.gmra.mxu0 %v185
  %v308 = vpop.f32.mrf.mxu0
  %v309 = vadd.f32 %v81, %v308
  %v310 = vpop.f32.mrf.mxu0
  %v311 = vadd.f32 %v81, %v310
  %312 = vmatmul.bf16.gmra.mxu0 %v186
  %v313 = vpop.f32.mrf.mxu0
  %v314 = vadd.f32 %v81, %v313
  %v315 = vpop.f32.mrf.mxu0
  %v316 = vadd.f32 %v81, %v315
  %317 = vmatmul.bf16.gmra.mxu0 %v187
  %v318 = vpop.f32.mrf.mxu0
  %v319 = vadd.f32 %v81, %v318
  %v320 = vpop.f32.mrf.mxu0
  %v321 = vadd.f32 %v81, %v320
  %322 = vmatmul.bf16.gmra.mxu0 %v188
  %v323 = vpop.f32.mrf.mxu0
  %v324 = vadd.f32 %v81, %v323
  %v325 = vpop.f32.mrf.mxu0
  %v326 = vadd.f32 %v81, %v325
  %327 = vmatmul.bf16.gmra.mxu0 %v189
  %v328 = vpop.f32.mrf.mxu0
  %v329 = vadd.f32 %v81, %v328
  %v330 = vpop.f32.mrf.mxu0
  %v331 = vadd.f32 %v81, %v330
  %332 = vmatmul.bf16.gmra.mxu0 %v190
  %v333 = vpop.f32.mrf.mxu0
  %v334 = vadd.f32 %v81, %v333
  %v335 = vpop.f32.mrf.mxu0
  %v336 = vadd.f32 %v81, %v335
  %337 = vmatmul.bf16.gmra.mxu0 %v191
  %v338 = vpop.f32.mrf.mxu0
  %v339 = vadd.f32 %v81, %v338
  %v340 = vpop.f32.mrf.mxu0
  %v341 = vadd.f32 %v81, %v340
  %342 = vmatmul.bf16.gmra.mxu0 %v192
  %v343 = vpop.f32.mrf.mxu0
  %v344 = vadd.f32 %v81, %v343
  %v345 = vpop.f32.mrf.mxu0
  %v346 = vadd.f32 %v81, %v345
  %347 = vmatmul.bf16.gmra.mxu0 %v193
  %v348 = vpop.f32.mrf.mxu0
  %v349 = vadd.f32 %v81, %v348
  %v350 = vpop.f32.mrf.mxu0
  %v351 = vadd.f32 %v81, %v350
  %352 = vmatmul.bf16.gmra.mxu0 %v194
  %v353 = vpop.f32.mrf.mxu0
  %v354 = vadd.f32 %v81, %v353
  %v355 = vpop.f32.mrf.mxu0
  %v356 = vadd.f32 %v81, %v355
  %357 = vmatmul.bf16.gmra.mxu0 %v195
  %v358 = vpop.f32.mrf.mxu0
  %v359 = vadd.f32 %v81, %v358
  %v360 = vpop.f32.mrf.mxu0
  %v361 = vadd.f32 %v81, %v360
  %362 = vmatmul.bf16.gmra.mxu0 %v196
  %v363 = vpop.f32.mrf.mxu0
  %v364 = vadd.f32 %v81, %v363
  %v365 = vpop.f32.mrf.mxu0
  %v366 = vadd.f32 %v81, %v365
  %367 = vmatmul.bf16.gmra.mxu0 %v197
  %v368 = vpop.f32.mrf.mxu0
  %v369 = vadd.f32 %v81, %v368
  %v370 = vpop.f32.mrf.mxu0
  %v371 = vadd.f32 %v81, %v370
  %372 = vmatmul.bf16.gmra.mxu0 %v198
  %v373 = vpop.f32.mrf.mxu0
  %v374 = vadd.f32 %v81, %v373
  %v375 = vpop.f32.mrf.mxu0
  %v376 = vadd.f32 %v81, %v375
  %377 = vmatmul.bf16.gmra.mxu0 %v199
  %v378 = vpop.f32.mrf.mxu0
  %v379 = vadd.f32 %v81, %v378
  %v380 = vpop.f32.mrf.mxu0
  %v381 = vadd.f32 %v81, %v380
  %382 = vmatmul.bf16.gmra.mxu0 %v200
  %v383 = vpop.f32.mrf.mxu0
  %v384 = vadd.f32 %v81, %v383
  %v385 = vpop.f32.mrf.mxu0
  %v386 = vadd.f32 %v81, %v385
  %387 = vmatmul.bf16.gmra.mxu0 %v201
  %v388 = vpop.f32.mrf.mxu0
  %v389 = vadd.f32 %v81, %v388
  %v390 = vpop.f32.mrf.mxu0
  %v391 = vadd.f32 %v81, %v390
  %392 = vmatmul.bf16.gmra.mxu0 %v202
  %v393 = vpop.f32.mrf.mxu0
  %v394 = vadd.f32 %v81, %v393
  %v395 = vpop.f32.mrf.mxu0
  %v396 = vadd.f32 %v81, %v395
  %397 = vmatmul.bf16.gmra.mxu0 %v203
  %v398 = vpop.f32.mrf.mxu0
  %v399 = vadd.f32 %v81, %v398
  %v400 = vpop.f32.mrf.mxu0
  %v401 = vadd.f32 %v81, %v400
  %402 = vmatmul.bf16.gmra.mxu0 %v204
  %v403 = vpop.f32.mrf.mxu0
  %v404 = vadd.f32 %v81, %v403
  %v405 = vpop.f32.mrf.mxu0
  %v406 = vadd.f32 %v81, %v405
  %407 = vmatmul.bf16.gmra.mxu0 %v205
  %v408 = vpop.f32.mrf.mxu0
  %v409 = vadd.f32 %v81, %v408
  %v410 = vpop.f32.mrf.mxu0
  %411 = vdwg.mxu0
  %v412 = vmax.f32 %v289, 0.0
  %v413 = vmax.f32 %v291, 0.0
  %v414 = vmax.f32 %v294, 0.0
  %v415 = vmax.f32 %v296, 0.0
  %v416 = vmax.f32 %v299, 0.0
  %v417 = vmax.f32 %v301, 0.0
  %v418 = vmax.f32 %v304, 0.0
  %v419 = vmax.f32 %v306, 0.0
  %v420 = vmax.f32 %v309, 0.0
  %v421 = vmax.f32 %v311, 0.0
  %v422 = vmax.f32 %v314, 0.0
  %v423 = vmax.f32 %v316, 0.0
  %v424 = vmax.f32 %v319, 0.0
  %v425 = vmax.f32 %v321, 0.0
  %v426 = vmax.f32 %v324, 0.0
  %v427 = vmax.f32 %v326, 0.0
  %v428 = vmax.f32 %v329, 0.0
  %v429 = vmax.f32 %v331, 0.0
  %v430 = vmax.f32 %v334, 0.0
  %v431 = vmax.f32 %v336, 0.0
  %v432 = vmax.f32 %v339, 0.0
  %v433 = vmax.f32 %v341, 0.0
  %v434 = vmax.f32 %v344, 0.0
  %v435 = vmax.f32 %v346, 0.0
  %v436 = vmax.f32 %v349, 0.0
  %v437 = vmax.f32 %v351, 0.0
  %v438 = vmax.f32 %v354, 0.0
  %v439 = vmax.f32 %v356, 0.0
  %v440 = vmax.f32 %v359, 0.0
  %v441 = vmax.f32 %v361, 0.0
  %v442 = vmax.f32 %v364, 0.0
  %v443 = vmax.f32 %v366, 0.0
  %v444 = vmax.f32 %v369, 0.0
  %v445 = vmax.f32 %v371, 0.0
  %v446 = vmax.f32 %v374, 0.0
  %v447 = vmax.f32 %v376, 0.0
  %v448 = vmax.f32 %v379, 0.0
  %v449 = vmax.f32 %v381, 0.0
  %v450 = vmax.f32 %v384, 0.0
  %v451 = vmax.f32 %v386, 0.0
  %v452 = vmax.f32 %v389, 0.0
  %v453 = vmax.f32 %v391, 0.0
  %v454 = vmax.f32 %v394, 0.0
  %v455 = vmax.f32 %v396, 0.0
  %v456 = vmax.f32 %v399, 0.0
  %v457 = vmax.f32 %v401, 0.0
  %v458 = vmax.f32 %v404, 0.0
  %v459 = vmax.f32 %v406, 0.0
  %v460 = vmax.f32 %v409, 0.0
  %s461 = scalar_lea.vmem %s0, 196
  %v462 = vld [vmem:[%s461] sm:$0xf]
  %v463 = vld [vmem:[%s461 + $0x4] sm:$0xf]
  %v464 = vld [vmem:[%s461 + $0x8] sm:$0xf]
  %v465 = vld [vmem:[%s461 + $0xc] sm:$0xf]
  %v466 = vld [vmem:[%s461 + $0x10] sm:$0xf]
  %v467 = vld [vmem:[%s461 + $0x14] sm:$0xf]
  %v468 = vld [vmem:[%s461 + $0x18] sm:$0xf]
  %v469 = vld [vmem:[%s461 + $0x1c] sm:$0xf]
  %v470 = vld [vmem:[%s461 + $0x20] sm:$0xf]
  %v471 = vld [vmem:[%s461 + $0x24] sm:$0xf]
  %v472 = vld [vmem:[%s461 + $0x28] sm:$0xf]
  %v473 = vld [vmem:[%s461 + $0x2c] sm:$0xf]
  %v474 = vld [vmem:[%s461 + $0x30] sm:$0xf]
  %v475 = vld [vmem:[%s461 + $0x34] sm:$0xf]
  %v476 = vld [vmem:[%s461 + $0x38] sm:$0xf]
  %v477 = vld [vmem:[%s461 + $0x3c] sm:$0xf]
  %v478 = vld [vmem:[%s461 + $0x40] sm:$0xf]
  %v479 = vld [vmem:[%s461 + $0x44] sm:$0xf]
  %v480 = vld [vmem:[%s461 + $0x48] sm:$0xf]
  %v481 = vld [vmem:[%s461 + $0x4c] sm:$0xf]
  %v482 = vld [vmem:[%s461 + $0x50] sm:$0xf]
  %v483 = vld [vmem:[%s461 + $0x54] sm:$0xf]
  %v484 = vld [vmem:[%s461 + $0x58] sm:$0xf]
  %v485 = vld [vmem:[%s461 + $0x5c] sm:$0xf]
  %v486 = vld [vmem:[%s461 + $0x60] sm:$0xf]
  %v487 = vld [vmem:[%s461 + $0x64] sm:$0xf]
  %v488 = vld [vmem:[%s461 + $0x68] sm:$0xf]
  %v489 = vld [vmem:[%s461 + $0x6c] sm:$0xf]
  %v490 = vld [vmem:[%s461 + $0x70] sm:$0xf]
  %v491 = vld [vmem:[%s461 + $0x74] sm:$0xf]
  %v492 = vld [vmem:[%s461 + $0x78] sm:$0xf]
  %v493 = vld [vmem:[%s461 + $0x7c] sm:$0xf]
  %v494 = vld [vmem:[%s461 + $0x80] sm:$0xf]
  %v495 = vld [vmem:[%s461 + $0x84] sm:$0xf]
  %v496 = vld [vmem:[%s461 + $0x88] sm:$0xf]
  %v497 = vld [vmem:[%s461 + $0x8c] sm:$0xf]
  %v498 = vld [vmem:[%s461 + $0x90] sm:$0xf]
  %v499 = vld [vmem:[%s461 + $0x94] sm:$0xf]
  %v500 = vld [vmem:[%s461 + $0x98] sm:$0xf]
  %v501 = vld [vmem:[%s461 + $0x9c] sm:$0xf]
  %v502 = vld [vmem:[%s461 + $0xa0] sm:$0xf]
  %v503 = vld [vmem:[%s461 + $0xa4] sm:$0xf]
  %v504 = vld [vmem:[%s461 + $0xa8] sm:$0xf]
  %v505 = vld [vmem:[%s461 + $0xac] sm:$0xf]
  %v506 = vld [vmem:[%s461 + $0xb0] sm:$0xf]
  %v507 = vld [vmem:[%s461 + $0xb4] sm:$0xf]
  %v508 = vld [vmem:[%s461 + $0xb8] sm:$0xf]
  %v509 = vld [vmem:[%s461 + $0xbc] sm:$0xf]
  %v510 = vld [vmem:[%s461 + $0xc0] sm:$0xf]
  %v560 = vunpack.c.l.b16 %v462
  %v561 = vunpack.c.l.b16 %v463
  %v562 = vunpack.c.l.b16 %v464
  %v563 = vunpack.c.l.b16 %v465
  %v564 = vunpack.c.l.b16 %v466
  %v565 = vunpack.c.l.b16 %v467
  %v566 = vunpack.c.l.b16 %v468
  %v567 = vunpack.c.l.b16 %v469
  %v568 = vunpack.c.l.b16 %v470
  %v569 = vunpack.c.l.b16 %v471
  %v570 = vunpack.c.l.b16 %v472
  %v571 = vunpack.c.l.b16 %v473
  %v572 = vunpack.c.l.b16 %v474
  %v573 = vunpack.c.l.b16 %v475
  %v574 = vunpack.c.l.b16 %v476
  %v575 = vunpack.c.l.b16 %v477
  %v576 = vunpack.c.l.b16 %v478
  %v577 = vunpack.c.l.b16 %v479
  %v578 = vunpack.c.l.b16 %v480
  %v579 = vunpack.c.l.b16 %v481
  %v580 = vunpack.c.l.b16 %v482
  %v581 = vunpack.c.l.b16 %v483
  %v582 = vunpack.c.l.b16 %v484
  %v583 = vunpack.c.l.b16 %v485
  %v584 = vunpack.c.l.b16 %v486
  %v585 = vunpack.c.l.b16 %v487
  %v586 = vunpack.c.l.b16 %v488
  %v587 = vunpack.c.l.b16 %v489
  %v588 = vunpack.c.l.b16 %v490
  %v589 = vunpack.c.l.b16 %v491
  %v590 = vunpack.c.l.b16 %v492
  %v591 = vunpack.c.l.b16 %v493
  %v592 = vunpack.c.l.b16 %v494
  %v593 = vunpack.c.l.b16 %v495
  %v594 = vunpack.c.l.b16 %v496
  %v595 = vunpack.c.l.b16 %v497
  %v596 = vunpack.c.l.b16 %v498
  %v597 = vunpack.c.l.b16 %v499
  %v598 = vunpack.c.l.b16 %v500
  %v599 = vunpack.c.l.b16 %v501
  %v600 = vunpack.c.l.b16 %v502
  %v601 = vunpack.c.l.b16 %v503
  %v602 = vunpack.c.l.b16 %v504
  %v603 = vunpack.c.l.b16 %v505
  %v604 = vunpack.c.l.b16 %v506
  %v605 = vunpack.c.l.b16 %v507
  %v606 = vunpack.c.l.b16 %v508
  %v607 = vunpack.c.l.b16 %v509
  %v608 = vunpack.c.l.b16 %v510
  %v609 = vpack.c.b16 %v561, %v560
  %v610 = vpack.c.b16 %v563, %v562
  %v611 = vpack.c.b16 %v565, %v564
  %v612 = vpack.c.b16 %v567, %v566
  %v613 = vpack.c.b16 %v569, %v568
  %v614 = vpack.c.b16 %v571, %v570
  %v615 = vpack.c.b16 %v573, %v572
  %v616 = vpack.c.b16 %v575, %v574
  %v617 = vpack.c.b16 %v577, %v576
  %v618 = vpack.c.b16 %v579, %v578
  %v619 = vpack.c.b16 %v581, %v580
  %v620 = vpack.c.b16 %v583, %v582
  %v621 = vpack.c.b16 %v585, %v584
  %v622 = vpack.c.b16 %v587, %v586
  %v623 = vpack.c.b16 %v589, %v588
  %v624 = vpack.c.b16 %v591, %v590
  %v625 = vpack.c.b16 %v593, %v592
  %v626 = vpack.c.b16 %v595, %v594
  %v627 = vpack.c.b16 %v597, %v596
  %v628 = vpack.c.b16 %v599, %v598
  %v629 = vpack.c.b16 %v601, %v600
  %v630 = vpack.c.b16 %v603, %v602
  %v631 = vpack.c.b16 %v605, %v604
  %v632 = vpack.c.b16 %v607, %v606
  %v633 = vpack.c.b16 %v608, %v608
  %659 = vmatpush.bf16.msra.mxu0 %v270
  %660 = vmatpush.bf16.msra.mxu0 %v269
  %661 = vmatpush.bf16.msra.mxu0 %v268
  %662 = vmatpush.bf16.msra.mxu0 %v267
  %663 = vmatpush.bf16.msra.mxu0 %v266
  %664 = vmatpush.bf16.msra.mxu0 %v265
  %665 = vmatpush.bf16.msra.mxu0 %v264
  %666 = vmatpush.bf16.msra.mxu0 %v263
  %667 = vmatmul.bf16.gmra.mxu0 %v609
  %v668 = vpop.f32.mrf.mxu0
  %v669 = vadd.f32 %v81, %v668
  %v670 = vpop.f32.mrf.mxu0
  %v671 = vadd.f32 %v81, %v670
  %672 = vmatmul.bf16.gmra.mxu0 %v610
  %v673 = vpop.f32.mrf.mxu0
  %v674 = vadd.f32 %v81, %v673
  %v675 = vpop.f32.mrf.mxu0
  %v676 = vadd.f32 %v81, %v675
  %677 = vmatmul.bf16.gmra.mxu0 %v611
  %v678 = vpop.f32.mrf.mxu0
  %v679 = vadd.f32 %v81, %v678
  %v680 = vpop.f32.mrf.mxu0
  %v681 = vadd.f32 %v81, %v680
  %682 = vmatmul.bf16.gmra.mxu0 %v612
  %v683 = vpop.f32.mrf.mxu0
  %v684 = vadd.f32 %v81, %v683
  %v685 = vpop.f32.mrf.mxu0
  %v686 = vadd.f32 %v81, %v685
  %687 = vmatmul.bf16.gmra.mxu0 %v613
  %v688 = vpop.f32.mrf.mxu0
  %v689 = vadd.f32 %v81, %v688
  %v690 = vpop.f32.mrf.mxu0
  %v691 = vadd.f32 %v81, %v690
  %692 = vmatmul.bf16.gmra.mxu0 %v614
  %v693 = vpop.f32.mrf.mxu0
  %v694 = vadd.f32 %v81, %v693
  %v695 = vpop.f32.mrf.mxu0
  %v696 = vadd.f32 %v81, %v695
  %697 = vmatmul.bf16.gmra.mxu0 %v615
  %v698 = vpop.f32.mrf.mxu0
  %v699 = vadd.f32 %v81, %v698
  %v700 = vpop.f32.mrf.mxu0
  %v701 = vadd.f32 %v81, %v700
  %702 = vmatmul.bf16.gmra.mxu0 %v616
  %v703 = vpop.f32.mrf.mxu0
  %v704 = vadd.f32 %v81, %v703
  %v705 = vpop.f32.mrf.mxu0
  %v706 = vadd.f32 %v81, %v705
  %707 = vmatmul.bf16.gmra.mxu0 %v617
  %v708 = vpop.f32.mrf.mxu0
  %v709 = vadd.f32 %v81, %v708
  %v710 = vpop.f32.mrf.mxu0
  %v711 = vadd.f32 %v81, %v710
  %712 = vmatmul.bf16.gmra.mxu0 %v618
  %v713 = vpop.f32.mrf.mxu0
  %v714 = vadd.f32 %v81, %v713
  %v715 = vpop.f32.mrf.mxu0
  %v716 = vadd.f32 %v81, %v715
  %717 = vmatmul.bf16.gmra.mxu0 %v619
  %v718 = vpop.f32.mrf.mxu0
  %v719 = vadd.f32 %v81, %v718
  %v720 = vpop.f32.mrf.mxu0
  %v721 = vadd.f32 %v81, %v720
  %722 = vmatmul.bf16.gmra.mxu0 %v620
  %v723 = vpop.f32.mrf.mxu0
  %v724 = vadd.f32 %v81, %v723
  %v725 = vpop.f32.mrf.mxu0
  %v726 = vadd.f32 %v81, %v725
  %727 = vmatmul.bf16.gmra.mxu0 %v621
  %v728 = vpop.f32.mrf.mxu0
  %v729 = vadd.f32 %v81, %v728
  %v730 = vpop.f32.mrf.mxu0
  %v731 = vadd.f32 %v81, %v730
  %732 = vmatmul.bf16.gmra.mxu0 %v622
  %v733 = vpop.f32.mrf.mxu0
  %v734 = vadd.f32 %v81, %v733
  %v735 = vpop.f32.mrf.mxu0
  %v736 = vadd.f32 %v81, %v735
  %737 = vmatmul.bf16.gmra.mxu0 %v623
  %v738 = vpop.f32.mrf.mxu0
  %v739 = vadd.f32 %v81, %v738
  %v740 = vpop.f32.mrf.mxu0
  %v741 = vadd.f32 %v81, %v740
  %742 = vmatmul.bf16.gmra.mxu0 %v624
  %v743 = vpop.f32.mrf.mxu0
  %v744 = vadd.f32 %v81, %v743
  %v745 = vpop.f32.mrf.mxu0
  %v746 = vadd.f32 %v81, %v745
  %747 = vmatmul.bf16.gmra.mxu0 %v625
  %v748 = vpop.f32.mrf.mxu0
  %v749 = vadd.f32 %v81, %v748
  %v750 = vpop.f32.mrf.mxu0
  %v751 = vadd.f32 %v81, %v750
  %752 = vmatmul.bf16.gmra.mxu0 %v626
  %v753 = vpop.f32.mrf.mxu0
  %v754 = vadd.f32 %v81, %v753
  %v755 = vpop.f32.mrf.mxu0
  %v756 = vadd.f32 %v81, %v755
  %757 = vmatmul.bf16.gmra.mxu0 %v627
  %v758 = vpop.f32.mrf.mxu0
  %v759 = vadd.f32 %v81, %v758
  %v760 = vpop.f32.mrf.mxu0
  %v761 = vadd.f32 %v81, %v760
  %762 = vmatmul.bf16.gmra.mxu0 %v628
  %v763 = vpop.f32.mrf.mxu0
  %v764 = vadd.f32 %v81, %v763
  %v765 = vpop.f32.mrf.mxu0
  %v766 = vadd.f32 %v81, %v765
  %767 = vmatmul.bf16.gmra.mxu0 %v629
  %v768 = vpop.f32.mrf.mxu0
  %v769 = vadd.f32 %v81, %v768
  %v770 = vpop.f32.mrf.mxu0
  %v771 = vadd.f32 %v81, %v770
  %772 = vmatmul.bf16.gmra.mxu0 %v630
  %v773 = vpop.f32.mrf.mxu0
  %v774 = vadd.f32 %v81, %v773
  %v775 = vpop.f32.mrf.mxu0
  %v776 = vadd.f32 %v81, %v775
  %777 = vmatmul.bf16.gmra.mxu0 %v631
  %v778 = vpop.f32.mrf.mxu0
  %v779 = vadd.f32 %v81, %v778
  %v780 = vpop.f32.mrf.mxu0
  %v781 = vadd.f32 %v81, %v780
  %782 = vmatmul.bf16.gmra.mxu0 %v632
  %v783 = vpop.f32.mrf.mxu0
  %v784 = vadd.f32 %v81, %v783
  %v785 = vpop.f32.mrf.mxu0
  %v786 = vadd.f32 %v81, %v785
  %787 = vmatmul.bf16.gmra.mxu0 %v633
  %v788 = vpop.f32.mrf.mxu0
  %v789 = vadd.f32 %v81, %v788
  %v790 = vpop.f32.mrf.mxu0
  %791 = vdwg.mxu0
  %v792 = vmax.f32 %v669, 0.0
  %v793 = vmax.f32 %v671, 0.0
  %v794 = vmax.f32 %v674, 0.0
  %v795 = vmax.f32 %v676, 0.0
  %v796 = vmax.f32 %v679, 0.0
  %v797 = vmax.f32 %v681, 0.0
  %v798 = vmax.f32 %v684, 0.0
  %v799 = vmax.f32 %v686, 0.0
  %v800 = vmax.f32 %v689, 0.0
  %v801 = vmax.f32 %v691, 0.0
  %v802 = vmax.f32 %v694, 0.0
  %v803 = vmax.f32 %v696, 0.0
  %v804 = vmax.f32 %v699, 0.0
  %v805 = vmax.f32 %v701, 0.0
  %v806 = vmax.f32 %v704, 0.0
  %v807 = vmax.f32 %v706, 0.0
  %v808 = vmax.f32 %v709, 0.0
  %v809 = vmax.f32 %v711, 0.0
  %v810 = vmax.f32 %v714, 0.0
  %v811 = vmax.f32 %v716, 0.0
  %v812 = vmax.f32 %v719, 0.0
  %v813 = vmax.f32 %v721, 0.0
  %v814 = vmax.f32 %v724, 0.0
  %v815 = vmax.f32 %v726, 0.0
  %v816 = vmax.f32 %v729, 0.0
  %v817 = vmax.f32 %v731, 0.0
  %v818 = vmax.f32 %v734, 0.0
  %v819 = vmax.f32 %v736, 0.0
  %v820 = vmax.f32 %v739, 0.0
  %v821 = vmax.f32 %v741, 0.0
  %v822 = vmax.f32 %v744, 0.0
  %v823 = vmax.f32 %v746, 0.0
  %v824 = vmax.f32 %v749, 0.0
  %v825 = vmax.f32 %v751, 0.0
  %v826 = vmax.f32 %v754, 0.0
  %v827 = vmax.f32 %v756, 0.0
  %v828 = vmax.f32 %v759, 0.0
  %v829 = vmax.f32 %v761, 0.0
  %v830 = vmax.f32 %v764, 0.0
  %v831 = vmax.f32 %v766, 0.0
  %v832 = vmax.f32 %v769, 0.0
  %v833 = vmax.f32 %v771, 0.0
  %v834 = vmax.f32 %v774, 0.0
  %v835 = vmax.f32 %v776, 0.0
  %v836 = vmax.f32 %v779, 0.0
  %v837 = vmax.f32 %v781, 0.0
  %v838 = vmax.f32 %v784, 0.0
  %v839 = vmax.f32 %v786, 0.0
  %v840 = vmax.f32 %v789, 0.0
  %v841 = vmax.f32 %v412, %v792
  %v842 = vmax.f32 %v413, %v793
  %v843 = vmax.f32 %v414, %v794
  %v844 = vmax.f32 %v415, %v795
  %v845 = vmax.f32 %v416, %v796
  %v846 = vmax.f32 %v417, %v797
  %v847 = vmax.f32 %v418, %v798
  %v848 = vmax.f32 %v419, %v799
  %v849 = vmax.f32 %v420, %v800
  %v850 = vmax.f32 %v421, %v801
  %v851 = vmax.f32 %v422, %v802
  %v852 = vmax.f32 %v423, %v803
  %v853 = vmax.f32 %v424, %v804
  %v854 = vmax.f32 %v425, %v805
  %v855 = vmax.f32 %v426, %v806
  %v856 = vmax.f32 %v427, %v807
  %v857 = vmax.f32 %v428, %v808
  %v858 = vmax.f32 %v429, %v809
  %v859 = vmax.f32 %v430, %v810
  %v860 = vmax.f32 %v431, %v811
  %v861 = vmax.f32 %v432, %v812
  %v862 = vmax.f32 %v433, %v813
  %v863 = vmax.f32 %v434, %v814
  %v864 = vmax.f32 %v435, %v815
  %v865 = vmax.f32 %v436, %v816
  %v866 = vmax.f32 %v437, %v817
  %v867 = vmax.f32 %v438, %v818
  %v868 = vmax.f32 %v439, %v819
  %v869 = vmax.f32 %v440, %v820
  %v870 = vmax.f32 %v441, %v821
  %v871 = vmax.f32 %v442, %v822
  %v872 = vmax.f32 %v443, %v823
  %v873 = vmax.f32 %v444, %v824
  %v874 = vmax.f32 %v445, %v825
  %v875 = vmax.f32 %v446, %v826
  %v876 = vmax.f32 %v447, %v827
  %v877 = vmax.f32 %v448, %v828
  %v878 = vmax.f32 %v449, %v829
  %v879 = vmax.f32 %v450, %v830
  %v880 = vmax.f32 %v451, %v831
  %v881 = vmax.f32 %v452, %v832
  %v882 = vmax.f32 %v453, %v833
  %v883 = vmax.f32 %v454, %v834
  %v884 = vmax.f32 %v455, %v835
  %v885 = vmax.f32 %v456, %v836
  %v886 = vmax.f32 %v457, %v837
  %v887 = vmax.f32 %v458, %v838
  %v888 = vmax.f32 %v459, %v839
  %v889 = vmax.f32 %v460, %v840
  %s890 = scalar_lea.vmem %s0, 392
  %v891 = vld [vmem:[%s890] sm:$0xf]
  %v892 = vld [vmem:[%s890 + $0x4] sm:$0xf]
  %v893 = vld [vmem:[%s890 + $0x8] sm:$0xf]
  %v894 = vld [vmem:[%s890 + $0xc] sm:$0xf]
  %v895 = vld [vmem:[%s890 + $0x10] sm:$0xf]
  %v896 = vld [vmem:[%s890 + $0x14] sm:$0xf]
  %v897 = vld [vmem:[%s890 + $0x18] sm:$0xf]
  %v898 = vld [vmem:[%s890 + $0x1c] sm:$0xf]
  %v899 = vld [vmem:[%s890 + $0x20] sm:$0xf]
  %v900 = vld [vmem:[%s890 + $0x24] sm:$0xf]
  %v901 = vld [vmem:[%s890 + $0x28] sm:$0xf]
  %v902 = vld [vmem:[%s890 + $0x2c] sm:$0xf]
  %v903 = vld [vmem:[%s890 + $0x30] sm:$0xf]
  %v904 = vld [vmem:[%s890 + $0x34] sm:$0xf]
  %v905 = vld [vmem:[%s890 + $0x38] sm:$0xf]
  %v906 = vld [vmem:[%s890 + $0x3c] sm:$0xf]
  %v907 = vld [vmem:[%s890 + $0x40] sm:$0xf]
  %v908 = vld [vmem:[%s890 + $0x44] sm:$0xf]
  %v909 = vld [vmem:[%s890 + $0x48] sm:$0xf]
  %v910 = vld [vmem:[%s890 + $0x4c] sm:$0xf]
  %v911 = vld [vmem:[%s890 + $0x50] sm:$0xf]
  %v912 = vld [vmem:[%s890 + $0x54] sm:$0xf]
  %v913 = vld [vmem:[%s890 + $0x58] sm:$0xf]
  %v914 = vld [vmem:[%s890 + $0x5c] sm:$0xf]
  %v915 = vld [vmem:[%s890 + $0x60] sm:$0xf]
  %v916 = vld [vmem:[%s890 + $0x64] sm:$0xf]
  %v917 = vld [vmem:[%s890 + $0x68] sm:$0xf]
  %v918 = vld [vmem:[%s890 + $0x6c] sm:$0xf]
  %v919 = vld [vmem:[%s890 + $0x70] sm:$0xf]
  %v920 = vld [vmem:[%s890 + $0x74] sm:$0xf]
  %v921 = vld [vmem:[%s890 + $0x78] sm:$0xf]
  %v922 = vld [vmem:[%s890 + $0x7c] sm:$0xf]
  %v923 = vld [vmem:[%s890 + $0x80] sm:$0xf]
  %v924 = vld [vmem:[%s890 + $0x84] sm:$0xf]
  %v925 = vld [vmem:[%s890 + $0x88] sm:$0xf]
  %v926 = vld [vmem:[%s890 + $0x8c] sm:$0xf]
  %v927 = vld [vmem:[%s890 + $0x90] sm:$0xf]
  %v928 = vld [vmem:[%s890 + $0x94] sm:$0xf]
  %v929 = vld [vmem:[%s890 + $0x98] sm:$0xf]
  %v930 = vld [vmem:[%s890 + $0x9c] sm:$0xf]
  %v931 = vld [vmem:[%s890 + $0xa0] sm:$0xf]
  %v932 = vld [vmem:[%s890 + $0xa4] sm:$0xf]
  %v933 = vld [vmem:[%s890 + $0xa8] sm:$0xf]
  %v934 = vld [vmem:[%s890 + $0xac] sm:$0xf]
  %v935 = vld [vmem:[%s890 + $0xb0] sm:$0xf]
  %v936 = vld [vmem:[%s890 + $0xb4] sm:$0xf]
  %v937 = vld [vmem:[%s890 + $0xb8] sm:$0xf]
  %v938 = vld [vmem:[%s890 + $0xbc] sm:$0xf]
  %v939 = vld [vmem:[%s890 + $0xc0] sm:$0xf]
  %v989 = vunpack.c.l.b16 %v891
  %v990 = vunpack.c.l.b16 %v892
  %v991 = vunpack.c.l.b16 %v893
  %v992 = vunpack.c.l.b16 %v894
  %v993 = vunpack.c.l.b16 %v895
  %v994 = vunpack.c.l.b16 %v896
  %v995 = vunpack.c.l.b16 %v897
  %v996 = vunpack.c.l.b16 %v898
  %v997 = vunpack.c.l.b16 %v899
  %v998 = vunpack.c.l.b16 %v900
  %v999 = vunpack.c.l.b16 %v901
  %v1000 = vunpack.c.l.b16 %v902
  %v1001 = vunpack.c.l.b16 %v903
  %v1002 = vunpack.c.l.b16 %v904
  %v1003 = vunpack.c.l.b16 %v905
  %v1004 = vunpack.c.l.b16 %v906
  %v1005 = vunpack.c.l.b16 %v907
  %v1006 = vunpack.c.l.b16 %v908
  %v1007 = vunpack.c.l.b16 %v909
  %v1008 = vunpack.c.l.b16 %v910
  %v1009 = vunpack.c.l.b16 %v911
  %v1010 = vunpack.c.l.b16 %v912
  %v1011 = vunpack.c.l.b16 %v913
  %v1012 = vunpack.c.l.b16 %v914
  %v1013 = vunpack.c.l.b16 %v915
  %v1014 = vunpack.c.l.b16 %v916
  %v1015 = vunpack.c.l.b16 %v917
  %v1016 = vunpack.c.l.b16 %v918
  %v1017 = vunpack.c.l.b16 %v919
  %v1018 = vunpack.c.l.b16 %v920
  %v1019 = vunpack.c.l.b16 %v921
  %v1020 = vunpack.c.l.b16 %v922
  %v1021 = vunpack.c.l.b16 %v923
  %v1022 = vunpack.c.l.b16 %v924
  %v1023 = vunpack.c.l.b16 %v925
  %v1024 = vunpack.c.l.b16 %v926
  %v1025 = vunpack.c.l.b16 %v927
  %v1026 = vunpack.c.l.b16 %v928
  %v1027 = vunpack.c.l.b16 %v929
  %v1028 = vunpack.c.l.b16 %v930
  %v1029 = vunpack.c.l.b16 %v931
  %v1030 = vunpack.c.l.b16 %v932
  %v1031 = vunpack.c.l.b16 %v933
  %v1032 = vunpack.c.l.b16 %v934
  %v1033 = vunpack.c.l.b16 %v935
  %v1034 = vunpack.c.l.b16 %v936
  %v1035 = vunpack.c.l.b16 %v937
  %v1036 = vunpack.c.l.b16 %v938
  %v1037 = vunpack.c.l.b16 %v939
  %v1038 = vpack.c.b16 %v990, %v989
  %v1039 = vpack.c.b16 %v992, %v991
  %v1040 = vpack.c.b16 %v994, %v993
  %v1041 = vpack.c.b16 %v996, %v995
  %v1042 = vpack.c.b16 %v998, %v997
  %v1043 = vpack.c.b16 %v1000, %v999
  %v1044 = vpack.c.b16 %v1002, %v1001
  %v1045 = vpack.c.b16 %v1004, %v1003
  %v1046 = vpack.c.b16 %v1006, %v1005
  %v1047 = vpack.c.b16 %v1008, %v1007
  %v1048 = vpack.c.b16 %v1010, %v1009
  %v1049 = vpack.c.b16 %v1012, %v1011
  %v1050 = vpack.c.b16 %v1014, %v1013
  %v1051 = vpack.c.b16 %v1016, %v1015
  %v1052 = vpack.c.b16 %v1018, %v1017
  %v1053 = vpack.c.b16 %v1020, %v1019
  %v1054 = vpack.c.b16 %v1022, %v1021
  %v1055 = vpack.c.b16 %v1024, %v1023
  %v1056 = vpack.c.b16 %v1026, %v1025
  %v1057 = vpack.c.b16 %v1028, %v1027
  %v1058 = vpack.c.b16 %v1030, %v1029
  %v1059 = vpack.c.b16 %v1032, %v1031
  %v1060 = vpack.c.b16 %v1034, %v1033
  %v1061 = vpack.c.b16 %v1036, %v1035
  %v1062 = vpack.c.b16 %v1037, %v1037
  %1088 = vmatpush.bf16.msra.mxu0 %v270
  %1089 = vmatpush.bf16.msra.mxu0 %v269
  %1090 = vmatpush.bf16.msra.mxu0 %v268
  %1091 = vmatpush.bf16.msra.mxu0 %v267
  %1092 = vmatpush.bf16.msra.mxu0 %v266
  %1093 = vmatpush.bf16.msra.mxu0 %v265
  %1094 = vmatpush.bf16.msra.mxu0 %v264
  %1095 = vmatpush.bf16.msra.mxu0 %v263
  %1096 = vmatmul.bf16.gmra.mxu0 %v1038
  %v1097 = vpop.f32.mrf.mxu0
  %v1098 = vadd.f32 %v81, %v1097
  %v1099 = vpop.f32.mrf.mxu0
  %v1100 = vadd.f32 %v81, %v1099
  %1101 = vmatmul.bf16.gmra.mxu0 %v1039
  %v1102 = vpop.f32.mrf.mxu0
  %v1103 = vadd.f32 %v81, %v1102
  %v1104 = vpop.f32.mrf.mxu0
  %v1105 = vadd.f32 %v81, %v1104
  %1106 = vmatmul.bf16.gmra.mxu0 %v1040
  %v1107 = vpop.f32.mrf.mxu0
  %v1108 = vadd.f32 %v81, %v1107
  %v1109 = vpop.f32.mrf.mxu0
  %v1110 = vadd.f32 %v81, %v1109
  %1111 = vmatmul.bf16.gmra.mxu0 %v1041
  %v1112 = vpop.f32.mrf.mxu0
  %v1113 = vadd.f32 %v81, %v1112
  %v1114 = vpop.f32.mrf.mxu0
  %v1115 = vadd.f32 %v81, %v1114
  %1116 = vmatmul.bf16.gmra.mxu0 %v1042
  %v1117 = vpop.f32.mrf.mxu0
  %v1118 = vadd.f32 %v81, %v1117
  %v1119 = vpop.f32.mrf.mxu0
  %v1120 = vadd.f32 %v81, %v1119
  %1121 = vmatmul.bf16.gmra.mxu0 %v1043
  %v1122 = vpop.f32.mrf.mxu0
  %v1123 = vadd.f32 %v81, %v1122
  %v1124 = vpop.f32.mrf.mxu0
  %v1125 = vadd.f32 %v81, %v1124
  %1126 = vmatmul.bf16.gmra.mxu0 %v1044
  %v1127 = vpop.f32.mrf.mxu0
  %v1128 = vadd.f32 %v81, %v1127
  %v1129 = vpop.f32.mrf.mxu0
  %v1130 = vadd.f32 %v81, %v1129
  %1131 = vmatmul.bf16.gmra.mxu0 %v1045
  %v1132 = vpop.f32.mrf.mxu0
  %v1133 = vadd.f32 %v81, %v1132
  %v1134 = vpop.f32.mrf.mxu0
  %v1135 = vadd.f32 %v81, %v1134
  %1136 = vmatmul.bf16.gmra.mxu0 %v1046
  %v1137 = vpop.f32.mrf.mxu0
  %v1138 = vadd.f32 %v81, %v1137
  %v1139 = vpop.f32.mrf.mxu0
  %v1140 = vadd.f32 %v81, %v1139
  %1141 = vmatmul.bf16.gmra.mxu0 %v1047
  %v1142 = vpop.f32.mrf.mxu0
  %v1143 = vadd.f32 %v81, %v1142
  %v1144 = vpop.f32.mrf.mxu0
  %v1145 = vadd.f32 %v81, %v1144
  %1146 = vmatmul.bf16.gmra.mxu0 %v1048
  %v1147 = vpop.f32.mrf.mxu0
  %v1148 = vadd.f32 %v81, %v1147
  %v1149 = vpop.f32.mrf.mxu0
  %v1150 = vadd.f32 %v81, %v1149
  %1151 = vmatmul.bf16.gmra.mxu0 %v1049
  %v1152 = vpop.f32.mrf.mxu0
  %v1153 = vadd.f32 %v81, %v1152
  %v1154 = vpop.f32.mrf.mxu0
  %v1155 = vadd.f32 %v81, %v1154
  %1156 = vmatmul.bf16.gmra.mxu0 %v1050
  %v1157 = vpop.f32.mrf.mxu0
  %v1158 = vadd.f32 %v81, %v1157
  %v1159 = vpop.f32.mrf.mxu0
  %v1160 = vadd.f32 %v81, %v1159
  %1161 = vmatmul.bf16.gmra.mxu0 %v1051
  %v1162 = vpop.f32.mrf.mxu0
  %v1163 = vadd.f32 %v81, %v1162
  %v1164 = vpop.f32.mrf.mxu0
  %v1165 = vadd.f32 %v81, %v1164
  %1166 = vmatmul.bf16.gmra.mxu0 %v1052
  %v1167 = vpop.f32.mrf.mxu0
  %v1168 = vadd.f32 %v81, %v1167
  %v1169 = vpop.f32.mrf.mxu0
  %v1170 = vadd.f32 %v81, %v1169
  %1171 = vmatmul.bf16.gmra.mxu0 %v1053
  %v1172 = vpop.f32.mrf.mxu0
  %v1173 = vadd.f32 %v81, %v1172
  %v1174 = vpop.f32.mrf.mxu0
  %v1175 = vadd.f32 %v81, %v1174
  %1176 = vmatmul.bf16.gmra.mxu0 %v1054
  %v1177 = vpop.f32.mrf.mxu0
  %v1178 = vadd.f32 %v81, %v1177
  %v1179 = vpop.f32.mrf.mxu0
  %v1180 = vadd.f32 %v81, %v1179
  %1181 = vmatmul.bf16.gmra.mxu0 %v1055
  %v1182 = vpop.f32.mrf.mxu0
  %v1183 = vadd.f32 %v81, %v1182
  %v1184 = vpop.f32.mrf.mxu0
  %v1185 = vadd.f32 %v81, %v1184
  %1186 = vmatmul.bf16.gmra.mxu0 %v1056
  %v1187 = vpop.f32.mrf.mxu0
  %v1188 = vadd.f32 %v81, %v1187
  %v1189 = vpop.f32.mrf.mxu0
  %v1190 = vadd.f32 %v81, %v1189
  %1191 = vmatmul.bf16.gmra.mxu0 %v1057
  %v1192 = vpop.f32.mrf.mxu0
  %v1193 = vadd.f32 %v81, %v1192
  %v1194 = vpop.f32.mrf.mxu0
  %v1195 = vadd.f32 %v81, %v1194
  %1196 = vmatmul.bf16.gmra.mxu0 %v1058
  %v1197 = vpop.f32.mrf.mxu0
  %v1198 = vadd.f32 %v81, %v1197
  %v1199 = vpop.f32.mrf.mxu0
  %v1200 = vadd.f32 %v81, %v1199
  %1201 = vmatmul.bf16.gmra.mxu0 %v1059
  %v1202 = vpop.f32.mrf.mxu0
  %v1203 = vadd.f32 %v81, %v1202
  %v1204 = vpop.f32.mrf.mxu0
  %v1205 = vadd.f32 %v81, %v1204
  %1206 = vmatmul.bf16.gmra.mxu0 %v1060
  %v1207 = vpop.f32.mrf.mxu0
  %v1208 = vadd.f32 %v81, %v1207
  %v1209 = vpop.f32.mrf.mxu0
  %v1210 = vadd.f32 %v81, %v1209
  %1211 = vmatmul.bf16.gmra.mxu0 %v1061
  %v1212 = vpop.f32.mrf.mxu0
  %v1213 = vadd.f32 %v81, %v1212
  %v1214 = vpop.f32.mrf.mxu0
  %v1215 = vadd.f32 %v81, %v1214
  %1216 = vmatmul.bf16.gmra.mxu0 %v1062
  %v1217 = vpop.f32.mrf.mxu0
  %v1218 = vadd.f32 %v81, %v1217
  %v1219 = vpop.f32.mrf.mxu0
  %1220 = vdwg.mxu0
  %v1221 = vmax.f32 %v1098, 0.0
  %v1222 = vmax.f32 %v1100, 0.0
  %v1223 = vmax.f32 %v1103, 0.0
  %v1224 = vmax.f32 %v1105, 0.0
  %v1225 = vmax.f32 %v1108, 0.0
  %v1226 = vmax.f32 %v1110, 0.0
  %v1227 = vmax.f32 %v1113, 0.0
  %v1228 = vmax.f32 %v1115, 0.0
  %v1229 = vmax.f32 %v1118, 0.0
  %v1230 = vmax.f32 %v1120, 0.0
  %v1231 = vmax.f32 %v1123, 0.0
  %v1232 = vmax.f32 %v1125, 0.0
  %v1233 = vmax.f32 %v1128, 0.0
  %v1234 = vmax.f32 %v1130, 0.0
  %v1235 = vmax.f32 %v1133, 0.0
  %v1236 = vmax.f32 %v1135, 0.0
  %v1237 = vmax.f32 %v1138, 0.0
  %v1238 = vmax.f32 %v1140, 0.0
  %v1239 = vmax.f32 %v1143, 0.0
  %v1240 = vmax.f32 %v1145, 0.0
  %v1241 = vmax.f32 %v1148, 0.0
  %v1242 = vmax.f32 %v1150, 0.0
  %v1243 = vmax.f32 %v1153, 0.0
  %v1244 = vmax.f32 %v1155, 0.0
  %v1245 = vmax.f32 %v1158, 0.0
  %v1246 = vmax.f32 %v1160, 0.0
  %v1247 = vmax.f32 %v1163, 0.0
  %v1248 = vmax.f32 %v1165, 0.0
  %v1249 = vmax.f32 %v1168, 0.0
  %v1250 = vmax.f32 %v1170, 0.0
  %v1251 = vmax.f32 %v1173, 0.0
  %v1252 = vmax.f32 %v1175, 0.0
  %v1253 = vmax.f32 %v1178, 0.0
  %v1254 = vmax.f32 %v1180, 0.0
  %v1255 = vmax.f32 %v1183, 0.0
  %v1256 = vmax.f32 %v1185, 0.0
  %v1257 = vmax.f32 %v1188, 0.0
  %v1258 = vmax.f32 %v1190, 0.0
  %v1259 = vmax.f32 %v1193, 0.0
  %v1260 = vmax.f32 %v1195, 0.0
  %v1261 = vmax.f32 %v1198, 0.0
  %v1262 = vmax.f32 %v1200, 0.0
  %v1263 = vmax.f32 %v1203, 0.0
  %v1264 = vmax.f32 %v1205, 0.0
  %v1265 = vmax.f32 %v1208, 0.0
  %v1266 = vmax.f32 %v1210, 0.0
  %v1267 = vmax.f32 %v1213, 0.0
  %v1268 = vmax.f32 %v1215, 0.0
  %v1269 = vmax.f32 %v1218, 0.0
  %s1270 = scalar_lea.vmem %s0, 588
  %v1271 = vld [vmem:[%s1270] sm:$0xf]
  %v1272 = vld [vmem:[%s1270 + $0x4] sm:$0xf]
  %v1273 = vld [vmem:[%s1270 + $0x8] sm:$0xf]
  %v1274 = vld [vmem:[%s1270 + $0xc] sm:$0xf]
  %v1275 = vld [vmem:[%s1270 + $0x10] sm:$0xf]
  %v1276 = vld [vmem:[%s1270 + $0x14] sm:$0xf]
  %v1277 = vld [vmem:[%s1270 + $0x18] sm:$0xf]
  %v1278 = vld [vmem:[%s1270 + $0x1c] sm:$0xf]
  %v1279 = vld [vmem:[%s1270 + $0x20] sm:$0xf]
  %v1280 = vld [vmem:[%s1270 + $0x24] sm:$0xf]
  %v1281 = vld [vmem:[%s1270 + $0x28] sm:$0xf]
  %v1282 = vld [vmem:[%s1270 + $0x2c] sm:$0xf]
  %v1283 = vld [vmem:[%s1270 + $0x30] sm:$0xf]
  %v1284 = vld [vmem:[%s1270 + $0x34] sm:$0xf]
  %v1285 = vld [vmem:[%s1270 + $0x38] sm:$0xf]
  %v1286 = vld [vmem:[%s1270 + $0x3c] sm:$0xf]
  %v1287 = vld [vmem:[%s1270 + $0x40] sm:$0xf]
  %v1288 = vld [vmem:[%s1270 + $0x44] sm:$0xf]
  %v1289 = vld [vmem:[%s1270 + $0x48] sm:$0xf]
  %v1290 = vld [vmem:[%s1270 + $0x4c] sm:$0xf]
  %v1291 = vld [vmem:[%s1270 + $0x50] sm:$0xf]
  %v1292 = vld [vmem:[%s1270 + $0x54] sm:$0xf]
  %v1293 = vld [vmem:[%s1270 + $0x58] sm:$0xf]
  %v1294 = vld [vmem:[%s1270 + $0x5c] sm:$0xf]
  %v1295 = vld [vmem:[%s1270 + $0x60] sm:$0xf]
  %v1296 = vld [vmem:[%s1270 + $0x64] sm:$0xf]
  %v1297 = vld [vmem:[%s1270 + $0x68] sm:$0xf]
  %v1298 = vld [vmem:[%s1270 + $0x6c] sm:$0xf]
  %v1299 = vld [vmem:[%s1270 + $0x70] sm:$0xf]
  %v1300 = vld [vmem:[%s1270 + $0x74] sm:$0xf]
  %v1301 = vld [vmem:[%s1270 + $0x78] sm:$0xf]
  %v1302 = vld [vmem:[%s1270 + $0x7c] sm:$0xf]
  %v1303 = vld [vmem:[%s1270 + $0x80] sm:$0xf]
  %v1304 = vld [vmem:[%s1270 + $0x84] sm:$0xf]
  %v1305 = vld [vmem:[%s1270 + $0x88] sm:$0xf]
  %v1306 = vld [vmem:[%s1270 + $0x8c] sm:$0xf]
  %v1307 = vld [vmem:[%s1270 + $0x90] sm:$0xf]
  %v1308 = vld [vmem:[%s1270 + $0x94] sm:$0xf]
  %v1309 = vld [vmem:[%s1270 + $0x98] sm:$0xf]
  %v1310 = vld [vmem:[%s1270 + $0x9c] sm:$0xf]
  %v1311 = vld [vmem:[%s1270 + $0xa0] sm:$0xf]
  %v1312 = vld [vmem:[%s1270 + $0xa4] sm:$0xf]
  %v1313 = vld [vmem:[%s1270 + $0xa8] sm:$0xf]
  %v1314 = vld [vmem:[%s1270 + $0xac] sm:$0xf]
  %v1315 = vld [vmem:[%s1270 + $0xb0] sm:$0xf]
  %v1316 = vld [vmem:[%s1270 + $0xb4] sm:$0xf]
  %v1317 = vld [vmem:[%s1270 + $0xb8] sm:$0xf]
  %v1318 = vld [vmem:[%s1270 + $0xbc] sm:$0xf]
  %v1319 = vld [vmem:[%s1270 + $0xc0] sm:$0xf]
  %v1369 = vunpack.c.l.b16 %v1271
  %v1370 = vunpack.c.l.b16 %v1272
  %v1371 = vunpack.c.l.b16 %v1273
  %v1372 = vunpack.c.l.b16 %v1274
  %v1373 = vunpack.c.l.b16 %v1275
  %v1374 = vunpack.c.l.b16 %v1276
  %v1375 = vunpack.c.l.b16 %v1277
  %v1376 = vunpack.c.l.b16 %v1278
  %v1377 = vunpack.c.l.b16 %v1279
  %v1378 = vunpack.c.l.b16 %v1280
  %v1379 = vunpack.c.l.b16 %v1281
  %v1380 = vunpack.c.l.b16 %v1282
  %v1381 = vunpack.c.l.b16 %v1283
  %v1382 = vunpack.c.l.b16 %v1284
  %v1383 = vunpack.c.l.b16 %v1285
  %v1384 = vunpack.c.l.b16 %v1286
  %v1385 = vunpack.c.l.b16 %v1287
  %v1386 = vunpack.c.l.b16 %v1288
  %v1387 = vunpack.c.l.b16 %v1289
  %v1388 = vunpack.c.l.b16 %v1290
  %v1389 = vunpack.c.l.b16 %v1291
  %v1390 = vunpack.c.l.b16 %v1292
  %v1391 = vunpack.c.l.b16 %v1293
  %v1392 = vunpack.c.l.b16 %v1294
  %v1393 = vunpack.c.l.b16 %v1295
  %v1394 = vunpack.c.l.b16 %v1296
  %v1395 = vunpack.c.l.b16 %v1297
  %v1396 = vunpack.c.l.b16 %v1298
  %v1397 = vunpack.c.l.b16 %v1299
  %v1398 = vunpack.c.l.b16 %v1300
  %v1399 = vunpack.c.l.b16 %v1301
  %v1400 = vunpack.c.l.b16 %v1302
  %v1401 = vunpack.c.l.b16 %v1303
  %v1402 = vunpack.c.l.b16 %v1304
  %v1403 = vunpack.c.l.b16 %v1305
  %v1404 = vunpack.c.l.b16 %v1306
  %v1405 = vunpack.c.l.b16 %v1307
  %v1406 = vunpack.c.l.b16 %v1308
  %v1407 = vunpack.c.l.b16 %v1309
  %v1408 = vunpack.c.l.b16 %v1310
  %v1409 = vunpack.c.l.b16 %v1311
  %v1410 = vunpack.c.l.b16 %v1312
  %v1411 = vunpack.c.l.b16 %v1313
  %v1412 = vunpack.c.l.b16 %v1314
  %v1413 = vunpack.c.l.b16 %v1315
  %v1414 = vunpack.c.l.b16 %v1316
  %v1415 = vunpack.c.l.b16 %v1317
  %v1416 = vunpack.c.l.b16 %v1318
  %v1417 = vunpack.c.l.b16 %v1319
  %v1418 = vpack.c.b16 %v1370, %v1369
  %v1419 = vpack.c.b16 %v1372, %v1371
  %v1420 = vpack.c.b16 %v1374, %v1373
  %v1421 = vpack.c.b16 %v1376, %v1375
  %v1422 = vpack.c.b16 %v1378, %v1377
  %v1423 = vpack.c.b16 %v1380, %v1379
  %v1424 = vpack.c.b16 %v1382, %v1381
  %v1425 = vpack.c.b16 %v1384, %v1383
  %v1426 = vpack.c.b16 %v1386, %v1385
  %v1427 = vpack.c.b16 %v1388, %v1387
  %v1428 = vpack.c.b16 %v1390, %v1389
  %v1429 = vpack.c.b16 %v1392, %v1391
  %v1430 = vpack.c.b16 %v1394, %v1393
  %v1431 = vpack.c.b16 %v1396, %v1395
  %v1432 = vpack.c.b16 %v1398, %v1397
  %v1433 = vpack.c.b16 %v1400, %v1399
  %v1434 = vpack.c.b16 %v1402, %v1401
  %v1435 = vpack.c.b16 %v1404, %v1403
  %v1436 = vpack.c.b16 %v1406, %v1405
  %v1437 = vpack.c.b16 %v1408, %v1407
  %v1438 = vpack.c.b16 %v1410, %v1409
  %v1439 = vpack.c.b16 %v1412, %v1411
  %v1440 = vpack.c.b16 %v1414, %v1413
  %v1441 = vpack.c.b16 %v1416, %v1415
  %v1442 = vpack.c.b16 %v1417, %v1417
  %1468 = vmatpush.bf16.msra.mxu0 %v270
  %1469 = vmatpush.bf16.msra.mxu0 %v269
  %1470 = vmatpush.bf16.msra.mxu0 %v268
  %1471 = vmatpush.bf16.msra.mxu0 %v267
  %1472 = vmatpush.bf16.msra.mxu0 %v266
  %1473 = vmatpush.bf16.msra.mxu0 %v265
  %1474 = vmatpush.bf16.msra.mxu0 %v264
  %1475 = vmatpush.bf16.msra.mxu0 %v263
  %1476 = vmatmul.bf16.gmra.mxu0 %v1418
  %v1477 = vpop.f32.mrf.mxu0
  %v1478 = vadd.f32 %v81, %v1477
  %v1479 = vpop.f32.mrf.mxu0
  %v1480 = vadd.f32 %v81, %v1479
  %1481 = vmatmul.bf16.gmra.mxu0 %v1419
  %v1482 = vpop.f32.mrf.mxu0
  %v1483 = vadd.f32 %v81, %v1482
  %v1484 = vpop.f32.mrf.mxu0
  %v1485 = vadd.f32 %v81, %v1484
  %1486 = vmatmul.bf16.gmra.mxu0 %v1420
  %v1487 = vpop.f32.mrf.mxu0
  %v1488 = vadd.f32 %v81, %v1487
  %v1489 = vpop.f32.mrf.mxu0
  %v1490 = vadd.f32 %v81, %v1489
  %1491 = vmatmul.bf16.gmra.mxu0 %v1421
  %v1492 = vpop.f32.mrf.mxu0
  %v1493 = vadd.f32 %v81, %v1492
  %v1494 = vpop.f32.mrf.mxu0
  %v1495 = vadd.f32 %v81, %v1494
  %1496 = vmatmul.bf16.gmra.mxu0 %v1422
  %v1497 = vpop.f32.mrf.mxu0
  %v1498 = vadd.f32 %v81, %v1497
  %v1499 = vpop.f32.mrf.mxu0
  %v1500 = vadd.f32 %v81, %v1499
  %1501 = vmatmul.bf16.gmra.mxu0 %v1423
  %v1502 = vpop.f32.mrf.mxu0
  %v1503 = vadd.f32 %v81, %v1502
  %v1504 = vpop.f32.mrf.mxu0
  %v1505 = vadd.f32 %v81, %v1504
  %1506 = vmatmul.bf16.gmra.mxu0 %v1424
  %v1507 = vpop.f32.mrf.mxu0
  %v1508 = vadd.f32 %v81, %v1507
  %v1509 = vpop.f32.mrf.mxu0
  %v1510 = vadd.f32 %v81, %v1509
  %1511 = vmatmul.bf16.gmra.mxu0 %v1425
  %v1512 = vpop.f32.mrf.mxu0
  %v1513 = vadd.f32 %v81, %v1512
  %v1514 = vpop.f32.mrf.mxu0
  %v1515 = vadd.f32 %v81, %v1514
  %1516 = vmatmul.bf16.gmra.mxu0 %v1426
  %v1517 = vpop.f32.mrf.mxu0
  %v1518 = vadd.f32 %v81, %v1517
  %v1519 = vpop.f32.mrf.mxu0
  %v1520 = vadd.f32 %v81, %v1519
  %1521 = vmatmul.bf16.gmra.mxu0 %v1427
  %v1522 = vpop.f32.mrf.mxu0
  %v1523 = vadd.f32 %v81, %v1522
  %v1524 = vpop.f32.mrf.mxu0
  %v1525 = vadd.f32 %v81, %v1524
  %1526 = vmatmul.bf16.gmra.mxu0 %v1428
  %v1527 = vpop.f32.mrf.mxu0
  %v1528 = vadd.f32 %v81, %v1527
  %v1529 = vpop.f32.mrf.mxu0
  %v1530 = vadd.f32 %v81, %v1529
  %1531 = vmatmul.bf16.gmra.mxu0 %v1429
  %v1532 = vpop.f32.mrf.mxu0
  %v1533 = vadd.f32 %v81, %v1532
  %v1534 = vpop.f32.mrf.mxu0
  %v1535 = vadd.f32 %v81, %v1534
  %1536 = vmatmul.bf16.gmra.mxu0 %v1430
  %v1537 = vpop.f32.mrf.mxu0
  %v1538 = vadd.f32 %v81, %v1537
  %v1539 = vpop.f32.mrf.mxu0
  %v1540 = vadd.f32 %v81, %v1539
  %1541 = vmatmul.bf16.gmra.mxu0 %v1431
  %v1542 = vpop.f32.mrf.mxu0
  %v1543 = vadd.f32 %v81, %v1542
  %v1544 = vpop.f32.mrf.mxu0
  %v1545 = vadd.f32 %v81, %v1544
  %1546 = vmatmul.bf16.gmra.mxu0 %v1432
  %v1547 = vpop.f32.mrf.mxu0
  %v1548 = vadd.f32 %v81, %v1547
  %v1549 = vpop.f32.mrf.mxu0
  %v1550 = vadd.f32 %v81, %v1549
  %1551 = vmatmul.bf16.gmra.mxu0 %v1433
  %v1552 = vpop.f32.mrf.mxu0
  %v1553 = vadd.f32 %v81, %v1552
  %v1554 = vpop.f32.mrf.mxu0
  %v1555 = vadd.f32 %v81, %v1554
  %1556 = vmatmul.bf16.gmra.mxu0 %v1434
  %v1557 = vpop.f32.mrf.mxu0
  %v1558 = vadd.f32 %v81, %v1557
  %v1559 = vpop.f32.mrf.mxu0
  %v1560 = vadd.f32 %v81, %v1559
  %1561 = vmatmul.bf16.gmra.mxu0 %v1435
  %v1562 = vpop.f32.mrf.mxu0
  %v1563 = vadd.f32 %v81, %v1562
  %v1564 = vpop.f32.mrf.mxu0
  %v1565 = vadd.f32 %v81, %v1564
  %1566 = vmatmul.bf16.gmra.mxu0 %v1436
  %v1567 = vpop.f32.mrf.mxu0
  %v1568 = vadd.f32 %v81, %v1567
  %v1569 = vpop.f32.mrf.mxu0
  %v1570 = vadd.f32 %v81, %v1569
  %1571 = vmatmul.bf16.gmra.mxu0 %v1437
  %v1572 = vpop.f32.mrf.mxu0
  %v1573 = vadd.f32 %v81, %v1572
  %v1574 = vpop.f32.mrf.mxu0
  %v1575 = vadd.f32 %v81, %v1574
  %1576 = vmatmul.bf16.gmra.mxu0 %v1438
  %v1577 = vpop.f32.mrf.mxu0
  %v1578 = vadd.f32 %v81, %v1577
  %v1579 = vpop.f32.mrf.mxu0
  %v1580 = vadd.f32 %v81, %v1579
  %1581 = vmatmul.bf16.gmra.mxu0 %v1439
  %v1582 = vpop.f32.mrf.mxu0
  %v1583 = vadd.f32 %v81, %v1582
  %v1584 = vpop.f32.mrf.mxu0
  %v1585 = vadd.f32 %v81, %v1584
  %1586 = vmatmul.bf16.gmra.mxu0 %v1440
  %v1587 = vpop.f32.mrf.mxu0
  %v1588 = vadd.f32 %v81, %v1587
  %v1589 = vpop.f32.mrf.mxu0
  %v1590 = vadd.f32 %v81, %v1589
  %1591 = vmatmul.bf16.gmra.mxu0 %v1441
  %v1592 = vpop.f32.mrf.mxu0
  %v1593 = vadd.f32 %v81, %v1592
  %v1594 = vpop.f32.mrf.mxu0
  %v1595 = vadd.f32 %v81, %v1594
  %1596 = vmatmul.bf16.gmra.mxu0 %v1442
  %v1597 = vpop.f32.mrf.mxu0
  %v1598 = vadd.f32 %v81, %v1597
  %v1599 = vpop.f32.mrf.mxu0
  %1600 = vdwg.mxu0
  %v1601 = vmax.f32 %v1478, 0.0
  %v1602 = vmax.f32 %v1480, 0.0
  %v1603 = vmax.f32 %v1483, 0.0
  %v1604 = vmax.f32 %v1485, 0.0
  %v1605 = vmax.f32 %v1488, 0.0
  %v1606 = vmax.f32 %v1490, 0.0
  %v1607 = vmax.f32 %v1493, 0.0
  %v1608 = vmax.f32 %v1495, 0.0
  %v1609 = vmax.f32 %v1498, 0.0
  %v1610 = vmax.f32 %v1500, 0.0
  %v1611 = vmax.f32 %v1503, 0.0
  %v1612 = vmax.f32 %v1505, 0.0
  %v1613 = vmax.f32 %v1508, 0.0
  %v1614 = vmax.f32 %v1510, 0.0
  %v1615 = vmax.f32 %v1513, 0.0
  %v1616 = vmax.f32 %v1515, 0.0
  %v1617 = vmax.f32 %v1518, 0.0
  %v1618 = vmax.f32 %v1520, 0.0
  %v1619 = vmax.f32 %v1523, 0.0
  %v1620 = vmax.f32 %v1525, 0.0
  %v1621 = vmax.f32 %v1528, 0.0
  %v1622 = vmax.f32 %v1530, 0.0
  %v1623 = vmax.f32 %v1533, 0.0
  %v1624 = vmax.f32 %v1535, 0.0
  %v1625 = vmax.f32 %v1538, 0.0
  %v1626 = vmax.f32 %v1540, 0.0
  %v1627 = vmax.f32 %v1543, 0.0
  %v1628 = vmax.f32 %v1545, 0.0
  %v1629 = vmax.f32 %v1548, 0.0
  %v1630 = vmax.f32 %v1550, 0.0
  %v1631 = vmax.f32 %v1553, 0.0
  %v1632 = vmax.f32 %v1555, 0.0
  %v1633 = vmax.f32 %v1558, 0.0
  %v1634 = vmax.f32 %v1560, 0.0
  %v1635 = vmax.f32 %v1563, 0.0
  %v1636 = vmax.f32 %v1565, 0.0
  %v1637 = vmax.f32 %v1568, 0.0
  %v1638 = vmax.f32 %v1570, 0.0
  %v1639 = vmax.f32 %v1573, 0.0
  %v1640 = vmax.f32 %v1575, 0.0
  %v1641 = vmax.f32 %v1578, 0.0
  %v1642 = vmax.f32 %v1580, 0.0
  %v1643 = vmax.f32 %v1583, 0.0
  %v1644 = vmax.f32 %v1585, 0.0
  %v1645 = vmax.f32 %v1588, 0.0
  %v1646 = vmax.f32 %v1590, 0.0
  %v1647 = vmax.f32 %v1593, 0.0
  %v1648 = vmax.f32 %v1595, 0.0
  %v1649 = vmax.f32 %v1598, 0.0
  %v1650 = vmax.f32 %v1221, %v1601
  %v1651 = vmax.f32 %v1222, %v1602
  %v1652 = vmax.f32 %v1223, %v1603
  %v1653 = vmax.f32 %v1224, %v1604
  %v1654 = vmax.f32 %v1225, %v1605
  %v1655 = vmax.f32 %v1226, %v1606
  %v1656 = vmax.f32 %v1227, %v1607
  %v1657 = vmax.f32 %v1228, %v1608
  %v1658 = vmax.f32 %v1229, %v1609
  %v1659 = vmax.f32 %v1230, %v1610
  %v1660 = vmax.f32 %v1231, %v1611
  %v1661 = vmax.f32 %v1232, %v1612
  %v1662 = vmax.f32 %v1233, %v1613
  %v1663 = vmax.f32 %v1234, %v1614
  %v1664 = vmax.f32 %v1235, %v1615
  %v1665 = vmax.f32 %v1236, %v1616
  %v1666 = vmax.f32 %v1237, %v1617
  %v1667 = vmax.f32 %v1238, %v1618
  %v1668 = vmax.f32 %v1239, %v1619
  %v1669 = vmax.f32 %v1240, %v1620
  %v1670 = vmax.f32 %v1241, %v1621
  %v1671 = vmax.f32 %v1242, %v1622
  %v1672 = vmax.f32 %v1243, %v1623
  %v1673 = vmax.f32 %v1244, %v1624
  %v1674 = vmax.f32 %v1245, %v1625
  %v1675 = vmax.f32 %v1246, %v1626
  %v1676 = vmax.f32 %v1247, %v1627
  %v1677 = vmax.f32 %v1248, %v1628
  %v1678 = vmax.f32 %v1249, %v1629
  %v1679 = vmax.f32 %v1250, %v1630
  %v1680 = vmax.f32 %v1251, %v1631
  %v1681 = vmax.f32 %v1252, %v1632
  %v1682 = vmax.f32 %v1253, %v1633
  %v1683 = vmax.f32 %v1254, %v1634
  %v1684 = vmax.f32 %v1255, %v1635
  %v1685 = vmax.f32 %v1256, %v1636
  %v1686 = vmax.f32 %v1257, %v1637
  %v1687 = vmax.f32 %v1258, %v1638
  %v1688 = vmax.f32 %v1259, %v1639
  %v1689 = vmax.f32 %v1260, %v1640
  %v1690 = vmax.f32 %v1261, %v1641
  %v1691 = vmax.f32 %v1262, %v1642
  %v1692 = vmax.f32 %v1263, %v1643
  %v1693 = vmax.f32 %v1264, %v1644
  %v1694 = vmax.f32 %v1265, %v1645
  %v1695 = vmax.f32 %v1266, %v1646
  %v1696 = vmax.f32 %v1267, %v1647
  %v1697 = vmax.f32 %v1268, %v1648
  %v1698 = vmax.f32 %v1269, %v1649
  %v1699 = vmax.f32 %v841, %v1650
  %v1700 = vmax.f32 %v842, %v1651
  %v1701 = vmax.f32 %v843, %v1652
  %v1702 = vmax.f32 %v844, %v1653
  %v1703 = vmax.f32 %v845, %v1654
  %v1704 = vmax.f32 %v846, %v1655
  %v1705 = vmax.f32 %v847, %v1656
  %v1706 = vmax.f32 %v848, %v1657
  %v1707 = vmax.f32 %v849, %v1658
  %v1708 = vmax.f32 %v850, %v1659
  %v1709 = vmax.f32 %v851, %v1660
  %v1710 = vmax.f32 %v852, %v1661
  %v1711 = vmax.f32 %v853, %v1662
  %v1712 = vmax.f32 %v854, %v1663
  %v1713 = vmax.f32 %v855, %v1664
  %v1714 = vmax.f32 %v856, %v1665
  %v1715 = vmax.f32 %v857, %v1666
  %v1716 = vmax.f32 %v858, %v1667
  %v1717 = vmax.f32 %v859, %v1668
  %v1718 = vmax.f32 %v860, %v1669
  %v1719 = vmax.f32 %v861, %v1670
  %v1720 = vmax.f32 %v862, %v1671
  %v1721 = vmax.f32 %v863, %v1672
  %v1722 = vmax.f32 %v864, %v1673
  %v1723 = vmax.f32 %v865, %v1674
  %v1724 = vmax.f32 %v866, %v1675
  %v1725 = vmax.f32 %v867, %v1676
  %v1726 = vmax.f32 %v868, %v1677
  %v1727 = vmax.f32 %v869, %v1678
  %v1728 = vmax.f32 %v870, %v1679
  %v1729 = vmax.f32 %v871, %v1680
  %v1730 = vmax.f32 %v872, %v1681
  %v1731 = vmax.f32 %v873, %v1682
  %v1732 = vmax.f32 %v874, %v1683
  %v1733 = vmax.f32 %v875, %v1684
  %v1734 = vmax.f32 %v876, %v1685
  %v1735 = vmax.f32 %v877, %v1686
  %v1736 = vmax.f32 %v878, %v1687
  %v1737 = vmax.f32 %v879, %v1688
  %v1738 = vmax.f32 %v880, %v1689
  %v1739 = vmax.f32 %v881, %v1690
  %v1740 = vmax.f32 %v882, %v1691
  %v1741 = vmax.f32 %v883, %v1692
  %v1742 = vmax.f32 %v884, %v1693
  %v1743 = vmax.f32 %v885, %v1694
  %v1744 = vmax.f32 %v886, %v1695
  %v1745 = vmax.f32 %v887, %v1696
  %v1746 = vmax.f32 %v888, %v1697
  %v1747 = vmax.f32 %v889, %v1698
  %v1748 = vpack.c.bf16 %v1699, %v1699
  %v1749 = vpack.c.bf16 %v1700, %v1700
  %v1750 = vpack.c.bf16 %v1701, %v1701
  %v1751 = vpack.c.bf16 %v1702, %v1702
  %v1752 = vpack.c.bf16 %v1703, %v1703
  %v1753 = vpack.c.bf16 %v1704, %v1704
  %v1754 = vpack.c.bf16 %v1705, %v1705
  %v1755 = vpack.c.bf16 %v1706, %v1706
  %v1756 = vpack.c.bf16 %v1707, %v1707
  %v1757 = vpack.c.bf16 %v1708, %v1708
  %v1758 = vpack.c.bf16 %v1709, %v1709
  %v1759 = vpack.c.bf16 %v1710, %v1710
  %v1760 = vpack.c.bf16 %v1711, %v1711
  %v1761 = vpack.c.bf16 %v1712, %v1712
  %v1762 = vpack.c.bf16 %v1713, %v1713
  %v1763 = vpack.c.bf16 %v1714, %v1714
  %v1764 = vpack.c.bf16 %v1715, %v1715
  %v1765 = vpack.c.bf16 %v1716, %v1716
  %v1766 = vpack.c.bf16 %v1717, %v1717
  %v1767 = vpack.c.bf16 %v1718, %v1718
  %v1768 = vpack.c.bf16 %v1719, %v1719
  %v1769 = vpack.c.bf16 %v1720, %v1720
  %v1770 = vpack.c.bf16 %v1721, %v1721
  %v1771 = vpack.c.bf16 %v1722, %v1722
  %v1772 = vpack.c.bf16 %v1723, %v1723
  %v1773 = vpack.c.bf16 %v1724, %v1724
  %v1774 = vpack.c.bf16 %v1725, %v1725
  %v1775 = vpack.c.bf16 %v1726, %v1726
  %v1776 = vpack.c.bf16 %v1727, %v1727
  %v1777 = vpack.c.bf16 %v1728, %v1728
  %v1778 = vpack.c.bf16 %v1729, %v1729
  %v1779 = vpack.c.bf16 %v1730, %v1730
  %v1780 = vpack.c.bf16 %v1731, %v1731
  %v1781 = vpack.c.bf16 %v1732, %v1732
  %v1782 = vpack.c.bf16 %v1733, %v1733
  %v1783 = vpack.c.bf16 %v1734, %v1734
  %v1784 = vpack.c.bf16 %v1735, %v1735
  %v1785 = vpack.c.bf16 %v1736, %v1736
  %v1786 = vpack.c.bf16 %v1737, %v1737
  %v1787 = vpack.c.bf16 %v1738, %v1738
  %v1788 = vpack.c.bf16 %v1739, %v1739
  %v1789 = vpack.c.bf16 %v1740, %v1740
  %v1790 = vpack.c.bf16 %v1741, %v1741
  %v1791 = vpack.c.bf16 %v1742, %v1742
  %v1792 = vpack.c.bf16 %v1743, %v1743
  %v1793 = vpack.c.bf16 %v1744, %v1744
  %v1794 = vpack.c.bf16 %v1745, %v1745
  %v1795 = vpack.c.bf16 %v1746, %v1746
  %v1796 = vpack.c.bf16 %v1747, %v1747
  %1797 = vst [vmem:[%s3] sm:$0xf] %v1748
  %1798 = vst [vmem:[%s3 + $0x4] sm:$0xf] %v1749
  %1799 = vst [vmem:[%s3 + $0x8] sm:$0xf] %v1750
  %1800 = vst [vmem:[%s3 + $0xc] sm:$0xf] %v1751
  %1801 = vst [vmem:[%s3 + $0x10] sm:$0xf] %v1752
  %1802 = vst [vmem:[%s3 + $0x14] sm:$0xf] %v1753
  %1803 = vst [vmem:[%s3 + $0x18] sm:$0xf] %v1754
  %1804 = vst [vmem:[%s3 + $0x1c] sm:$0xf] %v1755
  %1805 = vst [vmem:[%s3 + $0x20] sm:$0xf] %v1756
  %1806 = vst [vmem:[%s3 + $0x24] sm:$0xf] %v1757
  %1807 = vst [vmem:[%s3 + $0x28] sm:$0xf] %v1758
  %1808 = vst [vmem:[%s3 + $0x2c] sm:$0xf] %v1759
  %1809 = vst [vmem:[%s3 + $0x30] sm:$0xf] %v1760
  %1810 = vst [vmem:[%s3 + $0x34] sm:$0xf] %v1761
  %1811 = vst [vmem:[%s3 + $0x38] sm:$0xf] %v1762
  %1812 = vst [vmem:[%s3 + $0x3c] sm:$0xf] %v1763
  %1813 = vst [vmem:[%s3 + $0x40] sm:$0xf] %v1764
  %1814 = vst [vmem:[%s3 + $0x44] sm:$0xf] %v1765
  %1815 = vst [vmem:[%s3 + $0x48] sm:$0xf] %v1766
  %1816 = vst [vmem:[%s3 + $0x4c] sm:$0xf] %v1767
  %1817 = vst [vmem:[%s3 + $0x50] sm:$0xf] %v1768
  %1818 = vst [vmem:[%s3 + $0x54] sm:$0xf] %v1769
  %1819 = vst [vmem:[%s3 + $0x58] sm:$0xf] %v1770
  %1820 = vst [vmem:[%s3 + $0x5c] sm:$0xf] %v1771
  %1821 = vst [vmem:[%s3 + $0x60] sm:$0xf] %v1772
  %1822 = vst [vmem:[%s3 + $0x64] sm:$0xf] %v1773
  %1823 = vst [vmem:[%s3 + $0x68] sm:$0xf] %v1774
  %1824 = vst [vmem:[%s3 + $0x6c] sm:$0xf] %v1775
  %1825 = vst [vmem:[%s3 + $0x70] sm:$0xf] %v1776
  %1826 = vst [vmem:[%s3 + $0x74] sm:$0xf] %v1777
  %1827 = vst [vmem:[%s3 + $0x78] sm:$0xf] %v1778
  %1828 = vst [vmem:[%s3 + $0x7c] sm:$0xf] %v1779
  %1829 = vst [vmem:[%s3 + $0x80] sm:$0xf] %v1780
  %1830 = vst [vmem:[%s3 + $0x84] sm:$0xf] %v1781
  %1831 = vst [vmem:[%s3 + $0x88] sm:$0xf] %v1782
  %1832 = vst [vmem:[%s3 + $0x8c] sm:$0xf] %v1783
  %1833 = vst [vmem:[%s3 + $0x90] sm:$0xf] %v1784
  %1834 = vst [vmem:[%s3 + $0x94] sm:$0xf] %v1785
  %1835 = vst [vmem:[%s3 + $0x98] sm:$0xf] %v1786
  %1836 = vst [vmem:[%s3 + $0x9c] sm:$0xf] %v1787
  %1837 = vst [vmem:[%s3 + $0xa0] sm:$0xf] %v1788
  %1838 = vst [vmem:[%s3 + $0xa4] sm:$0xf] %v1789
  %1839 = vst [vmem:[%s3 + $0xa8] sm:$0xf] %v1790
  %1840 = vst [vmem:[%s3 + $0xac] sm:$0xf] %v1791
  %1841 = vst [vmem:[%s3 + $0xb0] sm:$0xf] %v1792
  %1842 = vst [vmem:[%s3 + $0xb4] sm:$0xf] %v1793
  %1843 = vst [vmem:[%s3 + $0xb8] sm:$0xf] %v1794
  %1844 = vst [vmem:[%s3 + $0xbc] sm:$0xf] %v1795
  %1845 = vst [vmem:[%s3 + $0xc0] sm:$0xf] %v1796
  // Predicated region
  $region14: #{imagenet_forward.3} parent=0 // pred_check
    _
  $region15: #{imagenet_forward.3} parent=0 // pred_check_branch
    %1847 = sbr.rel (0) target = $region17
  $region16: #{imagenet_forward.3} parent=0 // pred_region
    _
  $region17: #{imagenet_forward.3} parent=0 // pred_fallthru
    _
  // Predicated region
  $region18: #{imagenet_forward.3} parent=0 // pred_check
    _
  $region19: #{imagenet_forward.3} parent=0 // pred_check_branch
    %1849 = sbr.rel (0) target = $region21
  $region20: #{imagenet_forward.3} parent=0 // pred_region
    _
  $region21: #{imagenet_forward.3} parent=0 // pred_fallthru
    _

// kernel: imagenet_forward.4
$region0: #{imagenet_forward.4}
  #allocation0 [shape = 'u32[]', space=smem, size = 0x4, offset = 0x4, fixed_abs, tag = 'smem constant byte address 0x4 - core index']
  #allocation1 [shape = 'u32[72,128]{1,0:T(1,128)}', space=vmem, size = 0x9000, scoped, tag = 'internal scratch']
  %s0 = inlined_call_operand.vmem [shape: bf16[4,56,256], index: 0, kind: input, shape index: {}]
  %s1 = inlined_call_operand.vmem [shape: bf16[256,128], index: 1, kind: input, shape index: {}]
  %s2 = inlined_call_operand.vmem [shape: f32[1,128], index: 2, kind: input, shape index: {}]
  %s3 = inlined_call_operand.vmem [shape: bf16[56,128], index: 3, kind: output, shape index: {}]
  %s4 = sld [smem:[#allocation0]]
  $region22: #{imagenet_forward.4} parent=0
    _
  %s6 = ssub.s32 1, %s4
  %s7 = scalar_select 0, %s6, %s4
  // Predicated region
  $region2: #{imagenet_forward.4} parent=0 // pred_check
    _
  $region3: #{imagenet_forward.4} parent=0 // pred_check_branch
    %9 = sbr.rel (0) target = $region5
  $region4: #{imagenet_forward.4} parent=0 // pred_region
    _
  $region5: #{imagenet_forward.4} parent=0 // pred_fallthru
    _
  // Predicated region
  $region6: #{imagenet_forward.4} parent=0 // pred_check
    _
  $region7: #{imagenet_forward.4} parent=0 // pred_check_branch
    %11 = sbr.rel (0) target = $region9
  $region8: #{imagenet_forward.4} parent=0 // pred_region
    _
  $region9: #{imagenet_forward.4} parent=0 // pred_fallthru
    _
  // Predicated region
  $region10: #{imagenet_forward.4} parent=0 // pred_check
    _
  $region11: #{imagenet_forward.4} parent=0 // pred_check_branch
    %13 = sbr.rel (0) target = $region13
  $region12: #{imagenet_forward.4} parent=0 // pred_region
    _
  $region13: #{imagenet_forward.4} parent=0 // pred_fallthru
    _
  %v14 = vld [vmem:[%s1] sm:$0xf]
  %v15 = vld [vmem:[%s1 + $0x4] sm:$0xf]
  %v16 = vld [vmem:[%s1 + $0x8] sm:$0xf]
  %v17 = vld [vmem:[%s1 + $0xc] sm:$0xf]
  %v18 = vld [vmem:[%s1 + $0x10] sm:$0xf]
  %v19 = vld [vmem:[%s1 + $0x14] sm:$0xf]
  %v20 = vld [vmem:[%s1 + $0x18] sm:$0xf]
  %v21 = vld [vmem:[%s1 + $0x1c] sm:$0xf]
  %v22 = vld [vmem:[%s1 + $0x20] sm:$0xf]
  %v23 = vld [vmem:[%s1 + $0x24] sm:$0xf]
  %v24 = vld [vmem:[%s1 + $0x28] sm:$0xf]
  %v25 = vld [vmem:[%s1 + $0x2c] sm:$0xf]
  %v26 = vld [vmem:[%s1 + $0x30] sm:$0xf]
  %v27 = vld [vmem:[%s1 + $0x34] sm:$0xf]
  %v28 = vld [vmem:[%s1 + $0x38] sm:$0xf]
  %v29 = vld [vmem:[%s1 + $0x3c] sm:$0xf]
  %v30 = vld [vmem:[%s1 + $0x40] sm:$0xf]
  %v31 = vld [vmem:[%s1 + $0x44] sm:$0xf]
  %v32 = vld [vmem:[%s1 + $0x48] sm:$0xf]
  %v33 = vld [vmem:[%s1 + $0x4c] sm:$0xf]
  %v34 = vld [vmem:[%s1 + $0x50] sm:$0xf]
  %v35 = vld [vmem:[%s1 + $0x54] sm:$0xf]
  %v36 = vld [vmem:[%s1 + $0x58] sm:$0xf]
  %v37 = vld [vmem:[%s1 + $0x5c] sm:$0xf]
  %v38 = vld [vmem:[%s1 + $0x60] sm:$0xf]
  %v39 = vld [vmem:[%s1 + $0x64] sm:$0xf]
  %v40 = vld [vmem:[%s1 + $0x68] sm:$0xf]
  %v41 = vld [vmem:[%s1 + $0x6c] sm:$0xf]
  %v42 = vld [vmem:[%s1 + $0x70] sm:$0xf]
  %v43 = vld [vmem:[%s1 + $0x74] sm:$0xf]
  %v44 = vld [vmem:[%s1 + $0x78] sm:$0xf]
  %v45 = vld [vmem:[%s1 + $0x7c] sm:$0xf]
  %v46 = vld [vmem:[%s2] sm:$0x1]
  %v47 = vld [vmem:[%s0] sm:$0xff]
  %v48 = vld [vmem:[%s0 + $0x8] sm:$0xff]
  %v49 = vld [vmem:[%s0 + $0x10] sm:$0xff]
  %v50 = vld [vmem:[%s0 + $0x18] sm:$0xff]
  %v51 = vld [vmem:[%s0 + $0x20] sm:$0xff]
  %v52 = vld [vmem:[%s0 + $0x28] sm:$0xff]
  %v53 = vld [vmem:[%s0 + $0x30] sm:$0xff]
  %v55 = vperm.slane %v46, 0
  %v64 = vunpack.c.l.b16 %v47
  %v65 = vunpack.c.h.b16 %v47
  %v66 = vunpack.c.l.b16 %v48
  %v67 = vunpack.c.h.b16 %v48
  %v68 = vunpack.c.l.b16 %v49
  %v69 = vunpack.c.h.b16 %v49
  %v70 = vunpack.c.l.b16 %v50
  %v71 = vunpack.c.h.b16 %v50
  %v72 = vunpack.c.l.b16 %v51
  %v73 = vunpack.c.h.b16 %v51
  %v74 = vunpack.c.l.b16 %v52
  %v75 = vunpack.c.h.b16 %v52
  %v76 = vunpack.c.l.b16 %v53
  %v77 = vunpack.c.h.b16 %v53
  %v78 = vpack.c.b16 %v66, %v64
  %v79 = vpack.c.b16 %v67, %v65
  %v80 = vpack.c.b16 %v70, %v68
  %v81 = vpack.c.b16 %v71, %v69
  %v82 = vpack.c.b16 %v74, %v72
  %v83 = vpack.c.b16 %v75, %v73
  %v84 = vpack.c.b16 %v76, %v76
  %v85 = vpack.c.b16 %v77, %v77
  %v126 = vunpack.c.l.b16 %v14
  %v127 = vunpack.c.l.b16 %v15
  %v128 = vunpack.c.l.b16 %v16
  %v129 = vunpack.c.l.b16 %v17
  %v130 = vunpack.c.l.b16 %v18
  %v131 = vunpack.c.l.b16 %v19
  %v132 = vunpack.c.l.b16 %v20
  %v133 = vunpack.c.l.b16 %v21
  %v134 = vunpack.c.l.b16 %v22
  %v135 = vunpack.c.l.b16 %v23
  %v136 = vunpack.c.l.b16 %v24
  %v137 = vunpack.c.l.b16 %v25
  %v138 = vunpack.c.l.b16 %v26
  %v139 = vunpack.c.l.b16 %v27
  %v140 = vunpack.c.l.b16 %v28
  %v141 = vunpack.c.l.b16 %v29
  %v142 = vunpack.c.l.b16 %v30
  %v143 = vunpack.c.l.b16 %v31
  %v144 = vunpack.c.l.b16 %v32
  %v145 = vunpack.c.l.b16 %v33
  %v146 = vunpack.c.l.b16 %v34
  %v147 = vunpack.c.l.b16 %v35
  %v148 = vunpack.c.l.b16 %v36
  %v149 = vunpack.c.l.b16 %v37
  %v150 = vunpack.c.l.b16 %v38
  %v151 = vunpack.c.l.b16 %v39
  %v152 = vunpack.c.l.b16 %v40
  %v153 = vunpack.c.l.b16 %v41
  %v154 = vunpack.c.l.b16 %v42
  %v155 = vunpack.c.l.b16 %v43
  %v156 = vunpack.c.l.b16 %v44
  %v157 = vunpack.c.l.b16 %v45
  %v158 = vpack.c.b16 %v127, %v126
  %v159 = vpack.c.b16 %v129, %v128
  %v160 = vpack.c.b16 %v131, %v130
  %v161 = vpack.c.b16 %v133, %v132
  %v162 = vpack.c.b16 %v135, %v134
  %v163 = vpack.c.b16 %v137, %v136
  %v164 = vpack.c.b16 %v139, %v138
  %v165 = vpack.c.b16 %v141, %v140
  %v166 = vpack.c.b16 %v143, %v142
  %v167 = vpack.c.b16 %v145, %v144
  %v168 = vpack.c.b16 %v147, %v146
  %v169 = vpack.c.b16 %v149, %v148
  %v170 = vpack.c.b16 %v151, %v150
  %v171 = vpack.c.b16 %v153, %v152
  %v172 = vpack.c.b16 %v155, %v154
  %v173 = vpack.c.b16 %v157, %v156
  %190 = vmatpush.bf16.msra.mxu0 %v165
  %191 = vmatpush.bf16.msra.mxu0 %v164
  %192 = vmatpush.bf16.msra.mxu0 %v163
  %193 = vmatpush.bf16.msra.mxu0 %v162
  %194 = vmatpush.bf16.msra.mxu0 %v161
  %195 = vmatpush.bf16.msra.mxu0 %v160
  %196 = vmatpush.bf16.msra.mxu0 %v159
  %197 = vmatpush.bf16.msra.mxu0 %v158
  %198 = vmatmul.bf16.gmra.mxu0 %v78
  %v199 = vpop.f32.mrf.mxu0
  %v200 = vadd.f32 %v55, %v199
  %v201 = vpop.f32.mrf.mxu0
  %v202 = vadd.f32 %v55, %v201
  %203 = vmatmul.bf16.gmra.mxu0 %v80
  %v204 = vpop.f32.mrf.mxu0
  %v205 = vadd.f32 %v55, %v204
  %v206 = vpop.f32.mrf.mxu0
  %v207 = vadd.f32 %v55, %v206
  %208 = vmatmul.bf16.gmra.mxu0 %v82
  %v209 = vpop.f32.mrf.mxu0
  %v210 = vadd.f32 %v55, %v209
  %v211 = vpop.f32.mrf.mxu0
  %v212 = vadd.f32 %v55, %v211
  %213 = vmatmul.bf16.gmra.mxu0 %v84
  %v214 = vpop.f32.mrf.mxu0
  %v215 = vadd.f32 %v55, %v214
  %v216 = vpop.f32.mrf.mxu0
  %217 = vdwg.mxu0
  %218 = vmatpush.bf16.msra.mxu0 %v173
  %219 = vmatpush.bf16.msra.mxu0 %v172
  %220 = vmatpush.bf16.msra.mxu0 %v171
  %221 = vmatpush.bf16.msra.mxu0 %v170
  %222 = vmatpush.bf16.msra.mxu0 %v169
  %223 = vmatpush.bf16.msra.mxu0 %v168
  %224 = vmatpush.bf16.msra.mxu0 %v167
  %225 = vmatpush.bf16.msra.mxu0 %v166
  %226 = vmatmul.bf16.gmra.mxu0 %v79
  %v227 = vpop.f32.mrf.mxu0
  %v228 = vadd.f32 %v200, %v227
  %v229 = vpop.f32.mrf.mxu0
  %v230 = vadd.f32 %v202, %v229
  %231 = vmatmul.bf16.gmra.mxu0 %v81
  %v232 = vpop.f32.mrf.mxu0
  %v233 = vadd.f32 %v205, %v232
  %v234 = vpop.f32.mrf.mxu0
  %v235 = vadd.f32 %v207, %v234
  %236 = vmatmul.bf16.gmra.mxu0 %v83
  %v237 = vpop.f32.mrf.mxu0
  %v238 = vadd.f32 %v210, %v237
  %v239 = vpop.f32.mrf.mxu0
  %v240 = vadd.f32 %v212, %v239
  %241 = vmatmul.bf16.gmra.mxu0 %v85
  %v242 = vpop.f32.mrf.mxu0
  %v243 = vadd.f32 %v215, %v242
  %v244 = vpop.f32.mrf.mxu0
  %245 = vdwg.mxu0
  %v246 = vmax.f32 %v228, 0.0
  %v247 = vmax.f32 %v230, 0.0
  %v248 = vmax.f32 %v233, 0.0
  %v249 = vmax.f32 %v235, 0.0
  %v250 = vmax.f32 %v238, 0.0
  %v251 = vmax.f32 %v240, 0.0
  %v252 = vmax.f32 %v243, 0.0
  %s253 = scalar_lea.vmem %s0, 56
  %v254 = vld [vmem:[%s253] sm:$0xff]
  %v255 = vld [vmem:[%s253 + $0x8] sm:$0xff]
  %v256 = vld [vmem:[%s253 + $0x10] sm:$0xff]
  %v257 = vld [vmem:[%s253 + $0x18] sm:$0xff]
  %v258 = vld [vmem:[%s253 + $0x20] sm:$0xff]
  %v259 = vld [vmem:[%s253 + $0x28] sm:$0xff]
  %v260 = vld [vmem:[%s253 + $0x30] sm:$0xff]
  %v268 = vunpack.c.l.b16 %v254
  %v269 = vunpack.c.h.b16 %v254
  %v270 = vunpack.c.l.b16 %v255
  %v271 = vunpack.c.h.b16 %v255
  %v272 = vunpack.c.l.b16 %v256
  %v273 = vunpack.c.h.b16 %v256
  %v274 = vunpack.c.l.b16 %v257
  %v275 = vunpack.c.h.b16 %v257
  %v276 = vunpack.c.l.b16 %v258
  %v277 = vunpack.c.h.b16 %v258
  %v278 = vunpack.c.l.b16 %v259
  %v279 = vunpack.c.h.b16 %v259
  %v280 = vunpack.c.l.b16 %v260
  %v281 = vunpack.c.h.b16 %v260
  %v282 = vpack.c.b16 %v270, %v268
  %v283 = vpack.c.b16 %v271, %v269
  %v284 = vpack.c.b16 %v274, %v272
  %v285 = vpack.c.b16 %v275, %v273
  %v286 = vpack.c.b16 %v278, %v276
  %v287 = vpack.c.b16 %v279, %v277
  %v288 = vpack.c.b16 %v280, %v280
  %v289 = vpack.c.b16 %v281, %v281
  %298 = vmatpush.bf16.msra.mxu0 %v165
  %299 = vmatpush.bf16.msra.mxu0 %v164
  %300 = vmatpush.bf16.msra.mxu0 %v163
  %301 = vmatpush.bf16.msra.mxu0 %v162
  %302 = vmatpush.bf16.msra.mxu0 %v161
  %303 = vmatpush.bf16.msra.mxu0 %v160
  %304 = vmatpush.bf16.msra.mxu0 %v159
  %305 = vmatpush.bf16.msra.mxu0 %v158
  %306 = vmatmul.bf16.gmra.mxu0 %v282
  %v307 = vpop.f32.mrf.mxu0
  %v308 = vadd.f32 %v55, %v307
  %v309 = vpop.f32.mrf.mxu0
  %v310 = vadd.f32 %v55, %v309
  %311 = vmatmul.bf16.gmra.mxu0 %v284
  %v312 = vpop.f32.mrf.mxu0
  %v313 = vadd.f32 %v55, %v312
  %v314 = vpop.f32.mrf.mxu0
  %v315 = vadd.f32 %v55, %v314
  %316 = vmatmul.bf16.gmra.mxu0 %v286
  %v317 = vpop.f32.mrf.mxu0
  %v318 = vadd.f32 %v55, %v317
  %v319 = vpop.f32.mrf.mxu0
  %v320 = vadd.f32 %v55, %v319
  %321 = vmatmul.bf16.gmra.mxu0 %v288
  %v322 = vpop.f32.mrf.mxu0
  %v323 = vadd.f32 %v55, %v322
  %v324 = vpop.f32.mrf.mxu0
  %325 = vdwg.mxu0
  %326 = vmatpush.bf16.msra.mxu0 %v173
  %327 = vmatpush.bf16.msra.mxu0 %v172
  %328 = vmatpush.bf16.msra.mxu0 %v171
  %329 = vmatpush.bf16.msra.mxu0 %v170
  %330 = vmatpush.bf16.msra.mxu0 %v169
  %331 = vmatpush.bf16.msra.mxu0 %v168
  %332 = vmatpush.bf16.msra.mxu0 %v167
  %333 = vmatpush.bf16.msra.mxu0 %v166
  %334 = vmatmul.bf16.gmra.mxu0 %v283
  %v335 = vpop.f32.mrf.mxu0
  %v336 = vadd.f32 %v308, %v335
  %v337 = vpop.f32.mrf.mxu0
  %v338 = vadd.f32 %v310, %v337
  %339 = vmatmul.bf16.gmra.mxu0 %v285
  %v340 = vpop.f32.mrf.mxu0
  %v341 = vadd.f32 %v313, %v340
  %v342 = vpop.f32.mrf.mxu0
  %v343 = vadd.f32 %v315, %v342
  %344 = vmatmul.bf16.gmra.mxu0 %v287
  %v345 = vpop.f32.mrf.mxu0
  %v346 = vadd.f32 %v318, %v345
  %v347 = vpop.f32.mrf.mxu0
  %v348 = vadd.f32 %v320, %v347
  %349 = vmatmul.bf16.gmra.mxu0 %v289
  %v350 = vpop.f32.mrf.mxu0
  %v351 = vadd.f32 %v323, %v350
  %v352 = vpop.f32.mrf.mxu0
  %353 = vdwg.mxu0
  %v354 = vmax.f32 %v336, 0.0
  %v355 = vmax.f32 %v338, 0.0
  %v356 = vmax.f32 %v341, 0.0
  %v357 = vmax.f32 %v343, 0.0
  %v358 = vmax.f32 %v346, 0.0
  %v359 = vmax.f32 %v348, 0.0
  %v360 = vmax.f32 %v351, 0.0
  %v361 = vmax.f32 %v246, %v354
  %v362 = vmax.f32 %v247, %v355
  %v363 = vmax.f32 %v248, %v356
  %v364 = vmax.f32 %v249, %v357
  %v365 = vmax.f32 %v250, %v358
  %v366 = vmax.f32 %v251, %v359
  %v367 = vmax.f32 %v252, %v360
  %s368 = scalar_lea.vmem %s0, 112
  %v369 = vld [vmem:[%s368] sm:$0xff]
  %v370 = vld [vmem:[%s368 + $0x8] sm:$0xff]
  %v371 = vld [vmem:[%s368 + $0x10] sm:$0xff]
  %v372 = vld [vmem:[%s368 + $0x18] sm:$0xff]
  %v373 = vld [vmem:[%s368 + $0x20] sm:$0xff]
  %v374 = vld [vmem:[%s368 + $0x28] sm:$0xff]
  %v375 = vld [vmem:[%s368 + $0x30] sm:$0xff]
  %v383 = vunpack.c.l.b16 %v369
  %v384 = vunpack.c.h.b16 %v369
  %v385 = vunpack.c.l.b16 %v370
  %v386 = vunpack.c.h.b16 %v370
  %v387 = vunpack.c.l.b16 %v371
  %v388 = vunpack.c.h.b16 %v371
  %v389 = vunpack.c.l.b16 %v372
  %v390 = vunpack.c.h.b16 %v372
  %v391 = vunpack.c.l.b16 %v373
  %v392 = vunpack.c.h.b16 %v373
  %v393 = vunpack.c.l.b16 %v374
  %v394 = vunpack.c.h.b16 %v374
  %v395 = vunpack.c.l.b16 %v375
  %v396 = vunpack.c.h.b16 %v375
  %v397 = vpack.c.b16 %v385, %v383
  %v398 = vpack.c.b16 %v386, %v384
  %v399 = vpack.c.b16 %v389, %v387
  %v400 = vpack.c.b16 %v390, %v388
  %v401 = vpack.c.b16 %v393, %v391
  %v402 = vpack.c.b16 %v394, %v392
  %v403 = vpack.c.b16 %v395, %v395
  %v404 = vpack.c.b16 %v396, %v396
  %413 = vmatpush.bf16.msra.mxu0 %v165
  %414 = vmatpush.bf16.msra.mxu0 %v164
  %415 = vmatpush.bf16.msra.mxu0 %v163
  %416 = vmatpush.bf16.msra.mxu0 %v162
  %417 = vmatpush.bf16.msra.mxu0 %v161
  %418 = vmatpush.bf16.msra.mxu0 %v160
  %419 = vmatpush.bf16.msra.mxu0 %v159
  %420 = vmatpush.bf16.msra.mxu0 %v158
  %421 = vmatmul.bf16.gmra.mxu0 %v397
  %v422 = vpop.f32.mrf.mxu0
  %v423 = vadd.f32 %v55, %v422
  %v424 = vpop.f32.mrf.mxu0
  %v425 = vadd.f32 %v55, %v424
  %426 = vmatmul.bf16.gmra.mxu0 %v399
  %v427 = vpop.f32.mrf.mxu0
  %v428 = vadd.f32 %v55, %v427
  %v429 = vpop.f32.mrf.mxu0
  %v430 = vadd.f32 %v55, %v429
  %431 = vmatmul.bf16.gmra.mxu0 %v401
  %v432 = vpop.f32.mrf.mxu0
  %v433 = vadd.f32 %v55, %v432
  %v434 = vpop.f32.mrf.mxu0
  %v435 = vadd.f32 %v55, %v434
  %436 = vmatmul.bf16.gmra.mxu0 %v403
  %v437 = vpop.f32.mrf.mxu0
  %v438 = vadd.f32 %v55, %v437
  %v439 = vpop.f32.mrf.mxu0
  %440 = vdwg.mxu0
  %441 = vmatpush.bf16.msra.mxu0 %v173
  %442 = vmatpush.bf16.msra.mxu0 %v172
  %443 = vmatpush.bf16.msra.mxu0 %v171
  %444 = vmatpush.bf16.msra.mxu0 %v170
  %445 = vmatpush.bf16.msra.mxu0 %v169
  %446 = vmatpush.bf16.msra.mxu0 %v168
  %447 = vmatpush.bf16.msra.mxu0 %v167
  %448 = vmatpush.bf16.msra.mxu0 %v166
  %449 = vmatmul.bf16.gmra.mxu0 %v398
  %v450 = vpop.f32.mrf.mxu0
  %v451 = vadd.f32 %v423, %v450
  %v452 = vpop.f32.mrf.mxu0
  %v453 = vadd.f32 %v425, %v452
  %454 = vmatmul.bf16.gmra.mxu0 %v400
  %v455 = vpop.f32.mrf.mxu0
  %v456 = vadd.f32 %v428, %v455
  %v457 = vpop.f32.mrf.mxu0
  %v458 = vadd.f32 %v430, %v457
  %459 = vmatmul.bf16.gmra.mxu0 %v402
  %v460 = vpop.f32.mrf.mxu0
  %v461 = vadd.f32 %v433, %v460
  %v462 = vpop.f32.mrf.mxu0
  %v463 = vadd.f32 %v435, %v462
  %464 = vmatmul.bf16.gmra.mxu0 %v404
  %v465 = vpop.f32.mrf.mxu0
  %v466 = vadd.f32 %v438, %v465
  %v467 = vpop.f32.mrf.mxu0
  %468 = vdwg.mxu0
  %v469 = vmax.f32 %v451, 0.0
  %v470 = vmax.f32 %v453, 0.0
  %v471 = vmax.f32 %v456, 0.0
  %v472 = vmax.f32 %v458, 0.0
  %v473 = vmax.f32 %v461, 0.0
  %v474 = vmax.f32 %v463, 0.0
  %v475 = vmax.f32 %v466, 0.0
  %s476 = scalar_lea.vmem %s0, 168
  %v477 = vld [vmem:[%s476] sm:$0xff]
  %v478 = vld [vmem:[%s476 + $0x8] sm:$0xff]
  %v479 = vld [vmem:[%s476 + $0x10] sm:$0xff]
  %v480 = vld [vmem:[%s476 + $0x18] sm:$0xff]
  %v481 = vld [vmem:[%s476 + $0x20] sm:$0xff]
  %v482 = vld [vmem:[%s476 + $0x28] sm:$0xff]
  %v483 = vld [vmem:[%s476 + $0x30] sm:$0xff]
  %v491 = vunpack.c.l.b16 %v477
  %v492 = vunpack.c.h.b16 %v477
  %v493 = vunpack.c.l.b16 %v478
  %v494 = vunpack.c.h.b16 %v478
  %v495 = vunpack.c.l.b16 %v479
  %v496 = vunpack.c.h.b16 %v479
  %v497 = vunpack.c.l.b16 %v480
  %v498 = vunpack.c.h.b16 %v480
  %v499 = vunpack.c.l.b16 %v481
  %v500 = vunpack.c.h.b16 %v481
  %v501 = vunpack.c.l.b16 %v482
  %v502 = vunpack.c.h.b16 %v482
  %v503 = vunpack.c.l.b16 %v483
  %v504 = vunpack.c.h.b16 %v483
  %v505 = vpack.c.b16 %v493, %v491
  %v506 = vpack.c.b16 %v494, %v492
  %v507 = vpack.c.b16 %v497, %v495
  %v508 = vpack.c.b16 %v498, %v496
  %v509 = vpack.c.b16 %v501, %v499
  %v510 = vpack.c.b16 %v502, %v500
  %v511 = vpack.c.b16 %v503, %v503
  %v512 = vpack.c.b16 %v504, %v504
  %521 = vmatpush.bf16.msra.mxu0 %v165
  %522 = vmatpush.bf16.msra.mxu0 %v164
  %523 = vmatpush.bf16.msra.mxu0 %v163
  %524 = vmatpush.bf16.msra.mxu0 %v162
  %525 = vmatpush.bf16.msra.mxu0 %v161
  %526 = vmatpush.bf16.msra.mxu0 %v160
  %527 = vmatpush.bf16.msra.mxu0 %v159
  %528 = vmatpush.bf16.msra.mxu0 %v158
  %529 = vmatmul.bf16.gmra.mxu0 %v505
  %v530 = vpop.f32.mrf.mxu0
  %v531 = vadd.f32 %v55, %v530
  %v532 = vpop.f32.mrf.mxu0
  %v533 = vadd.f32 %v55, %v532
  %534 = vmatmul.bf16.gmra.mxu0 %v507
  %v535 = vpop.f32.mrf.mxu0
  %v536 = vadd.f32 %v55, %v535
  %v537 = vpop.f32.mrf.mxu0
  %v538 = vadd.f32 %v55, %v537
  %539 = vmatmul.bf16.gmra.mxu0 %v509
  %v540 = vpop.f32.mrf.mxu0
  %v541 = vadd.f32 %v55, %v540
  %v542 = vpop.f32.mrf.mxu0
  %v543 = vadd.f32 %v55, %v542
  %544 = vmatmul.bf16.gmra.mxu0 %v511
  %v545 = vpop.f32.mrf.mxu0
  %v546 = vadd.f32 %v55, %v545
  %v547 = vpop.f32.mrf.mxu0
  %548 = vdwg.mxu0
  %549 = vmatpush.bf16.msra.mxu0 %v173
  %550 = vmatpush.bf16.msra.mxu0 %v172
  %551 = vmatpush.bf16.msra.mxu0 %v171
  %552 = vmatpush.bf16.msra.mxu0 %v170
  %553 = vmatpush.bf16.msra.mxu0 %v169
  %554 = vmatpush.bf16.msra.mxu0 %v168
  %555 = vmatpush.bf16.msra.mxu0 %v167
  %556 = vmatpush.bf16.msra.mxu0 %v166
  %557 = vmatmul.bf16.gmra.mxu0 %v506
  %v558 = vpop.f32.mrf.mxu0
  %v559 = vadd.f32 %v531, %v558
  %v560 = vpop.f32.mrf.mxu0
  %v561 = vadd.f32 %v533, %v560
  %562 = vmatmul.bf16.gmra.mxu0 %v508
  %v563 = vpop.f32.mrf.mxu0
  %v564 = vadd.f32 %v536, %v563
  %v565 = vpop.f32.mrf.mxu0
  %v566 = vadd.f32 %v538, %v565
  %567 = vmatmul.bf16.gmra.mxu0 %v510
  %v568 = vpop.f32.mrf.mxu0
  %v569 = vadd.f32 %v541, %v568
  %v570 = vpop.f32.mrf.mxu0
  %v571 = vadd.f32 %v543, %v570
  %572 = vmatmul.bf16.gmra.mxu0 %v512
  %v573 = vpop.f32.mrf.mxu0
  %v574 = vadd.f32 %v546, %v573
  %v575 = vpop.f32.mrf.mxu0
  %576 = vdwg.mxu0
  %v577 = vmax.f32 %v559, 0.0
  %v578 = vmax.f32 %v561, 0.0
  %v579 = vmax.f32 %v564, 0.0
  %v580 = vmax.f32 %v566, 0.0
  %v581 = vmax.f32 %v569, 0.0
  %v582 = vmax.f32 %v571, 0.0
  %v583 = vmax.f32 %v574, 0.0
  %v584 = vmax.f32 %v469, %v577
  %v585 = vmax.f32 %v470, %v578
  %v586 = vmax.f32 %v471, %v579
  %v587 = vmax.f32 %v472, %v580
  %v588 = vmax.f32 %v473, %v581
  %v589 = vmax.f32 %v474, %v582
  %v590 = vmax.f32 %v475, %v583
  %v591 = vmax.f32 %v361, %v584
  %v592 = vmax.f32 %v362, %v585
  %v593 = vmax.f32 %v363, %v586
  %v594 = vmax.f32 %v364, %v587
  %v595 = vmax.f32 %v365, %v588
  %v596 = vmax.f32 %v366, %v589
  %v597 = vmax.f32 %v367, %v590
  %v598 = vpack.c.bf16 %v591, %v591
  %v599 = vpack.c.bf16 %v592, %v592
  %v600 = vpack.c.bf16 %v593, %v593
  %v601 = vpack.c.bf16 %v594, %v594
  %v602 = vpack.c.bf16 %v595, %v595
  %v603 = vpack.c.bf16 %v596, %v596
  %v604 = vpack.c.bf16 %v597, %v597
  %605 = vst [vmem:[%s3] sm:$0xf] %v598
  %606 = vst [vmem:[%s3 + $0x4] sm:$0xf] %v599
  %607 = vst [vmem:[%s3 + $0x8] sm:$0xf] %v600
  %608 = vst [vmem:[%s3 + $0xc] sm:$0xf] %v601
  %609 = vst [vmem:[%s3 + $0x10] sm:$0xf] %v602
  %610 = vst [vmem:[%s3 + $0x14] sm:$0xf] %v603
  %611 = vst [vmem:[%s3 + $0x18] sm:$0xf] %v604
  // Predicated region
  $region14: #{imagenet_forward.4} parent=0 // pred_check
    _
  $region15: #{imagenet_forward.4} parent=0 // pred_check_branch
    %613 = sbr.rel (0) target = $region17
  $region16: #{imagenet_forward.4} parent=0 // pred_region
    _
  $region17: #{imagenet_forward.4} parent=0 // pred_fallthru
    _
  // Predicated region
  $region18: #{imagenet_forward.4} parent=0 // pred_check
    _
  $region19: #{imagenet_forward.4} parent=0 // pred_check_branch
    %615 = sbr.rel (0) target = $region21
  $region20: #{imagenet_forward.4} parent=0 // pred_region
    _
  $region21: #{imagenet_forward.4} parent=0 // pred_fallthru
    _

// kernel: imagenet_forward.5
$region0: #{imagenet_forward.5}
  #allocation0 [shape = 'u32[]', space=smem, size = 0x4, offset = 0x4, fixed_abs, tag = 'smem constant byte address 0x4 - core index']
  #allocation1 [shape = 'u32[72,128]{1,0:T(1,128)}', space=vmem, size = 0x9000, scoped, tag = 'internal scratch']
  %s0 = inlined_call_operand.vmem [shape: bf16[8,3200], index: 0, kind: input, shape index: {}]
  %s1 = inlined_call_operand.vmem [shape: bf16[3200,128], index: 1, kind: input, shape index: {}]
  %s2 = inlined_call_operand.vmem [shape: f32[1,128], index: 2, kind: input, shape index: {}]
  %s3 = inlined_call_operand.vmem [shape: bf16[128,128], index: 3, kind: input, shape index: {}]
  %s4 = inlined_call_operand.vmem [shape: f32[1,128], index: 4, kind: input, shape index: {}]
  %s5 = inlined_call_operand.vmem [shape: bf16[128,128], index: 5, kind: input, shape index: {}]
  %s6 = inlined_call_operand.vmem [shape: f32[1,128], index: 6, kind: input, shape index: {}]
  %s7 = inlined_call_operand.vmem [shape: f32[8,128], index: 7, kind: output, shape index: {}]
  %s8 = sld [smem:[#allocation0]]
  $region38: #{imagenet_forward.5} parent=0
    _
  %s10 = ssub.s32 1, %s8
  %s11 = scalar_select 0, %s10, %s8
  // Predicated region
  $region2: #{imagenet_forward.5} parent=0 // pred_check
    _
  $region3: #{imagenet_forward.5} parent=0 // pred_check_branch
    %13 = sbr.rel (0) target = $region5
  $region4: #{imagenet_forward.5} parent=0 // pred_region
    _
  $region5: #{imagenet_forward.5} parent=0 // pred_fallthru
    _
  // Predicated region
  $region6: #{imagenet_forward.5} parent=0 // pred_check
    _
  $region7: #{imagenet_forward.5} parent=0 // pred_check_branch
    %15 = sbr.rel (0) target = $region9
  $region8: #{imagenet_forward.5} parent=0 // pred_region
    _
  $region9: #{imagenet_forward.5} parent=0 // pred_fallthru
    _
  // Predicated region
  $region10: #{imagenet_forward.5} parent=0 // pred_check
    _
  $region11: #{imagenet_forward.5} parent=0 // pred_check_branch
    %17 = sbr.rel (0) target = $region13
  $region12: #{imagenet_forward.5} parent=0 // pred_region
    _
  $region13: #{imagenet_forward.5} parent=0 // pred_fallthru
    _
  // Predicated region
  $region14: #{imagenet_forward.5} parent=0 // pred_check
    _
  $region15: #{imagenet_forward.5} parent=0 // pred_check_branch
    %19 = sbr.rel (0) target = $region17
  $region16: #{imagenet_forward.5} parent=0 // pred_region
    _
  $region17: #{imagenet_forward.5} parent=0 // pred_fallthru
    _
  // Predicated region
  $region18: #{imagenet_forward.5} parent=0 // pred_check
    _
  $region19: #{imagenet_forward.5} parent=0 // pred_check_branch
    %21 = sbr.rel (0) target = $region21
  $region20: #{imagenet_forward.5} parent=0 // pred_region
    _
  $region21: #{imagenet_forward.5} parent=0 // pred_fallthru
    _
  // Predicated region
  $region22: #{imagenet_forward.5} parent=0 // pred_check
    _
  $region23: #{imagenet_forward.5} parent=0 // pred_check_branch
    %23 = sbr.rel (0) target = $region25
  $region24: #{imagenet_forward.5} parent=0 // pred_region
    _
  $region25: #{imagenet_forward.5} parent=0 // pred_fallthru
    _
  // Predicated region
  $region26: #{imagenet_forward.5} parent=0 // pred_check
    _
  $region27: #{imagenet_forward.5} parent=0 // pred_check_branch
    %25 = sbr.rel (0) target = $region29
  $region28: #{imagenet_forward.5} parent=0 // pred_region
    _
  $region29: #{imagenet_forward.5} parent=0 // pred_fallthru
    _
  %v26 = vld [vmem:[%s0] sm:$0xff]
  %v27 = vld [vmem:[%s0 + $0x8] sm:$0xff]
  %v28 = vld [vmem:[%s0 + $0x10] sm:$0xff]
  %v29 = vld [vmem:[%s0 + $0x18] sm:$0xff]
  %v30 = vld [vmem:[%s0 + $0x20] sm:$0xff]
  %v31 = vld [vmem:[%s0 + $0x28] sm:$0xff]
  %v32 = vld [vmem:[%s0 + $0x30] sm:$0xff]
  %v33 = vld [vmem:[%s0 + $0x38] sm:$0xff]
  %v34 = vld [vmem:[%s0 + $0x40] sm:$0xff]
  %v35 = vld [vmem:[%s0 + $0x48] sm:$0xff]
  %v36 = vld [vmem:[%s0 + $0x50] sm:$0xff]
  %v37 = vld [vmem:[%s0 + $0x58] sm:$0xff]
  %v38 = vld [vmem:[%s0 + $0x60] sm:$0xf]
  %v39 = vld [vmem:[%s1] sm:$0xf]
  %v40 = vld [vmem:[%s1 + $0x4] sm:$0xf]
  %v41 = vld [vmem:[%s1 + $0x8] sm:$0xf]
  %v42 = vld [vmem:[%s1 + $0xc] sm:$0xf]
  %v43 = vld [vmem:[%s1 + $0x10] sm:$0xf]
  %v44 = vld [vmem:[%s1 + $0x14] sm:$0xf]
  %v45 = vld [vmem:[%s1 + $0x18] sm:$0xf]
  %v46 = vld [vmem:[%s1 + $0x1c] sm:$0xf]
  %v47 = vld [vmem:[%s1 + $0x20] sm:$0xf]
  %v48 = vld [vmem:[%s1 + $0x24] sm:$0xf]
  %v49 = vld [vmem:[%s1 + $0x28] sm:$0xf]
  %v50 = vld [vmem:[%s1 + $0x2c] sm:$0xf]
  %v51 = vld [vmem:[%s1 + $0x30] sm:$0xf]
  %v52 = vld [vmem:[%s1 + $0x34] sm:$0xf]
  %v53 = vld [vmem:[%s1 + $0x38] sm:$0xf]
  %v54 = vld [vmem:[%s1 + $0x3c] sm:$0xf]
  %v55 = vld [vmem:[%s1 + $0x40] sm:$0xf]
  %v56 = vld [vmem:[%s1 + $0x44] sm:$0xf]
  %v57 = vld [vmem:[%s1 + $0x48] sm:$0xf]
  %v58 = vld [vmem:[%s1 + $0x4c] sm:$0xf]
  %v59 = vld [vmem:[%s1 + $0x50] sm:$0xf]
  %v60 = vld [vmem:[%s1 + $0x54] sm:$0xf]
  %v61 = vld [vmem:[%s1 + $0x58] sm:$0xf]
  %v62 = vld [vmem:[%s1 + $0x5c] sm:$0xf]
  %v63 = vld [vmem:[%s1 + $0x60] sm:$0xf]
  %v64 = vld [vmem:[%s1 + $0x64] sm:$0xf]
  %v65 = vld [vmem:[%s1 + $0x68] sm:$0xf]
  %v66 = vld [vmem:[%s1 + $0x6c] sm:$0xf]
  %v67 = vld [vmem:[%s1 + $0x70] sm:$0xf]
  %v68 = vld [vmem:[%s1 + $0x74] sm:$0xf]
  %v69 = vld [vmem:[%s1 + $0x78] sm:$0xf]
  %v70 = vld [vmem:[%s1 + $0x7c] sm:$0xf]
  %v71 = vld [vmem:[%s1 + $0x80] sm:$0xf]
  %v72 = vld [vmem:[%s1 + $0x84] sm:$0xf]
  %v73 = vld [vmem:[%s1 + $0x88] sm:$0xf]
  %v74 = vld [vmem:[%s1 + $0x8c] sm:$0xf]
  %v75 = vld [vmem:[%s1 + $0x90] sm:$0xf]
  %v76 = vld [vmem:[%s1 + $0x94] sm:$0xf]
  %v77 = vld [vmem:[%s1 + $0x98] sm:$0xf]
  %v78 = vld [vmem:[%s1 + $0x9c] sm:$0xf]
  %v79 = vld [vmem:[%s1 + $0xa0] sm:$0xf]
  %v80 = vld [vmem:[%s1 + $0xa4] sm:$0xf]
  %v81 = vld [vmem:[%s1 + $0xa8] sm:$0xf]
  %v82 = vld [vmem:[%s1 + $0xac] sm:$0xf]
  %v83 = vld [vmem:[%s1 + $0xb0] sm:$0xf]
  %v84 = vld [vmem:[%s1 + $0xb4] sm:$0xf]
  %v85 = vld [vmem:[%s1 + $0xb8] sm:$0xf]
  %v86 = vld [vmem:[%s1 + $0xbc] sm:$0xf]
  %v87 = vld [vmem:[%s1 + $0xc0] sm:$0xf]
  %v88 = vld [vmem:[%s1 + $0xc4] sm:$0xf]
  %v89 = vld [vmem:[%s1 + $0xc8] sm:$0xf]
  %v90 = vld [vmem:[%s1 + $0xcc] sm:$0xf]
  %v91 = vld [vmem:[%s1 + $0xd0] sm:$0xf]
  %v92 = vld [vmem:[%s1 + $0xd4] sm:$0xf]
  %v93 = vld [vmem:[%s1 + $0xd8] sm:$0xf]
  %v94 = vld [vmem:[%s1 + $0xdc] sm:$0xf]
  %v95 = vld [vmem:[%s1 + $0xe0] sm:$0xf]
  %v96 = vld [vmem:[%s1 + $0xe4] sm:$0xf]
  %v97 = vld [vmem:[%s1 + $0xe8] sm:$0xf]
  %v98 = vld [vmem:[%s1 + $0xec] sm:$0xf]
  %v99 = vld [vmem:[%s1 + $0xf0] sm:$0xf]
  %v100 = vld [vmem:[%s1 + $0xf4] sm:$0xf]
  %v101 = vld [vmem:[%s1 + $0xf8] sm:$0xf]
  %v102 = vld [vmem:[%s1 + $0xfc] sm:$0xf]
  %v103 = vld [vmem:[%s1 + $0x100] sm:$0xf]
  %v104 = vld [vmem:[%s1 + $0x104] sm:$0xf]
  %v105 = vld [vmem:[%s1 + $0x108] sm:$0xf]
  %v106 = vld [vmem:[%s1 + $0x10c] sm:$0xf]
  %v107 = vld [vmem:[%s1 + $0x110] sm:$0xf]
  %v108 = vld [vmem:[%s1 + $0x114] sm:$0xf]
  %v109 = vld [vmem:[%s1 + $0x118] sm:$0xf]
  %v110 = vld [vmem:[%s1 + $0x11c] sm:$0xf]
  %v111 = vld [vmem:[%s1 + $0x120] sm:$0xf]
  %v112 = vld [vmem:[%s1 + $0x124] sm:$0xf]
  %v113 = vld [vmem:[%s1 + $0x128] sm:$0xf]
  %v114 = vld [vmem:[%s1 + $0x12c] sm:$0xf]
  %v115 = vld [vmem:[%s1 + $0x130] sm:$0xf]
  %v116 = vld [vmem:[%s1 + $0x134] sm:$0xf]
  %v117 = vld [vmem:[%s1 + $0x138] sm:$0xf]
  %v118 = vld [vmem:[%s1 + $0x13c] sm:$0xf]
  %v119 = vld [vmem:[%s1 + $0x140] sm:$0xf]
  %v120 = vld [vmem:[%s1 + $0x144] sm:$0xf]
  %v121 = vld [vmem:[%s1 + $0x148] sm:$0xf]
  %v122 = vld [vmem:[%s1 + $0x14c] sm:$0xf]
  %v123 = vld [vmem:[%s1 + $0x150] sm:$0xf]
  %v124 = vld [vmem:[%s1 + $0x154] sm:$0xf]
  %v125 = vld [vmem:[%s1 + $0x158] sm:$0xf]
  %v126 = vld [vmem:[%s1 + $0x15c] sm:$0xf]
  %v127 = vld [vmem:[%s1 + $0x160] sm:$0xf]
  %v128 = vld [vmem:[%s1 + $0x164] sm:$0xf]
  %v129 = vld [vmem:[%s1 + $0x168] sm:$0xf]
  %v130 = vld [vmem:[%s1 + $0x16c] sm:$0xf]
  %v131 = vld [vmem:[%s1 + $0x170] sm:$0xf]
  %v132 = vld [vmem:[%s1 + $0x174] sm:$0xf]
  %v133 = vld [vmem:[%s1 + $0x178] sm:$0xf]
  %v134 = vld [vmem:[%s1 + $0x17c] sm:$0xf]
  %v135 = vld [vmem:[%s1 + $0x180] sm:$0xf]
  %v136 = vld [vmem:[%s1 + $0x184] sm:$0xf]
  %v137 = vld [vmem:[%s1 + $0x188] sm:$0xf]
  %v138 = vld [vmem:[%s1 + $0x18c] sm:$0xf]
  %v139 = vld [vmem:[%s1 + $0x190] sm:$0xf]
  %v140 = vld [vmem:[%s1 + $0x194] sm:$0xf]
  %v141 = vld [vmem:[%s1 + $0x198] sm:$0xf]
  %v142 = vld [vmem:[%s1 + $0x19c] sm:$0xf]
  %v143 = vld [vmem:[%s1 + $0x1a0] sm:$0xf]
  %v144 = vld [vmem:[%s1 + $0x1a4] sm:$0xf]
  %v145 = vld [vmem:[%s1 + $0x1a8] sm:$0xf]
  %v146 = vld [vmem:[%s1 + $0x1ac] sm:$0xf]
  %v147 = vld [vmem:[%s1 + $0x1b0] sm:$0xf]
  %v148 = vld [vmem:[%s1 + $0x1b4] sm:$0xf]
  %v149 = vld [vmem:[%s1 + $0x1b8] sm:$0xf]
  %v150 = vld [vmem:[%s1 + $0x1bc] sm:$0xf]
  %v151 = vld [vmem:[%s1 + $0x1c0] sm:$0xf]
  %v152 = vld [vmem:[%s1 + $0x1c4] sm:$0xf]
  %v153 = vld [vmem:[%s1 + $0x1c8] sm:$0xf]
  %v154 = vld [vmem:[%s1 + $0x1cc] sm:$0xf]
  %v155 = vld [vmem:[%s1 + $0x1d0] sm:$0xf]
  %v156 = vld [vmem:[%s1 + $0x1d4] sm:$0xf]
  %v157 = vld [vmem:[%s1 + $0x1d8] sm:$0xf]
  %v158 = vld [vmem:[%s1 + $0x1dc] sm:$0xf]
  %v159 = vld [vmem:[%s1 + $0x1e0] sm:$0xf]
  %v160 = vld [vmem:[%s1 + $0x1e4] sm:$0xf]
  %v161 = vld [vmem:[%s1 + $0x1e8] sm:$0xf]
  %v162 = vld [vmem:[%s1 + $0x1ec] sm:$0xf]
  %v163 = vld [vmem:[%s1 + $0x1f0] sm:$0xf]
  %v164 = vld [vmem:[%s1 + $0x1f4] sm:$0xf]
  %v165 = vld [vmem:[%s1 + $0x1f8] sm:$0xf]
  %v166 = vld [vmem:[%s1 + $0x1fc] sm:$0xf]
  %v167 = vld [vmem:[%s1 + $0x200] sm:$0xf]
  %v168 = vld [vmem:[%s1 + $0x204] sm:$0xf]
  %v169 = vld [vmem:[%s1 + $0x208] sm:$0xf]
  %v170 = vld [vmem:[%s1 + $0x20c] sm:$0xf]
  %v171 = vld [vmem:[%s1 + $0x210] sm:$0xf]
  %v172 = vld [vmem:[%s1 + $0x214] sm:$0xf]
  %v173 = vld [vmem:[%s1 + $0x218] sm:$0xf]
  %v174 = vld [vmem:[%s1 + $0x21c] sm:$0xf]
  %v175 = vld [vmem:[%s1 + $0x220] sm:$0xf]
  %v176 = vld [vmem:[%s1 + $0x224] sm:$0xf]
  %v177 = vld [vmem:[%s1 + $0x228] sm:$0xf]
  %v178 = vld [vmem:[%s1 + $0x22c] sm:$0xf]
  %v179 = vld [vmem:[%s1 + $0x230] sm:$0xf]
  %v180 = vld [vmem:[%s1 + $0x234] sm:$0xf]
  %v181 = vld [vmem:[%s1 + $0x238] sm:$0xf]
  %v182 = vld [vmem:[%s1 + $0x23c] sm:$0xf]
  %v183 = vld [vmem:[%s1 + $0x240] sm:$0xf]
  %v184 = vld [vmem:[%s1 + $0x244] sm:$0xf]
  %v185 = vld [vmem:[%s1 + $0x248] sm:$0xf]
  %v186 = vld [vmem:[%s1 + $0x24c] sm:$0xf]
  %v187 = vld [vmem:[%s1 + $0x250] sm:$0xf]
  %v188 = vld [vmem:[%s1 + $0x254] sm:$0xf]
  %v189 = vld [vmem:[%s1 + $0x258] sm:$0xf]
  %v190 = vld [vmem:[%s1 + $0x25c] sm:$0xf]
  %v191 = vld [vmem:[%s1 + $0x260] sm:$0xf]
  %v192 = vld [vmem:[%s1 + $0x264] sm:$0xf]
  %v193 = vld [vmem:[%s1 + $0x268] sm:$0xf]
  %v194 = vld [vmem:[%s1 + $0x26c] sm:$0xf]
  %v195 = vld [vmem:[%s1 + $0x270] sm:$0xf]
  %v196 = vld [vmem:[%s1 + $0x274] sm:$0xf]
  %v197 = vld [vmem:[%s1 + $0x278] sm:$0xf]
  %v198 = vld [vmem:[%s1 + $0x27c] sm:$0xf]
  %v199 = vld [vmem:[%s1 + $0x280] sm:$0xf]
  %v200 = vld [vmem:[%s1 + $0x284] sm:$0xf]
  %v201 = vld [vmem:[%s1 + $0x288] sm:$0xf]
  %v202 = vld [vmem:[%s1 + $0x28c] sm:$0xf]
  %v203 = vld [vmem:[%s1 + $0x290] sm:$0xf]
  %v204 = vld [vmem:[%s1 + $0x294] sm:$0xf]
  %v205 = vld [vmem:[%s1 + $0x298] sm:$0xf]
  %v206 = vld [vmem:[%s1 + $0x29c] sm:$0xf]
  %v207 = vld [vmem:[%s1 + $0x2a0] sm:$0xf]
  %v208 = vld [vmem:[%s1 + $0x2a4] sm:$0xf]
  %v209 = vld [vmem:[%s1 + $0x2a8] sm:$0xf]
  %v210 = vld [vmem:[%s1 + $0x2ac] sm:$0xf]
  %v211 = vld [vmem:[%s1 + $0x2b0] sm:$0xf]
  %v212 = vld [vmem:[%s1 + $0x2b4] sm:$0xf]
  %v213 = vld [vmem:[%s1 + $0x2b8] sm:$0xf]
  %v214 = vld [vmem:[%s1 + $0x2bc] sm:$0xf]
  %v215 = vld [vmem:[%s1 + $0x2c0] sm:$0xf]
  %v216 = vld [vmem:[%s1 + $0x2c4] sm:$0xf]
  %v217 = vld [vmem:[%s1 + $0x2c8] sm:$0xf]
  %v218 = vld [vmem:[%s1 + $0x2cc] sm:$0xf]
  %v219 = vld [vmem:[%s1 + $0x2d0] sm:$0xf]
  %v220 = vld [vmem:[%s1 + $0x2d4] sm:$0xf]
  %v221 = vld [vmem:[%s1 + $0x2d8] sm:$0xf]
  %v222 = vld [vmem:[%s1 + $0x2dc] sm:$0xf]
  %v223 = vld [vmem:[%s1 + $0x2e0] sm:$0xf]
  %v224 = vld [vmem:[%s1 + $0x2e4] sm:$0xf]
  %v225 = vld [vmem:[%s1 + $0x2e8] sm:$0xf]
  %v226 = vld [vmem:[%s1 + $0x2ec] sm:$0xf]
  %v227 = vld [vmem:[%s1 + $0x2f0] sm:$0xf]
  %v228 = vld [vmem:[%s1 + $0x2f4] sm:$0xf]
  %v229 = vld [vmem:[%s1 + $0x2f8] sm:$0xf]
  %v230 = vld [vmem:[%s1 + $0x2fc] sm:$0xf]
  %v231 = vld [vmem:[%s1 + $0x300] sm:$0xf]
  %v232 = vld [vmem:[%s1 + $0x304] sm:$0xf]
  %v233 = vld [vmem:[%s1 + $0x308] sm:$0xf]
  %v234 = vld [vmem:[%s1 + $0x30c] sm:$0xf]
  %v235 = vld [vmem:[%s1 + $0x310] sm:$0xf]
  %v236 = vld [vmem:[%s1 + $0x314] sm:$0xf]
  %v237 = vld [vmem:[%s1 + $0x318] sm:$0xf]
  %v238 = vld [vmem:[%s1 + $0x31c] sm:$0xf]
  %v239 = vld [vmem:[%s1 + $0x320] sm:$0xf]
  %v240 = vld [vmem:[%s1 + $0x324] sm:$0xf]
  %v241 = vld [vmem:[%s1 + $0x328] sm:$0xf]
  %v242 = vld [vmem:[%s1 + $0x32c] sm:$0xf]
  %v243 = vld [vmem:[%s1 + $0x330] sm:$0xf]
  %v244 = vld [vmem:[%s1 + $0x334] sm:$0xf]
  %v245 = vld [vmem:[%s1 + $0x338] sm:$0xf]
  %v246 = vld [vmem:[%s1 + $0x33c] sm:$0xf]
  %v247 = vld [vmem:[%s1 + $0x340] sm:$0xf]
  %v248 = vld [vmem:[%s1 + $0x344] sm:$0xf]
  %v249 = vld [vmem:[%s1 + $0x348] sm:$0xf]
  %v250 = vld [vmem:[%s1 + $0x34c] sm:$0xf]
  %v251 = vld [vmem:[%s1 + $0x350] sm:$0xf]
  %v252 = vld [vmem:[%s1 + $0x354] sm:$0xf]
  %v253 = vld [vmem:[%s1 + $0x358] sm:$0xf]
  %v254 = vld [vmem:[%s1 + $0x35c] sm:$0xf]
  %v255 = vld [vmem:[%s1 + $0x360] sm:$0xf]
  %v256 = vld [vmem:[%s1 + $0x364] sm:$0xf]
  %v257 = vld [vmem:[%s1 + $0x368] sm:$0xf]
  %v258 = vld [vmem:[%s1 + $0x36c] sm:$0xf]
  %v259 = vld [vmem:[%s1 + $0x370] sm:$0xf]
  %v260 = vld [vmem:[%s1 + $0x374] sm:$0xf]
  %v261 = vld [vmem:[%s1 + $0x378] sm:$0xf]
  %v262 = vld [vmem:[%s1 + $0x37c] sm:$0xf]
  %v263 = vld [vmem:[%s1 + $0x380] sm:$0xf]
  %v264 = vld [vmem:[%s1 + $0x384] sm:$0xf]
  %v265 = vld [vmem:[%s1 + $0x388] sm:$0xf]
  %v266 = vld [vmem:[%s1 + $0x38c] sm:$0xf]
  %v267 = vld [vmem:[%s1 + $0x390] sm:$0xf]
  %v268 = vld [vmem:[%s1 + $0x394] sm:$0xf]
  %v269 = vld [vmem:[%s1 + $0x398] sm:$0xf]
  %v270 = vld [vmem:[%s1 + $0x39c] sm:$0xf]
  %v271 = vld [vmem:[%s1 + $0x3a0] sm:$0xf]
  %v272 = vld [vmem:[%s1 + $0x3a4] sm:$0xf]
  %v273 = vld [vmem:[%s1 + $0x3a8] sm:$0xf]
  %v274 = vld [vmem:[%s1 + $0x3ac] sm:$0xf]
  %v275 = vld [vmem:[%s1 + $0x3b0] sm:$0xf]
  %v276 = vld [vmem:[%s1 + $0x3b4] sm:$0xf]
  %v277 = vld [vmem:[%s1 + $0x3b8] sm:$0xf]
  %v278 = vld [vmem:[%s1 + $0x3bc] sm:$0xf]
  %v279 = vld [vmem:[%s1 + $0x3c0] sm:$0xf]
  %v280 = vld [vmem:[%s1 + $0x3c4] sm:$0xf]
  %v281 = vld [vmem:[%s1 + $0x3c8] sm:$0xf]
  %v282 = vld [vmem:[%s1 + $0x3cc] sm:$0xf]
  %v283 = vld [vmem:[%s1 + $0x3d0] sm:$0xf]
  %v284 = vld [vmem:[%s1 + $0x3d4] sm:$0xf]
  %v285 = vld [vmem:[%s1 + $0x3d8] sm:$0xf]
  %v286 = vld [vmem:[%s1 + $0x3dc] sm:$0xf]
  %v287 = vld [vmem:[%s1 + $0x3e0] sm:$0xf]
  %v288 = vld [vmem:[%s1 + $0x3e4] sm:$0xf]
  %v289 = vld [vmem:[%s1 + $0x3e8] sm:$0xf]
  %v290 = vld [vmem:[%s1 + $0x3ec] sm:$0xf]
  %v291 = vld [vmem:[%s1 + $0x3f0] sm:$0xf]
  %v292 = vld [vmem:[%s1 + $0x3f4] sm:$0xf]
  %v293 = vld [vmem:[%s1 + $0x3f8] sm:$0xf]
  %v294 = vld [vmem:[%s1 + $0x3fc] sm:$0xf]
  %v295 = vld [vmem:[%s1 + $0x400] sm:$0xf]
  %v296 = vld [vmem:[%s1 + $0x404] sm:$0xf]
  %v297 = vld [vmem:[%s1 + $0x408] sm:$0xf]
  %v298 = vld [vmem:[%s1 + $0x40c] sm:$0xf]
  %v299 = vld [vmem:[%s1 + $0x410] sm:$0xf]
  %v300 = vld [vmem:[%s1 + $0x414] sm:$0xf]
  %v301 = vld [vmem:[%s1 + $0x418] sm:$0xf]
  %v302 = vld [vmem:[%s1 + $0x41c] sm:$0xf]
  %v303 = vld [vmem:[%s1 + $0x420] sm:$0xf]
  %v304 = vld [vmem:[%s1 + $0x424] sm:$0xf]
  %v305 = vld [vmem:[%s1 + $0x428] sm:$0xf]
  %v306 = vld [vmem:[%s1 + $0x42c] sm:$0xf]
  %v307 = vld [vmem:[%s1 + $0x430] sm:$0xf]
  %v308 = vld [vmem:[%s1 + $0x434] sm:$0xf]
  %v309 = vld [vmem:[%s1 + $0x438] sm:$0xf]
  %v310 = vld [vmem:[%s1 + $0x43c] sm:$0xf]
  %v311 = vld [vmem:[%s1 + $0x440] sm:$0xf]
  %v312 = vld [vmem:[%s1 + $0x444] sm:$0xf]
  %v313 = vld [vmem:[%s1 + $0x448] sm:$0xf]
  %v314 = vld [vmem:[%s1 + $0x44c] sm:$0xf]
  %v315 = vld [vmem:[%s1 + $0x450] sm:$0xf]
  %v316 = vld [vmem:[%s1 + $0x454] sm:$0xf]
  %v317 = vld [vmem:[%s1 + $0x458] sm:$0xf]
  %v318 = vld [vmem:[%s1 + $0x45c] sm:$0xf]
  %v319 = vld [vmem:[%s1 + $0x460] sm:$0xf]
  %v320 = vld [vmem:[%s1 + $0x464] sm:$0xf]
  %v321 = vld [vmem:[%s1 + $0x468] sm:$0xf]
  %v322 = vld [vmem:[%s1 + $0x46c] sm:$0xf]
  %v323 = vld [vmem:[%s1 + $0x470] sm:$0xf]
  %v324 = vld [vmem:[%s1 + $0x474] sm:$0xf]
  %v325 = vld [vmem:[%s1 + $0x478] sm:$0xf]
  %v326 = vld [vmem:[%s1 + $0x47c] sm:$0xf]
  %v327 = vld [vmem:[%s1 + $0x480] sm:$0xf]
  %v328 = vld [vmem:[%s1 + $0x484] sm:$0xf]
  %v329 = vld [vmem:[%s1 + $0x488] sm:$0xf]
  %v330 = vld [vmem:[%s1 + $0x48c] sm:$0xf]
  %v331 = vld [vmem:[%s1 + $0x490] sm:$0xf]
  %v332 = vld [vmem:[%s1 + $0x494] sm:$0xf]
  %v333 = vld [vmem:[%s1 + $0x498] sm:$0xf]
  %v334 = vld [vmem:[%s1 + $0x49c] sm:$0xf]
  %v335 = vld [vmem:[%s1 + $0x4a0] sm:$0xf]
  %v336 = vld [vmem:[%s1 + $0x4a4] sm:$0xf]
  %v337 = vld [vmem:[%s1 + $0x4a8] sm:$0xf]
  %v338 = vld [vmem:[%s1 + $0x4ac] sm:$0xf]
  %v339 = vld [vmem:[%s1 + $0x4b0] sm:$0xf]
  %v340 = vld [vmem:[%s1 + $0x4b4] sm:$0xf]
  %v341 = vld [vmem:[%s1 + $0x4b8] sm:$0xf]
  %v342 = vld [vmem:[%s1 + $0x4bc] sm:$0xf]
  %v343 = vld [vmem:[%s1 + $0x4c0] sm:$0xf]
  %v344 = vld [vmem:[%s1 + $0x4c4] sm:$0xf]
  %v345 = vld [vmem:[%s1 + $0x4c8] sm:$0xf]
  %v346 = vld [vmem:[%s1 + $0x4cc] sm:$0xf]
  %v347 = vld [vmem:[%s1 + $0x4d0] sm:$0xf]
  %v348 = vld [vmem:[%s1 + $0x4d4] sm:$0xf]
  %v349 = vld [vmem:[%s1 + $0x4d8] sm:$0xf]
  %v350 = vld [vmem:[%s1 + $0x4dc] sm:$0xf]
  %v351 = vld [vmem:[%s1 + $0x4e0] sm:$0xf]
  %v352 = vld [vmem:[%s1 + $0x4e4] sm:$0xf]
  %v353 = vld [vmem:[%s1 + $0x4e8] sm:$0xf]
  %v354 = vld [vmem:[%s1 + $0x4ec] sm:$0xf]
  %v355 = vld [vmem:[%s1 + $0x4f0] sm:$0xf]
  %v356 = vld [vmem:[%s1 + $0x4f4] sm:$0xf]
  %v357 = vld [vmem:[%s1 + $0x4f8] sm:$0xf]
  %v358 = vld [vmem:[%s1 + $0x4fc] sm:$0xf]
  %v359 = vld [vmem:[%s1 + $0x500] sm:$0xf]
  %v360 = vld [vmem:[%s1 + $0x504] sm:$0xf]
  %v361 = vld [vmem:[%s1 + $0x508] sm:$0xf]
  %v362 = vld [vmem:[%s1 + $0x50c] sm:$0xf]
  %v363 = vld [vmem:[%s1 + $0x510] sm:$0xf]
  %v364 = vld [vmem:[%s1 + $0x514] sm:$0xf]
  %v365 = vld [vmem:[%s1 + $0x518] sm:$0xf]
  %v366 = vld [vmem:[%s1 + $0x51c] sm:$0xf]
  %v367 = vld [vmem:[%s1 + $0x520] sm:$0xf]
  %v368 = vld [vmem:[%s1 + $0x524] sm:$0xf]
  %v369 = vld [vmem:[%s1 + $0x528] sm:$0xf]
  %v370 = vld [vmem:[%s1 + $0x52c] sm:$0xf]
  %v371 = vld [vmem:[%s1 + $0x530] sm:$0xf]
  %v372 = vld [vmem:[%s1 + $0x534] sm:$0xf]
  %v373 = vld [vmem:[%s1 + $0x538] sm:$0xf]
  %v374 = vld [vmem:[%s1 + $0x53c] sm:$0xf]
  %v375 = vld [vmem:[%s1 + $0x540] sm:$0xf]
  %v376 = vld [vmem:[%s1 + $0x544] sm:$0xf]
  %v377 = vld [vmem:[%s1 + $0x548] sm:$0xf]
  %v378 = vld [vmem:[%s1 + $0x54c] sm:$0xf]
  %v379 = vld [vmem:[%s1 + $0x550] sm:$0xf]
  %v380 = vld [vmem:[%s1 + $0x554] sm:$0xf]
  %v381 = vld [vmem:[%s1 + $0x558] sm:$0xf]
  %v382 = vld [vmem:[%s1 + $0x55c] sm:$0xf]
  %v383 = vld [vmem:[%s1 + $0x560] sm:$0xf]
  %v384 = vld [vmem:[%s1 + $0x564] sm:$0xf]
  %v385 = vld [vmem:[%s1 + $0x568] sm:$0xf]
  %v386 = vld [vmem:[%s1 + $0x56c] sm:$0xf]
  %v387 = vld [vmem:[%s1 + $0x570] sm:$0xf]
  %v388 = vld [vmem:[%s1 + $0x574] sm:$0xf]
  %v389 = vld [vmem:[%s1 + $0x578] sm:$0xf]
  %v390 = vld [vmem:[%s1 + $0x57c] sm:$0xf]
  %v391 = vld [vmem:[%s1 + $0x580] sm:$0xf]
  %v392 = vld [vmem:[%s1 + $0x584] sm:$0xf]
  %v393 = vld [vmem:[%s1 + $0x588] sm:$0xf]
  %v394 = vld [vmem:[%s1 + $0x58c] sm:$0xf]
  %v395 = vld [vmem:[%s1 + $0x590] sm:$0xf]
  %v396 = vld [vmem:[%s1 + $0x594] sm:$0xf]
  %v397 = vld [vmem:[%s1 + $0x598] sm:$0xf]
  %v398 = vld [vmem:[%s1 + $0x59c] sm:$0xf]
  %v399 = vld [vmem:[%s1 + $0x5a0] sm:$0xf]
  %v400 = vld [vmem:[%s1 + $0x5a4] sm:$0xf]
  %v401 = vld [vmem:[%s1 + $0x5a8] sm:$0xf]
  %v402 = vld [vmem:[%s1 + $0x5ac] sm:$0xf]
  %v403 = vld [vmem:[%s1 + $0x5b0] sm:$0xf]
  %v404 = vld [vmem:[%s1 + $0x5b4] sm:$0xf]
  %v405 = vld [vmem:[%s1 + $0x5b8] sm:$0xf]
  %v406 = vld [vmem:[%s1 + $0x5bc] sm:$0xf]
  %v407 = vld [vmem:[%s1 + $0x5c0] sm:$0xf]
  %v408 = vld [vmem:[%s1 + $0x5c4] sm:$0xf]
  %v409 = vld [vmem:[%s1 + $0x5c8] sm:$0xf]
  %v410 = vld [vmem:[%s1 + $0x5cc] sm:$0xf]
  %v411 = vld [vmem:[%s1 + $0x5d0] sm:$0xf]
  %v412 = vld [vmem:[%s1 + $0x5d4] sm:$0xf]
  %v413 = vld [vmem:[%s1 + $0x5d8] sm:$0xf]
  %v414 = vld [vmem:[%s1 + $0x5dc] sm:$0xf]
  %v415 = vld [vmem:[%s1 + $0x5e0] sm:$0xf]
  %v416 = vld [vmem:[%s1 + $0x5e4] sm:$0xf]
  %v417 = vld [vmem:[%s1 + $0x5e8] sm:$0xf]
  %v418 = vld [vmem:[%s1 + $0x5ec] sm:$0xf]
  %v419 = vld [vmem:[%s1 + $0x5f0] sm:$0xf]
  %v420 = vld [vmem:[%s1 + $0x5f4] sm:$0xf]
  %v421 = vld [vmem:[%s1 + $0x5f8] sm:$0xf]
  %v422 = vld [vmem:[%s1 + $0x5fc] sm:$0xf]
  %v423 = vld [vmem:[%s1 + $0x600] sm:$0xf]
  %v424 = vld [vmem:[%s1 + $0x604] sm:$0xf]
  %v425 = vld [vmem:[%s1 + $0x608] sm:$0xf]
  %v426 = vld [vmem:[%s1 + $0x60c] sm:$0xf]
  %v427 = vld [vmem:[%s1 + $0x610] sm:$0xf]
  %v428 = vld [vmem:[%s1 + $0x614] sm:$0xf]
  %v429 = vld [vmem:[%s1 + $0x618] sm:$0xf]
  %v430 = vld [vmem:[%s1 + $0x61c] sm:$0xf]
  %v431 = vld [vmem:[%s1 + $0x620] sm:$0xf]
  %v432 = vld [vmem:[%s1 + $0x624] sm:$0xf]
  %v433 = vld [vmem:[%s1 + $0x628] sm:$0xf]
  %v434 = vld [vmem:[%s1 + $0x62c] sm:$0xf]
  %v435 = vld [vmem:[%s1 + $0x630] sm:$0xf]
  %v436 = vld [vmem:[%s1 + $0x634] sm:$0xf]
  %v437 = vld [vmem:[%s1 + $0x638] sm:$0xf]
  %v438 = vld [vmem:[%s1 + $0x63c] sm:$0xf]
  %v439 = vld [vmem:[%s2] sm:$0x1]
  %v441 = vperm.slane %v439, 0
  %v456 = vunpack.c.l.b16 %v26
  %v457 = vunpack.c.h.b16 %v26
  %v458 = vunpack.c.l.b16 %v27
  %v459 = vunpack.c.h.b16 %v27
  %v460 = vunpack.c.l.b16 %v28
  %v461 = vunpack.c.h.b16 %v28
  %v462 = vunpack.c.l.b16 %v29
  %v463 = vunpack.c.h.b16 %v29
  %v464 = vunpack.c.l.b16 %v30
  %v465 = vunpack.c.h.b16 %v30
  %v466 = vunpack.c.l.b16 %v31
  %v467 = vunpack.c.h.b16 %v31
  %v468 = vunpack.c.l.b16 %v32
  %v469 = vunpack.c.h.b16 %v32
  %v470 = vunpack.c.l.b16 %v33
  %v471 = vunpack.c.h.b16 %v33
  %v472 = vunpack.c.l.b16 %v34
  %v473 = vunpack.c.h.b16 %v34
  %v474 = vunpack.c.l.b16 %v35
  %v475 = vunpack.c.h.b16 %v35
  %v476 = vunpack.c.l.b16 %v36
  %v477 = vunpack.c.h.b16 %v36
  %v478 = vunpack.c.l.b16 %v37
  %v479 = vunpack.c.h.b16 %v37
  %v480 = vunpack.c.l.b16 %v38
  %v481 = vpack.c.b16 %v456, %v456
  %v482 = vpack.c.b16 %v457, %v457
  %v483 = vpack.c.b16 %v458, %v458
  %v484 = vpack.c.b16 %v459, %v459
  %v485 = vpack.c.b16 %v460, %v460
  %v486 = vpack.c.b16 %v461, %v461
  %v487 = vpack.c.b16 %v462, %v462
  %v488 = vpack.c.b16 %v463, %v463
  %v489 = vpack.c.b16 %v464, %v464
  %v490 = vpack.c.b16 %v465, %v465
  %v491 = vpack.c.b16 %v466, %v466
  %v492 = vpack.c.b16 %v467, %v467
  %v493 = vpack.c.b16 %v468, %v468
  %v494 = vpack.c.b16 %v469, %v469
  %v495 = vpack.c.b16 %v470, %v470
  %v496 = vpack.c.b16 %v471, %v471
  %v497 = vpack.c.b16 %v472, %v472
  %v498 = vpack.c.b16 %v473, %v473
  %v499 = vpack.c.b16 %v474, %v474
  %v500 = vpack.c.b16 %v475, %v475
  %v501 = vpack.c.b16 %v476, %v476
  %v502 = vpack.c.b16 %v477, %v477
  %v503 = vpack.c.b16 %v478, %v478
  %v504 = vpack.c.b16 %v479, %v479
  %v505 = vpack.c.b16 %v480, %v480
  %v931 = vunpack.c.l.b16 %v39
  %v932 = vunpack.c.l.b16 %v40
  %v933 = vunpack.c.l.b16 %v41
  %v934 = vunpack.c.l.b16 %v42
  %v935 = vunpack.c.l.b16 %v43
  %v936 = vunpack.c.l.b16 %v44
  %v937 = vunpack.c.l.b16 %v45
  %v938 = vunpack.c.l.b16 %v46
  %v939 = vunpack.c.l.b16 %v47
  %v940 = vunpack.c.l.b16 %v48
  %v941 = vunpack.c.l.b16 %v49
  %v942 = vunpack.c.l.b16 %v50
  %v943 = vunpack.c.l.b16 %v51
  %v944 = vunpack.c.l.b16 %v52
  %v945 = vunpack.c.l.b16 %v53
  %v946 = vunpack.c.l.b16 %v54
  %v947 = vunpack.c.l.b16 %v55
  %v948 = vunpack.c.l.b16 %v56
  %v949 = vunpack.c.l.b16 %v57
  %v950 = vunpack.c.l.b16 %v58
  %v951 = vunpack.c.l.b16 %v59
  %v952 = vunpack.c.l.b16 %v60
  %v953 = vunpack.c.l.b16 %v61
  %v954 = vunpack.c.l.b16 %v62
  %v955 = vunpack.c.l.b16 %v63
  %v956 = vunpack.c.l.b16 %v64
  %v957 = vunpack.c.l.b16 %v65
  %v958 = vunpack.c.l.b16 %v66
  %v959 = vunpack.c.l.b16 %v67
  %v960 = vunpack.c.l.b16 %v68
  %v961 = vunpack.c.l.b16 %v69
  %v962 = vunpack.c.l.b16 %v70
  %v963 = vunpack.c.l.b16 %v71
  %v964 = vunpack.c.l.b16 %v72
  %v965 = vunpack.c.l.b16 %v73
  %v966 = vunpack.c.l.b16 %v74
  %v967 = vunpack.c.l.b16 %v75
  %v968 = vunpack.c.l.b16 %v76
  %v969 = vunpack.c.l.b16 %v77
  %v970 = vunpack.c.l.b16 %v78
  %v971 = vunpack.c.l.b16 %v79
  %v972 = vunpack.c.l.b16 %v80
  %v973 = vunpack.c.l.b16 %v81
  %v974 = vunpack.c.l.b16 %v82
  %v975 = vunpack.c.l.b16 %v83
  %v976 = vunpack.c.l.b16 %v84
  %v977 = vunpack.c.l.b16 %v85
  %v978 = vunpack.c.l.b16 %v86
  %v979 = vunpack.c.l.b16 %v87
  %v980 = vunpack.c.l.b16 %v88
  %v981 = vunpack.c.l.b16 %v89
  %v982 = vunpack.c.l.b16 %v90
  %v983 = vunpack.c.l.b16 %v91
  %v984 = vunpack.c.l.b16 %v92
  %v985 = vunpack.c.l.b16 %v93
  %v986 = vunpack.c.l.b16 %v94
  %v987 = vunpack.c.l.b16 %v95
  %v988 = vunpack.c.l.b16 %v96
  %v989 = vunpack.c.l.b16 %v97
  %v990 = vunpack.c.l.b16 %v98
  %v991 = vunpack.c.l.b16 %v99
  %v992 = vunpack.c.l.b16 %v100
  %v993 = vunpack.c.l.b16 %v101
  %v994 = vunpack.c.l.b16 %v102
  %v995 = vunpack.c.l.b16 %v103
  %v996 = vunpack.c.l.b16 %v104
  %v997 = vunpack.c.l.b16 %v105
  %v998 = vunpack.c.l.b16 %v106
  %v999 = vunpack.c.l.b16 %v107
  %v1000 = vunpack.c.l.b16 %v108
  %v1001 = vunpack.c.l.b16 %v109
  %v1002 = vunpack.c.l.b16 %v110
  %v1003 = vunpack.c.l.b16 %v111
  %v1004 = vunpack.c.l.b16 %v112
  %v1005 = vunpack.c.l.b16 %v113
  %v1006 = vunpack.c.l.b16 %v114
  %v1007 = vunpack.c.l.b16 %v115
  %v1008 = vunpack.c.l.b16 %v116
  %v1009 = vunpack.c.l.b16 %v117
  %v1010 = vunpack.c.l.b16 %v118
  %v1011 = vunpack.c.l.b16 %v119
  %v1012 = vunpack.c.l.b16 %v120
  %v1013 = vunpack.c.l.b16 %v121
  %v1014 = vunpack.c.l.b16 %v122
  %v1015 = vunpack.c.l.b16 %v123
  %v1016 = vunpack.c.l.b16 %v124
  %v1017 = vunpack.c.l.b16 %v125
  %v1018 = vunpack.c.l.b16 %v126
  %v1019 = vunpack.c.l.b16 %v127
  %v1020 = vunpack.c.l.b16 %v128
  %v1021 = vunpack.c.l.b16 %v129
  %v1022 = vunpack.c.l.b16 %v130
  %v1023 = vunpack.c.l.b16 %v131
  %v1024 = vunpack.c.l.b16 %v132
  %v1025 = vunpack.c.l.b16 %v133
  %v1026 = vunpack.c.l.b16 %v134
  %v1027 = vunpack.c.l.b16 %v135
  %v1028 = vunpack.c.l.b16 %v136
  %v1029 = vunpack.c.l.b16 %v137
  %v1030 = vunpack.c.l.b16 %v138
  %v1031 = vunpack.c.l.b16 %v139
  %v1032 = vunpack.c.l.b16 %v140
  %v1033 = vunpack.c.l.b16 %v141
  %v1034 = vunpack.c.l.b16 %v142
  %v1035 = vunpack.c.l.b16 %v143
  %v1036 = vunpack.c.l.b16 %v144
  %v1037 = vunpack.c.l.b16 %v145
  %v1038 = vunpack.c.l.b16 %v146
  %v1039 = vunpack.c.l.b16 %v147
  %v1040 = vunpack.c.l.b16 %v148
  %v1041 = vunpack.c.l.b16 %v149
  %v1042 = vunpack.c.l.b16 %v150
  %v1043 = vunpack.c.l.b16 %v151
  %v1044 = vunpack.c.l.b16 %v152
  %v1045 = vunpack.c.l.b16 %v153
  %v1046 = vunpack.c.l.b16 %v154
  %v1047 = vunpack.c.l.b16 %v155
  %v1048 = vunpack.c.l.b16 %v156
  %v1049 = vunpack.c.l.b16 %v157
  %v1050 = vunpack.c.l.b16 %v158
  %v1051 = vunpack.c.l.b16 %v159
  %v1052 = vunpack.c.l.b16 %v160
  %v1053 = vunpack.c.l.b16 %v161
  %v1054 = vunpack.c.l.b16 %v162
  %v1055 = vunpack.c.l.b16 %v163
  %v1056 = vunpack.c.l.b16 %v164
  %v1057 = vunpack.c.l.b16 %v165
  %v1058 = vunpack.c.l.b16 %v166
  %v1059 = vunpack.c.l.b16 %v167
  %v1060 = vunpack.c.l.b16 %v168
  %v1061 = vunpack.c.l.b16 %v169
  %v1062 = vunpack.c.l.b16 %v170
  %v1063 = vunpack.c.l.b16 %v171
  %v1064 = vunpack.c.l.b16 %v172
  %v1065 = vunpack.c.l.b16 %v173
  %v1066 = vunpack.c.l.b16 %v174
  %v1067 = vunpack.c.l.b16 %v175
  %v1068 = vunpack.c.l.b16 %v176
  %v1069 = vunpack.c.l.b16 %v177
  %v1070 = vunpack.c.l.b16 %v178
  %v1071 = vunpack.c.l.b16 %v179
  %v1072 = vunpack.c.l.b16 %v180
  %v1073 = vunpack.c.l.b16 %v181
  %v1074 = vunpack.c.l.b16 %v182
  %v1075 = vunpack.c.l.b16 %v183
  %v1076 = vunpack.c.l.b16 %v184
  %v1077 = vunpack.c.l.b16 %v185
  %v1078 = vunpack.c.l.b16 %v186
  %v1079 = vunpack.c.l.b16 %v187
  %v1080 = vunpack.c.l.b16 %v188
  %v1081 = vunpack.c.l.b16 %v189
  %v1082 = vunpack.c.l.b16 %v190
  %v1083 = vunpack.c.l.b16 %v191
  %v1084 = vunpack.c.l.b16 %v192
  %v1085 = vunpack.c.l.b16 %v193
  %v1086 = vunpack.c.l.b16 %v194
  %v1087 = vunpack.c.l.b16 %v195
  %v1088 = vunpack.c.l.b16 %v196
  %v1089 = vunpack.c.l.b16 %v197
  %v1090 = vunpack.c.l.b16 %v198
  %v1091 = vunpack.c.l.b16 %v199
  %v1092 = vunpack.c.l.b16 %v200
  %v1093 = vunpack.c.l.b16 %v201
  %v1094 = vunpack.c.l.b16 %v202
  %v1095 = vunpack.c.l.b16 %v203
  %v1096 = vunpack.c.l.b16 %v204
  %v1097 = vunpack.c.l.b16 %v205
  %v1098 = vunpack.c.l.b16 %v206
  %v1099 = vunpack.c.l.b16 %v207
  %v1100 = vunpack.c.l.b16 %v208
  %v1101 = vunpack.c.l.b16 %v209
  %v1102 = vunpack.c.l.b16 %v210
  %v1103 = vunpack.c.l.b16 %v211
  %v1104 = vunpack.c.l.b16 %v212
  %v1105 = vunpack.c.l.b16 %v213
  %v1106 = vunpack.c.l.b16 %v214
  %v1107 = vunpack.c.l.b16 %v215
  %v1108 = vunpack.c.l.b16 %v216
  %v1109 = vunpack.c.l.b16 %v217
  %v1110 = vunpack.c.l.b16 %v218
  %v1111 = vunpack.c.l.b16 %v219
  %v1112 = vunpack.c.l.b16 %v220
  %v1113 = vunpack.c.l.b16 %v221
  %v1114 = vunpack.c.l.b16 %v222
  %v1115 = vunpack.c.l.b16 %v223
  %v1116 = vunpack.c.l.b16 %v224
  %v1117 = vunpack.c.l.b16 %v225
  %v1118 = vunpack.c.l.b16 %v226
  %v1119 = vunpack.c.l.b16 %v227
  %v1120 = vunpack.c.l.b16 %v228
  %v1121 = vunpack.c.l.b16 %v229
  %v1122 = vunpack.c.l.b16 %v230
  %v1123 = vunpack.c.l.b16 %v231
  %v1124 = vunpack.c.l.b16 %v232
  %v1125 = vunpack.c.l.b16 %v233
  %v1126 = vunpack.c.l.b16 %v234
  %v1127 = vunpack.c.l.b16 %v235
  %v1128 = vunpack.c.l.b16 %v236
  %v1129 = vunpack.c.l.b16 %v237
  %v1130 = vunpack.c.l.b16 %v238
  %v1131 = vunpack.c.l.b16 %v239
  %v1132 = vunpack.c.l.b16 %v240
  %v1133 = vunpack.c.l.b16 %v241
  %v1134 = vunpack.c.l.b16 %v242
  %v1135 = vunpack.c.l.b16 %v243
  %v1136 = vunpack.c.l.b16 %v244
  %v1137 = vunpack.c.l.b16 %v245
  %v1138 = vunpack.c.l.b16 %v246
  %v1139 = vunpack.c.l.b16 %v247
  %v1140 = vunpack.c.l.b16 %v248
  %v1141 = vunpack.c.l.b16 %v249
  %v1142 = vunpack.c.l.b16 %v250
  %v1143 = vunpack.c.l.b16 %v251
  %v1144 = vunpack.c.l.b16 %v252
  %v1145 = vunpack.c.l.b16 %v253
  %v1146 = vunpack.c.l.b16 %v254
  %v1147 = vunpack.c.l.b16 %v255
  %v1148 = vunpack.c.l.b16 %v256
  %v1149 = vunpack.c.l.b16 %v257
  %v1150 = vunpack.c.l.b16 %v258
  %v1151 = vunpack.c.l.b16 %v259
  %v1152 = vunpack.c.l.b16 %v260
  %v1153 = vunpack.c.l.b16 %v261
  %v1154 = vunpack.c.l.b16 %v262
  %v1155 = vunpack.c.l.b16 %v263
  %v1156 = vunpack.c.l.b16 %v264
  %v1157 = vunpack.c.l.b16 %v265
  %v1158 = vunpack.c.l.b16 %v266
  %v1159 = vunpack.c.l.b16 %v267
  %v1160 = vunpack.c.l.b16 %v268
  %v1161 = vunpack.c.l.b16 %v269
  %v1162 = vunpack.c.l.b16 %v270
  %v1163 = vunpack.c.l.b16 %v271
  %v1164 = vunpack.c.l.b16 %v272
  %v1165 = vunpack.c.l.b16 %v273
  %v1166 = vunpack.c.l.b16 %v274
  %v1167 = vunpack.c.l.b16 %v275
  %v1168 = vunpack.c.l.b16 %v276
  %v1169 = vunpack.c.l.b16 %v277
  %v1170 = vunpack.c.l.b16 %v278
  %v1171 = vunpack.c.l.b16 %v279
  %v1172 = vunpack.c.l.b16 %v280
  %v1173 = vunpack.c.l.b16 %v281
  %v1174 = vunpack.c.l.b16 %v282
  %v1175 = vunpack.c.l.b16 %v283
  %v1176 = vunpack.c.l.b16 %v284
  %v1177 = vunpack.c.l.b16 %v285
  %v1178 = vunpack.c.l.b16 %v286
  %v1179 = vunpack.c.l.b16 %v287
  %v1180 = vunpack.c.l.b16 %v288
  %v1181 = vunpack.c.l.b16 %v289
  %v1182 = vunpack.c.l.b16 %v290
  %v1183 = vunpack.c.l.b16 %v291
  %v1184 = vunpack.c.l.b16 %v292
  %v1185 = vunpack.c.l.b16 %v293
  %v1186 = vunpack.c.l.b16 %v294
  %v1187 = vunpack.c.l.b16 %v295
  %v1188 = vunpack.c.l.b16 %v296
  %v1189 = vunpack.c.l.b16 %v297
  %v1190 = vunpack.c.l.b16 %v298
  %v1191 = vunpack.c.l.b16 %v299
  %v1192 = vunpack.c.l.b16 %v300
  %v1193 = vunpack.c.l.b16 %v301
  %v1194 = vunpack.c.l.b16 %v302
  %v1195 = vunpack.c.l.b16 %v303
  %v1196 = vunpack.c.l.b16 %v304
  %v1197 = vunpack.c.l.b16 %v305
  %v1198 = vunpack.c.l.b16 %v306
  %v1199 = vunpack.c.l.b16 %v307
  %v1200 = vunpack.c.l.b16 %v308
  %v1201 = vunpack.c.l.b16 %v309
  %v1202 = vunpack.c.l.b16 %v310
  %v1203 = vunpack.c.l.b16 %v311
  %v1204 = vunpack.c.l.b16 %v312
  %v1205 = vunpack.c.l.b16 %v313
  %v1206 = vunpack.c.l.b16 %v314
  %v1207 = vunpack.c.l.b16 %v315
  %v1208 = vunpack.c.l.b16 %v316
  %v1209 = vunpack.c.l.b16 %v317
  %v1210 = vunpack.c.l.b16 %v318
  %v1211 = vunpack.c.l.b16 %v319
  %v1212 = vunpack.c.l.b16 %v320
  %v1213 = vunpack.c.l.b16 %v321
  %v1214 = vunpack.c.l.b16 %v322
  %v1215 = vunpack.c.l.b16 %v323
  %v1216 = vunpack.c.l.b16 %v324
  %v1217 = vunpack.c.l.b16 %v325
  %v1218 = vunpack.c.l.b16 %v326
  %v1219 = vunpack.c.l.b16 %v327
  %v1220 = vunpack.c.l.b16 %v328
  %v1221 = vunpack.c.l.b16 %v329
  %v1222 = vunpack.c.l.b16 %v330
  %v1223 = vunpack.c.l.b16 %v331
  %v1224 = vunpack.c.l.b16 %v332
  %v1225 = vunpack.c.l.b16 %v333
  %v1226 = vunpack.c.l.b16 %v334
  %v1227 = vunpack.c.l.b16 %v335
  %v1228 = vunpack.c.l.b16 %v336
  %v1229 = vunpack.c.l.b16 %v337
  %v1230 = vunpack.c.l.b16 %v338
  %v1231 = vunpack.c.l.b16 %v339
  %v1232 = vunpack.c.l.b16 %v340
  %v1233 = vunpack.c.l.b16 %v341
  %v1234 = vunpack.c.l.b16 %v342
  %v1235 = vunpack.c.l.b16 %v343
  %v1236 = vunpack.c.l.b16 %v344
  %v1237 = vunpack.c.l.b16 %v345
  %v1238 = vunpack.c.l.b16 %v346
  %v1239 = vunpack.c.l.b16 %v347
  %v1240 = vunpack.c.l.b16 %v348
  %v1241 = vunpack.c.l.b16 %v349
  %v1242 = vunpack.c.l.b16 %v350
  %v1243 = vunpack.c.l.b16 %v351
  %v1244 = vunpack.c.l.b16 %v352
  %v1245 = vunpack.c.l.b16 %v353
  %v1246 = vunpack.c.l.b16 %v354
  %v1247 = vunpack.c.l.b16 %v355
  %v1248 = vunpack.c.l.b16 %v356
  %v1249 = vunpack.c.l.b16 %v357
  %v1250 = vunpack.c.l.b16 %v358
  %v1251 = vunpack.c.l.b16 %v359
  %v1252 = vunpack.c.l.b16 %v360
  %v1253 = vunpack.c.l.b16 %v361
  %v1254 = vunpack.c.l.b16 %v362
  %v1255 = vunpack.c.l.b16 %v363
  %v1256 = vunpack.c.l.b16 %v364
  %v1257 = vunpack.c.l.b16 %v365
  %v1258 = vunpack.c.l.b16 %v366
  %v1259 = vunpack.c.l.b16 %v367
  %v1260 = vunpack.c.l.b16 %v368
  %v1261 = vunpack.c.l.b16 %v369
  %v1262 = vunpack.c.l.b16 %v370
  %v1263 = vunpack.c.l.b16 %v371
  %v1264 = vunpack.c.l.b16 %v372
  %v1265 = vunpack.c.l.b16 %v373
  %v1266 = vunpack.c.l.b16 %v374
  %v1267 = vunpack.c.l.b16 %v375
  %v1268 = vunpack.c.l.b16 %v376
  %v1269 = vunpack.c.l.b16 %v377
  %v1270 = vunpack.c.l.b16 %v378
  %v1271 = vunpack.c.l.b16 %v379
  %v1272 = vunpack.c.l.b16 %v380
  %v1273 = vunpack.c.l.b16 %v381
  %v1274 = vunpack.c.l.b16 %v382
  %v1275 = vunpack.c.l.b16 %v383
  %v1276 = vunpack.c.l.b16 %v384
  %v1277 = vunpack.c.l.b16 %v385
  %v1278 = vunpack.c.l.b16 %v386
  %v1279 = vunpack.c.l.b16 %v387
  %v1280 = vunpack.c.l.b16 %v388
  %v1281 = vunpack.c.l.b16 %v389
  %v1282 = vunpack.c.l.b16 %v390
  %v1283 = vunpack.c.l.b16 %v391
  %v1284 = vunpack.c.l.b16 %v392
  %v1285 = vunpack.c.l.b16 %v393
  %v1286 = vunpack.c.l.b16 %v394
  %v1287 = vunpack.c.l.b16 %v395
  %v1288 = vunpack.c.l.b16 %v396
  %v1289 = vunpack.c.l.b16 %v397
  %v1290 = vunpack.c.l.b16 %v398
  %v1291 = vunpack.c.l.b16 %v399
  %v1292 = vunpack.c.l.b16 %v400
  %v1293 = vunpack.c.l.b16 %v401
  %v1294 = vunpack.c.l.b16 %v402
  %v1295 = vunpack.c.l.b16 %v403
  %v1296 = vunpack.c.l.b16 %v404
  %v1297 = vunpack.c.l.b16 %v405
  %v1298 = vunpack.c.l.b16 %v406
  %v1299 = vunpack.c.l.b16 %v407
  %v1300 = vunpack.c.l.b16 %v408
  %v1301 = vunpack.c.l.b16 %v409
  %v1302 = vunpack.c.l.b16 %v410
  %v1303 = vunpack.c.l.b16 %v411
  %v1304 = vunpack.c.l.b16 %v412
  %v1305 = vunpack.c.l.b16 %v413
  %v1306 = vunpack.c.l.b16 %v414
  %v1307 = vunpack.c.l.b16 %v415
  %v1308 = vunpack.c.l.b16 %v416
  %v1309 = vunpack.c.l.b16 %v417
  %v1310 = vunpack.c.l.b16 %v418
  %v1311 = vunpack.c.l.b16 %v419
  %v1312 = vunpack.c.l.b16 %v420
  %v1313 = vunpack.c.l.b16 %v421
  %v1314 = vunpack.c.l.b16 %v422
  %v1315 = vunpack.c.l.b16 %v423
  %v1316 = vunpack.c.l.b16 %v424
  %v1317 = vunpack.c.l.b16 %v425
  %v1318 = vunpack.c.l.b16 %v426
  %v1319 = vunpack.c.l.b16 %v427
  %v1320 = vunpack.c.l.b16 %v428
  %v1321 = vunpack.c.l.b16 %v429
  %v1322 = vunpack.c.l.b16 %v430
  %v1323 = vunpack.c.l.b16 %v431
  %v1324 = vunpack.c.l.b16 %v432
  %v1325 = vunpack.c.l.b16 %v433
  %v1326 = vunpack.c.l.b16 %v434
  %v1327 = vunpack.c.l.b16 %v435
  %v1328 = vunpack.c.l.b16 %v436
  %v1329 = vunpack.c.l.b16 %v437
  %v1330 = vunpack.c.l.b16 %v438
  %v1331 = vpack.c.b16 %v932, %v931
  %v1332 = vpack.c.b16 %v934, %v933
  %v1333 = vpack.c.b16 %v936, %v935
  %v1334 = vpack.c.b16 %v938, %v937
  %v1335 = vpack.c.b16 %v940, %v939
  %v1336 = vpack.c.b16 %v942, %v941
  %v1337 = vpack.c.b16 %v944, %v943
  %v1338 = vpack.c.b16 %v946, %v945
  %v1339 = vpack.c.b16 %v948, %v947
  %v1340 = vpack.c.b16 %v950, %v949
  %v1341 = vpack.c.b16 %v952, %v951
  %v1342 = vpack.c.b16 %v954, %v953
  %v1343 = vpack.c.b16 %v956, %v955
  %v1344 = vpack.c.b16 %v958, %v957
  %v1345 = vpack.c.b16 %v960, %v959
  %v1346 = vpack.c.b16 %v962, %v961
  %v1347 = vpack.c.b16 %v964, %v963
  %v1348 = vpack.c.b16 %v966, %v965
  %v1349 = vpack.c.b16 %v968, %v967
  %v1350 = vpack.c.b16 %v970, %v969
  %v1351 = vpack.c.b16 %v972, %v971
  %v1352 = vpack.c.b16 %v974, %v973
  %v1353 = vpack.c.b16 %v976, %v975
  %v1354 = vpack.c.b16 %v978, %v977
  %v1355 = vpack.c.b16 %v980, %v979
  %v1356 = vpack.c.b16 %v982, %v981
  %v1357 = vpack.c.b16 %v984, %v983
  %v1358 = vpack.c.b16 %v986, %v985
  %v1359 = vpack.c.b16 %v988, %v987
  %v1360 = vpack.c.b16 %v990, %v989
  %v1361 = vpack.c.b16 %v992, %v991
  %v1362 = vpack.c.b16 %v994, %v993
  %v1363 = vpack.c.b16 %v996, %v995
  %v1364 = vpack.c.b16 %v998, %v997
  %v1365 = vpack.c.b16 %v1000, %v999
  %v1366 = vpack.c.b16 %v1002, %v1001
  %v1367 = vpack.c.b16 %v1004, %v1003
  %v1368 = vpack.c.b16 %v1006, %v1005
  %v1369 = vpack.c.b16 %v1008, %v1007
  %v1370 = vpack.c.b16 %v1010, %v1009
  %v1371 = vpack.c.b16 %v1012, %v1011
  %v1372 = vpack.c.b16 %v1014, %v1013
  %v1373 = vpack.c.b16 %v1016, %v1015
  %v1374 = vpack.c.b16 %v1018, %v1017
  %v1375 = vpack.c.b16 %v1020, %v1019
  %v1376 = vpack.c.b16 %v1022, %v1021
  %v1377 = vpack.c.b16 %v1024, %v1023
  %v1378 = vpack.c.b16 %v1026, %v1025
  %v1379 = vpack.c.b16 %v1028, %v1027
  %v1380 = vpack.c.b16 %v1030, %v1029
  %v1381 = vpack.c.b16 %v1032, %v1031
  %v1382 = vpack.c.b16 %v1034, %v1033
  %v1383 = vpack.c.b16 %v1036, %v1035
  %v1384 = vpack.c.b16 %v1038, %v1037
  %v1385 = vpack.c.b16 %v1040, %v1039
  %v1386 = vpack.c.b16 %v1042, %v1041
  %v1387 = vpack.c.b16 %v1044, %v1043
  %v1388 = vpack.c.b16 %v1046, %v1045
  %v1389 = vpack.c.b16 %v1048, %v1047
  %v1390 = vpack.c.b16 %v1050, %v1049
  %v1391 = vpack.c.b16 %v1052, %v1051
  %v1392 = vpack.c.b16 %v1054, %v1053
  %v1393 = vpack.c.b16 %v1056, %v1055
  %v1394 = vpack.c.b16 %v1058, %v1057
  %v1395 = vpack.c.b16 %v1060, %v1059
  %v1396 = vpack.c.b16 %v1062, %v1061
  %v1397 = vpack.c.b16 %v1064, %v1063
  %v1398 = vpack.c.b16 %v1066, %v1065
  %v1399 = vpack.c.b16 %v1068, %v1067
  %v1400 = vpack.c.b16 %v1070, %v1069
  %v1401 = vpack.c.b16 %v1072, %v1071
  %v1402 = vpack.c.b16 %v1074, %v1073
  %v1403 = vpack.c.b16 %v1076, %v1075
  %v1404 = vpack.c.b16 %v1078, %v1077
  %v1405 = vpack.c.b16 %v1080, %v1079
  %v1406 = vpack.c.b16 %v1082, %v1081
  %v1407 = vpack.c.b16 %v1084, %v1083
  %v1408 = vpack.c.b16 %v1086, %v1085
  %v1409 = vpack.c.b16 %v1088, %v1087
  %v1410 = vpack.c.b16 %v1090, %v1089
  %v1411 = vpack.c.b16 %v1092, %v1091
  %v1412 = vpack.c.b16 %v1094, %v1093
  %v1413 = vpack.c.b16 %v1096, %v1095
  %v1414 = vpack.c.b16 %v1098, %v1097
  %v1415 = vpack.c.b16 %v1100, %v1099
  %v1416 = vpack.c.b16 %v1102, %v1101
  %v1417 = vpack.c.b16 %v1104, %v1103
  %v1418 = vpack.c.b16 %v1106, %v1105
  %v1419 = vpack.c.b16 %v1108, %v1107
  %v1420 = vpack.c.b16 %v1110, %v1109
  %v1421 = vpack.c.b16 %v1112, %v1111
  %v1422 = vpack.c.b16 %v1114, %v1113
  %v1423 = vpack.c.b16 %v1116, %v1115
  %v1424 = vpack.c.b16 %v1118, %v1117
  %v1425 = vpack.c.b16 %v1120, %v1119
  %v1426 = vpack.c.b16 %v1122, %v1121
  %v1427 = vpack.c.b16 %v1124, %v1123
  %v1428 = vpack.c.b16 %v1126, %v1125
  %v1429 = vpack.c.b16 %v1128, %v1127
  %v1430 = vpack.c.b16 %v1130, %v1129
  %v1431 = vpack.c.b16 %v1132, %v1131
  %v1432 = vpack.c.b16 %v1134, %v1133
  %v1433 = vpack.c.b16 %v1136, %v1135
  %v1434 = vpack.c.b16 %v1138, %v1137
  %v1435 = vpack.c.b16 %v1140, %v1139
  %v1436 = vpack.c.b16 %v1142, %v1141
  %v1437 = vpack.c.b16 %v1144, %v1143
  %v1438 = vpack.c.b16 %v1146, %v1145
  %v1439 = vpack.c.b16 %v1148, %v1147
  %v1440 = vpack.c.b16 %v1150, %v1149
  %v1441 = vpack.c.b16 %v1152, %v1151
  %v1442 = vpack.c.b16 %v1154, %v1153
  %v1443 = vpack.c.b16 %v1156, %v1155
  %v1444 = vpack.c.b16 %v1158, %v1157
  %v1445 = vpack.c.b16 %v1160, %v1159
  %v1446 = vpack.c.b16 %v1162, %v1161
  %v1447 = vpack.c.b16 %v1164, %v1163
  %v1448 = vpack.c.b16 %v1166, %v1165
  %v1449 = vpack.c.b16 %v1168, %v1167
  %v1450 = vpack.c.b16 %v1170, %v1169
  %v1451 = vpack.c.b16 %v1172, %v1171
  %v1452 = vpack.c.b16 %v1174, %v1173
  %v1453 = vpack.c.b16 %v1176, %v1175
  %v1454 = vpack.c.b16 %v1178, %v1177
  %v1455 = vpack.c.b16 %v1180, %v1179
  %v1456 = vpack.c.b16 %v1182, %v1181
  %v1457 = vpack.c.b16 %v1184, %v1183
  %v1458 = vpack.c.b16 %v1186, %v1185
  %v1459 = vpack.c.b16 %v1188, %v1187
  %v1460 = vpack.c.b16 %v1190, %v1189
  %v1461 = vpack.c.b16 %v1192, %v1191
  %v1462 = vpack.c.b16 %v1194, %v1193
  %v1463 = vpack.c.b16 %v1196, %v1195
  %v1464 = vpack.c.b16 %v1198, %v1197
  %v1465 = vpack.c.b16 %v1200, %v1199
  %v1466 = vpack.c.b16 %v1202, %v1201
  %v1467 = vpack.c.b16 %v1204, %v1203
  %v1468 = vpack.c.b16 %v1206, %v1205
  %v1469 = vpack.c.b16 %v1208, %v1207
  %v1470 = vpack.c.b16 %v1210, %v1209
  %v1471 = vpack.c.b16 %v1212, %v1211
  %v1472 = vpack.c.b16 %v1214, %v1213
  %v1473 = vpack.c.b16 %v1216, %v1215
  %v1474 = vpack.c.b16 %v1218, %v1217
  %v1475 = vpack.c.b16 %v1220, %v1219
  %v1476 = vpack.c.b16 %v1222, %v1221
  %v1477 = vpack.c.b16 %v1224, %v1223
  %v1478 = vpack.c.b16 %v1226, %v1225
  %v1479 = vpack.c.b16 %v1228, %v1227
  %v1480 = vpack.c.b16 %v1230, %v1229
  %v1481 = vpack.c.b16 %v1232, %v1231
  %v1482 = vpack.c.b16 %v1234, %v1233
  %v1483 = vpack.c.b16 %v1236, %v1235
  %v1484 = vpack.c.b16 %v1238, %v1237
  %v1485 = vpack.c.b16 %v1240, %v1239
  %v1486 = vpack.c.b16 %v1242, %v1241
  %v1487 = vpack.c.b16 %v1244, %v1243
  %v1488 = vpack.c.b16 %v1246, %v1245
  %v1489 = vpack.c.b16 %v1248, %v1247
  %v1490 = vpack.c.b16 %v1250, %v1249
  %v1491 = vpack.c.b16 %v1252, %v1251
  %v1492 = vpack.c.b16 %v1254, %v1253
  %v1493 = vpack.c.b16 %v1256, %v1255
  %v1494 = vpack.c.b16 %v1258, %v1257
  %v1495 = vpack.c.b16 %v1260, %v1259
  %v1496 = vpack.c.b16 %v1262, %v1261
  %v1497 = vpack.c.b16 %v1264, %v1263
  %v1498 = vpack.c.b16 %v1266, %v1265
  %v1499 = vpack.c.b16 %v1268, %v1267
  %v1500 = vpack.c.b16 %v1270, %v1269
  %v1501 = vpack.c.b16 %v1272, %v1271
  %v1502 = vpack.c.b16 %v1274, %v1273
  %v1503 = vpack.c.b16 %v1276, %v1275
  %v1504 = vpack.c.b16 %v1278, %v1277
  %v1505 = vpack.c.b16 %v1280, %v1279
  %v1506 = vpack.c.b16 %v1282, %v1281
  %v1507 = vpack.c.b16 %v1284, %v1283
  %v1508 = vpack.c.b16 %v1286, %v1285
  %v1509 = vpack.c.b16 %v1288, %v1287
  %v1510 = vpack.c.b16 %v1290, %v1289
  %v1511 = vpack.c.b16 %v1292, %v1291
  %v1512 = vpack.c.b16 %v1294, %v1293
  %v1513 = vpack.c.b16 %v1296, %v1295
  %v1514 = vpack.c.b16 %v1298, %v1297
  %v1515 = vpack.c.b16 %v1300, %v1299
  %v1516 = vpack.c.b16 %v1302, %v1301
  %v1517 = vpack.c.b16 %v1304, %v1303
  %v1518 = vpack.c.b16 %v1306, %v1305
  %v1519 = vpack.c.b16 %v1308, %v1307
  %v1520 = vpack.c.b16 %v1310, %v1309
  %v1521 = vpack.c.b16 %v1312, %v1311
  %v1522 = vpack.c.b16 %v1314, %v1313
  %v1523 = vpack.c.b16 %v1316, %v1315
  %v1524 = vpack.c.b16 %v1318, %v1317
  %v1525 = vpack.c.b16 %v1320, %v1319
  %v1526 = vpack.c.b16 %v1322, %v1321
  %v1527 = vpack.c.b16 %v1324, %v1323
  %v1528 = vpack.c.b16 %v1326, %v1325
  %v1529 = vpack.c.b16 %v1328, %v1327
  %v1530 = vpack.c.b16 %v1330, %v1329
  %1731 = vmatpush.bf16.msra.mxu0 %v1338
  %1732 = vmatpush.bf16.msra.mxu0 %v1337
  %1733 = vmatpush.bf16.msra.mxu0 %v1336
  %1734 = vmatpush.bf16.msra.mxu0 %v1335
  %1735 = vmatpush.bf16.msra.mxu0 %v1334
  %1736 = vmatpush.bf16.msra.mxu0 %v1333
  %1737 = vmatpush.bf16.msra.mxu0 %v1332
  %1738 = vmatpush.bf16.msra.mxu0 %v1331
  %1739 = vmatmul.bf16.gmra.mxu0 %v481
  %v1740 = vpop.f32.mrf.mxu0
  %v1741 = vadd.f32 %v441, %v1740
  %v1742 = vpop.f32.mrf.mxu0
  %1743 = vdwg.mxu0
  %1744 = vmatpush.bf16.msra.mxu0 %v1346
  %1745 = vmatpush.bf16.msra.mxu0 %v1345
  %1746 = vmatpush.bf16.msra.mxu0 %v1344
  %1747 = vmatpush.bf16.msra.mxu0 %v1343
  %1748 = vmatpush.bf16.msra.mxu0 %v1342
  %1749 = vmatpush.bf16.msra.mxu0 %v1341
  %1750 = vmatpush.bf16.msra.mxu0 %v1340
  %1751 = vmatpush.bf16.msra.mxu0 %v1339
  %1752 = vmatmul.bf16.gmra.mxu0 %v482
  %v1753 = vpop.f32.mrf.mxu0
  %v1754 = vadd.f32 %v1741, %v1753
  %v1755 = vpop.f32.mrf.mxu0
  %1756 = vdwg.mxu0
  %1757 = vmatpush.bf16.msra.mxu0 %v1354
  %1758 = vmatpush.bf16.msra.mxu0 %v1353
  %1759 = vmatpush.bf16.msra.mxu0 %v1352
  %1760 = vmatpush.bf16.msra.mxu0 %v1351
  %1761 = vmatpush.bf16.msra.mxu0 %v1350
  %1762 = vmatpush.bf16.msra.mxu0 %v1349
  %1763 = vmatpush.bf16.msra.mxu0 %v1348
  %1764 = vmatpush.bf16.msra.mxu0 %v1347
  %1765 = vmatmul.bf16.gmra.mxu0 %v483
  %v1766 = vpop.f32.mrf.mxu0
  %v1767 = vadd.f32 %v1754, %v1766
  %v1768 = vpop.f32.mrf.mxu0
  %1769 = vdwg.mxu0
  %1770 = vmatpush.bf16.msra.mxu0 %v1362
  %1771 = vmatpush.bf16.msra.mxu0 %v1361
  %1772 = vmatpush.bf16.msra.mxu0 %v1360
  %1773 = vmatpush.bf16.msra.mxu0 %v1359
  %1774 = vmatpush.bf16.msra.mxu0 %v1358
  %1775 = vmatpush.bf16.msra.mxu0 %v1357
  %1776 = vmatpush.bf16.msra.mxu0 %v1356
  %1777 = vmatpush.bf16.msra.mxu0 %v1355
  %1778 = vmatmul.bf16.gmra.mxu0 %v484
  %v1779 = vpop.f32.mrf.mxu0
  %v1780 = vadd.f32 %v1767, %v1779
  %v1781 = vpop.f32.mrf.mxu0
  %1782 = vdwg.mxu0
  %1783 = vmatpush.bf16.msra.mxu0 %v1370
  %1784 = vmatpush.bf16.msra.mxu0 %v1369
  %1785 = vmatpush.bf16.msra.mxu0 %v1368
  %1786 = vmatpush.bf16.msra.mxu0 %v1367
  %1787 = vmatpush.bf16.msra.mxu0 %v1366
  %1788 = vmatpush.bf16.msra.mxu0 %v1365
  %1789 = vmatpush.bf16.msra.mxu0 %v1364
  %1790 = vmatpush.bf16.msra.mxu0 %v1363
  %1791 = vmatmul.bf16.gmra.mxu0 %v485
  %v1792 = vpop.f32.mrf.mxu0
  %v1793 = vadd.f32 %v1780, %v1792
  %v1794 = vpop.f32.mrf.mxu0
  %1795 = vdwg.mxu0
  %1796 = vmatpush.bf16.msra.mxu0 %v1378
  %1797 = vmatpush.bf16.msra.mxu0 %v1377
  %1798 = vmatpush.bf16.msra.mxu0 %v1376
  %1799 = vmatpush.bf16.msra.mxu0 %v1375
  %1800 = vmatpush.bf16.msra.mxu0 %v1374
  %1801 = vmatpush.bf16.msra.mxu0 %v1373
  %1802 = vmatpush.bf16.msra.mxu0 %v1372
  %1803 = vmatpush.bf16.msra.mxu0 %v1371
  %1804 = vmatmul.bf16.gmra.mxu0 %v486
  %v1805 = vpop.f32.mrf.mxu0
  %v1806 = vadd.f32 %v1793, %v1805
  %v1807 = vpop.f32.mrf.mxu0
  %1808 = vdwg.mxu0
  %1809 = vmatpush.bf16.msra.mxu0 %v1386
  %1810 = vmatpush.bf16.msra.mxu0 %v1385
  %1811 = vmatpush.bf16.msra.mxu0 %v1384
  %1812 = vmatpush.bf16.msra.mxu0 %v1383
  %1813 = vmatpush.bf16.msra.mxu0 %v1382
  %1814 = vmatpush.bf16.msra.mxu0 %v1381
  %1815 = vmatpush.bf16.msra.mxu0 %v1380
  %1816 = vmatpush.bf16.msra.mxu0 %v1379
  %1817 = vmatmul.bf16.gmra.mxu0 %v487
  %v1818 = vpop.f32.mrf.mxu0
  %v1819 = vadd.f32 %v1806, %v1818
  %v1820 = vpop.f32.mrf.mxu0
  %1821 = vdwg.mxu0
  %1822 = vmatpush.bf16.msra.mxu0 %v1394
  %1823 = vmatpush.bf16.msra.mxu0 %v1393
  %1824 = vmatpush.bf16.msra.mxu0 %v1392
  %1825 = vmatpush.bf16.msra.mxu0 %v1391
  %1826 = vmatpush.bf16.msra.mxu0 %v1390
  %1827 = vmatpush.bf16.msra.mxu0 %v1389
  %1828 = vmatpush.bf16.msra.mxu0 %v1388
  %1829 = vmatpush.bf16.msra.mxu0 %v1387
  %1830 = vmatmul.bf16.gmra.mxu0 %v488
  %v1831 = vpop.f32.mrf.mxu0
  %v1832 = vadd.f32 %v1819, %v1831
  %v1833 = vpop.f32.mrf.mxu0
  %1834 = vdwg.mxu0
  %1835 = vmatpush.bf16.msra.mxu0 %v1402
  %1836 = vmatpush.bf16.msra.mxu0 %v1401
  %1837 = vmatpush.bf16.msra.mxu0 %v1400
  %1838 = vmatpush.bf16.msra.mxu0 %v1399
  %1839 = vmatpush.bf16.msra.mxu0 %v1398
  %1840 = vmatpush.bf16.msra.mxu0 %v1397
  %1841 = vmatpush.bf16.msra.mxu0 %v1396
  %1842 = vmatpush.bf16.msra.mxu0 %v1395
  %1843 = vmatmul.bf16.gmra.mxu0 %v489
  %v1844 = vpop.f32.mrf.mxu0
  %v1845 = vadd.f32 %v1832, %v1844
  %v1846 = vpop.f32.mrf.mxu0
  %1847 = vdwg.mxu0
  %1848 = vmatpush.bf16.msra.mxu0 %v1410
  %1849 = vmatpush.bf16.msra.mxu0 %v1409
  %1850 = vmatpush.bf16.msra.mxu0 %v1408
  %1851 = vmatpush.bf16.msra.mxu0 %v1407
  %1852 = vmatpush.bf16.msra.mxu0 %v1406
  %1853 = vmatpush.bf16.msra.mxu0 %v1405
  %1854 = vmatpush.bf16.msra.mxu0 %v1404
  %1855 = vmatpush.bf16.msra.mxu0 %v1403
  %1856 = vmatmul.bf16.gmra.mxu0 %v490
  %v1857 = vpop.f32.mrf.mxu0
  %v1858 = vadd.f32 %v1845, %v1857
  %v1859 = vpop.f32.mrf.mxu0
  %1860 = vdwg.mxu0
  %1861 = vmatpush.bf16.msra.mxu0 %v1418
  %1862 = vmatpush.bf16.msra.mxu0 %v1417
  %1863 = vmatpush.bf16.msra.mxu0 %v1416
  %1864 = vmatpush.bf16.msra.mxu0 %v1415
  %1865 = vmatpush.bf16.msra.mxu0 %v1414
  %1866 = vmatpush.bf16.msra.mxu0 %v1413
  %1867 = vmatpush.bf16.msra.mxu0 %v1412
  %1868 = vmatpush.bf16.msra.mxu0 %v1411
  %1869 = vmatmul.bf16.gmra.mxu0 %v491
  %v1870 = vpop.f32.mrf.mxu0
  %v1871 = vadd.f32 %v1858, %v1870
  %v1872 = vpop.f32.mrf.mxu0
  %1873 = vdwg.mxu0
  %1874 = vmatpush.bf16.msra.mxu0 %v1426
  %1875 = vmatpush.bf16.msra.mxu0 %v1425
  %1876 = vmatpush.bf16.msra.mxu0 %v1424
  %1877 = vmatpush.bf16.msra.mxu0 %v1423
  %1878 = vmatpush.bf16.msra.mxu0 %v1422
  %1879 = vmatpush.bf16.msra.mxu0 %v1421
  %1880 = vmatpush.bf16.msra.mxu0 %v1420
  %1881 = vmatpush.bf16.msra.mxu0 %v1419
  %1882 = vmatmul.bf16.gmra.mxu0 %v492
  %v1883 = vpop.f32.mrf.mxu0
  %v1884 = vadd.f32 %v1871, %v1883
  %v1885 = vpop.f32.mrf.mxu0
  %1886 = vdwg.mxu0
  %1887 = vmatpush.bf16.msra.mxu0 %v1434
  %1888 = vmatpush.bf16.msra.mxu0 %v1433
  %1889 = vmatpush.bf16.msra.mxu0 %v1432
  %1890 = vmatpush.bf16.msra.mxu0 %v1431
  %1891 = vmatpush.bf16.msra.mxu0 %v1430
  %1892 = vmatpush.bf16.msra.mxu0 %v1429
  %1893 = vmatpush.bf16.msra.mxu0 %v1428
  %1894 = vmatpush.bf16.msra.mxu0 %v1427
  %1895 = vmatmul.bf16.gmra.mxu0 %v493
  %v1896 = vpop.f32.mrf.mxu0
  %v1897 = vadd.f32 %v1884, %v1896
  %v1898 = vpop.f32.mrf.mxu0
  %1899 = vdwg.mxu0
  %1900 = vmatpush.bf16.msra.mxu0 %v1442
  %1901 = vmatpush.bf16.msra.mxu0 %v1441
  %1902 = vmatpush.bf16.msra.mxu0 %v1440
  %1903 = vmatpush.bf16.msra.mxu0 %v1439
  %1904 = vmatpush.bf16.msra.mxu0 %v1438
  %1905 = vmatpush.bf16.msra.mxu0 %v1437
  %1906 = vmatpush.bf16.msra.mxu0 %v1436
  %1907 = vmatpush.bf16.msra.mxu0 %v1435
  %1908 = vmatmul.bf16.gmra.mxu0 %v494
  %v1909 = vpop.f32.mrf.mxu0
  %v1910 = vadd.f32 %v1897, %v1909
  %v1911 = vpop.f32.mrf.mxu0
  %1912 = vdwg.mxu0
  %1913 = vmatpush.bf16.msra.mxu0 %v1450
  %1914 = vmatpush.bf16.msra.mxu0 %v1449
  %1915 = vmatpush.bf16.msra.mxu0 %v1448
  %1916 = vmatpush.bf16.msra.mxu0 %v1447
  %1917 = vmatpush.bf16.msra.mxu0 %v1446
  %1918 = vmatpush.bf16.msra.mxu0 %v1445
  %1919 = vmatpush.bf16.msra.mxu0 %v1444
  %1920 = vmatpush.bf16.msra.mxu0 %v1443
  %1921 = vmatmul.bf16.gmra.mxu0 %v495
  %v1922 = vpop.f32.mrf.mxu0
  %v1923 = vadd.f32 %v1910, %v1922
  %v1924 = vpop.f32.mrf.mxu0
  %1925 = vdwg.mxu0
  %1926 = vmatpush.bf16.msra.mxu0 %v1458
  %1927 = vmatpush.bf16.msra.mxu0 %v1457
  %1928 = vmatpush.bf16.msra.mxu0 %v1456
  %1929 = vmatpush.bf16.msra.mxu0 %v1455
  %1930 = vmatpush.bf16.msra.mxu0 %v1454
  %1931 = vmatpush.bf16.msra.mxu0 %v1453
  %1932 = vmatpush.bf16.msra.mxu0 %v1452
  %1933 = vmatpush.bf16.msra.mxu0 %v1451
  %1934 = vmatmul.bf16.gmra.mxu0 %v496
  %v1935 = vpop.f32.mrf.mxu0
  %v1936 = vadd.f32 %v1923, %v1935
  %v1937 = vpop.f32.mrf.mxu0
  %1938 = vdwg.mxu0
  %1939 = vmatpush.bf16.msra.mxu0 %v1466
  %1940 = vmatpush.bf16.msra.mxu0 %v1465
  %1941 = vmatpush.bf16.msra.mxu0 %v1464
  %1942 = vmatpush.bf16.msra.mxu0 %v1463
  %1943 = vmatpush.bf16.msra.mxu0 %v1462
  %1944 = vmatpush.bf16.msra.mxu0 %v1461
  %1945 = vmatpush.bf16.msra.mxu0 %v1460
  %1946 = vmatpush.bf16.msra.mxu0 %v1459
  %1947 = vmatmul.bf16.gmra.mxu0 %v497
  %v1948 = vpop.f32.mrf.mxu0
  %v1949 = vadd.f32 %v1936, %v1948
  %v1950 = vpop.f32.mrf.mxu0
  %1951 = vdwg.mxu0
  %1952 = vmatpush.bf16.msra.mxu0 %v1474
  %1953 = vmatpush.bf16.msra.mxu0 %v1473
  %1954 = vmatpush.bf16.msra.mxu0 %v1472
  %1955 = vmatpush.bf16.msra.mxu0 %v1471
  %1956 = vmatpush.bf16.msra.mxu0 %v1470
  %1957 = vmatpush.bf16.msra.mxu0 %v1469
  %1958 = vmatpush.bf16.msra.mxu0 %v1468
  %1959 = vmatpush.bf16.msra.mxu0 %v1467
  %1960 = vmatmul.bf16.gmra.mxu0 %v498
  %v1961 = vpop.f32.mrf.mxu0
  %v1962 = vadd.f32 %v1949, %v1961
  %v1963 = vpop.f32.mrf.mxu0
  %1964 = vdwg.mxu0
  %1965 = vmatpush.bf16.msra.mxu0 %v1482
  %1966 = vmatpush.bf16.msra.mxu0 %v1481
  %1967 = vmatpush.bf16.msra.mxu0 %v1480
  %1968 = vmatpush.bf16.msra.mxu0 %v1479
  %1969 = vmatpush.bf16.msra.mxu0 %v1478
  %1970 = vmatpush.bf16.msra.mxu0 %v1477
  %1971 = vmatpush.bf16.msra.mxu0 %v1476
  %1972 = vmatpush.bf16.msra.mxu0 %v1475
  %1973 = vmatmul.bf16.gmra.mxu0 %v499
  %v1974 = vpop.f32.mrf.mxu0
  %v1975 = vadd.f32 %v1962, %v1974
  %v1976 = vpop.f32.mrf.mxu0
  %1977 = vdwg.mxu0
  %1978 = vmatpush.bf16.msra.mxu0 %v1490
  %1979 = vmatpush.bf16.msra.mxu0 %v1489
  %1980 = vmatpush.bf16.msra.mxu0 %v1488
  %1981 = vmatpush.bf16.msra.mxu0 %v1487
  %1982 = vmatpush.bf16.msra.mxu0 %v1486
  %1983 = vmatpush.bf16.msra.mxu0 %v1485
  %1984 = vmatpush.bf16.msra.mxu0 %v1484
  %1985 = vmatpush.bf16.msra.mxu0 %v1483
  %1986 = vmatmul.bf16.gmra.mxu0 %v500
  %v1987 = vpop.f32.mrf.mxu0
  %v1988 = vadd.f32 %v1975, %v1987
  %v1989 = vpop.f32.mrf.mxu0
  %1990 = vdwg.mxu0
  %1991 = vmatpush.bf16.msra.mxu0 %v1498
  %1992 = vmatpush.bf16.msra.mxu0 %v1497
  %1993 = vmatpush.bf16.msra.mxu0 %v1496
  %1994 = vmatpush.bf16.msra.mxu0 %v1495
  %1995 = vmatpush.bf16.msra.mxu0 %v1494
  %1996 = vmatpush.bf16.msra.mxu0 %v1493
  %1997 = vmatpush.bf16.msra.mxu0 %v1492
  %1998 = vmatpush.bf16.msra.mxu0 %v1491
  %1999 = vmatmul.bf16.gmra.mxu0 %v501
  %v2000 = vpop.f32.mrf.mxu0
  %v2001 = vadd.f32 %v1988, %v2000
  %v2002 = vpop.f32.mrf.mxu0
  %2003 = vdwg.mxu0
  %2004 = vmatpush.bf16.msra.mxu0 %v1506
  %2005 = vmatpush.bf16.msra.mxu0 %v1505
  %2006 = vmatpush.bf16.msra.mxu0 %v1504
  %2007 = vmatpush.bf16.msra.mxu0 %v1503
  %2008 = vmatpush.bf16.msra.mxu0 %v1502
  %2009 = vmatpush.bf16.msra.mxu0 %v1501
  %2010 = vmatpush.bf16.msra.mxu0 %v1500
  %2011 = vmatpush.bf16.msra.mxu0 %v1499
  %2012 = vmatmul.bf16.gmra.mxu0 %v502
  %v2013 = vpop.f32.mrf.mxu0
  %v2014 = vadd.f32 %v2001, %v2013
  %v2015 = vpop.f32.mrf.mxu0
  %2016 = vdwg.mxu0
  %2017 = vmatpush.bf16.msra.mxu0 %v1514
  %2018 = vmatpush.bf16.msra.mxu0 %v1513
  %2019 = vmatpush.bf16.msra.mxu0 %v1512
  %2020 = vmatpush.bf16.msra.mxu0 %v1511
  %2021 = vmatpush.bf16.msra.mxu0 %v1510
  %2022 = vmatpush.bf16.msra.mxu0 %v1509
  %2023 = vmatpush.bf16.msra.mxu0 %v1508
  %2024 = vmatpush.bf16.msra.mxu0 %v1507
  %2025 = vmatmul.bf16.gmra.mxu0 %v503
  %v2026 = vpop.f32.mrf.mxu0
  %v2027 = vadd.f32 %v2014, %v2026
  %v2028 = vpop.f32.mrf.mxu0
  %2029 = vdwg.mxu0
  %2030 = vmatpush.bf16.msra.mxu0 %v1522
  %2031 = vmatpush.bf16.msra.mxu0 %v1521
  %2032 = vmatpush.bf16.msra.mxu0 %v1520
  %2033 = vmatpush.bf16.msra.mxu0 %v1519
  %2034 = vmatpush.bf16.msra.mxu0 %v1518
  %2035 = vmatpush.bf16.msra.mxu0 %v1517
  %2036 = vmatpush.bf16.msra.mxu0 %v1516
  %2037 = vmatpush.bf16.msra.mxu0 %v1515
  %2038 = vmatmul.bf16.gmra.mxu0 %v504
  %v2039 = vpop.f32.mrf.mxu0
  %v2040 = vadd.f32 %v2027, %v2039
  %v2041 = vpop.f32.mrf.mxu0
  %2042 = vdwg.mxu0
  %2043 = vmatpush.bf16.msra.mxu0 %v1530
  %2044 = vmatpush.bf16.msra.mxu0 %v1529
  %2045 = vmatpush.bf16.msra.mxu0 %v1528
  %2046 = vmatpush.bf16.msra.mxu0 %v1527
  %2047 = vmatpush.bf16.msra.mxu0 %v1526
  %2048 = vmatpush.bf16.msra.mxu0 %v1525
  %2049 = vmatpush.bf16.msra.mxu0 %v1524
  %2050 = vmatpush.bf16.msra.mxu0 %v1523
  %2051 = vmatmul.bf16.gmra.mxu0 %v505
  %v2052 = vpop.f32.mrf.mxu0
  %v2053 = vadd.f32 %v2040, %v2052
  %v2054 = vpop.f32.mrf.mxu0
  %2055 = vdwg.mxu0
  %v2056 = vmax.f32 %v2053, 0.0
  %v2057 = vpack.c.bf16 %v2056, %v2056
  %v2058 = vld [vmem:[%s3] sm:$0xf]
  %v2059 = vld [vmem:[%s3 + $0x4] sm:$0xf]
  %v2060 = vld [vmem:[%s3 + $0x8] sm:$0xf]
  %v2061 = vld [vmem:[%s3 + $0xc] sm:$0xf]
  %v2062 = vld [vmem:[%s3 + $0x10] sm:$0xf]
  %v2063 = vld [vmem:[%s3 + $0x14] sm:$0xf]
  %v2064 = vld [vmem:[%s3 + $0x18] sm:$0xf]
  %v2065 = vld [vmem:[%s3 + $0x1c] sm:$0xf]
  %v2066 = vld [vmem:[%s3 + $0x20] sm:$0xf]
  %v2067 = vld [vmem:[%s3 + $0x24] sm:$0xf]
  %v2068 = vld [vmem:[%s3 + $0x28] sm:$0xf]
  %v2069 = vld [vmem:[%s3 + $0x2c] sm:$0xf]
  %v2070 = vld [vmem:[%s3 + $0x30] sm:$0xf]
  %v2071 = vld [vmem:[%s3 + $0x34] sm:$0xf]
  %v2072 = vld [vmem:[%s3 + $0x38] sm:$0xf]
  %v2073 = vld [vmem:[%s3 + $0x3c] sm:$0xf]
  %v2074 = vld [vmem:[%s4] sm:$0x1]
  %v2076 = vperm.slane %v2074, 0
  %v2094 = vunpack.c.l.b16 %v2058
  %v2095 = vunpack.c.l.b16 %v2059
  %v2096 = vunpack.c.l.b16 %v2060
  %v2097 = vunpack.c.l.b16 %v2061
  %v2098 = vunpack.c.l.b16 %v2062
  %v2099 = vunpack.c.l.b16 %v2063
  %v2100 = vunpack.c.l.b16 %v2064
  %v2101 = vunpack.c.l.b16 %v2065
  %v2102 = vunpack.c.l.b16 %v2066
  %v2103 = vunpack.c.l.b16 %v2067
  %v2104 = vunpack.c.l.b16 %v2068
  %v2105 = vunpack.c.l.b16 %v2069
  %v2106 = vunpack.c.l.b16 %v2070
  %v2107 = vunpack.c.l.b16 %v2071
  %v2108 = vunpack.c.l.b16 %v2072
  %v2109 = vunpack.c.l.b16 %v2073
  %v2110 = vpack.c.b16 %v2095, %v2094
  %v2111 = vpack.c.b16 %v2097, %v2096
  %v2112 = vpack.c.b16 %v2099, %v2098
  %v2113 = vpack.c.b16 %v2101, %v2100
  %v2114 = vpack.c.b16 %v2103, %v2102
  %v2115 = vpack.c.b16 %v2105, %v2104
  %v2116 = vpack.c.b16 %v2107, %v2106
  %v2117 = vpack.c.b16 %v2109, %v2108
  %2126 = vmatpush.bf16.msra.mxu0 %v2117
  %2127 = vmatpush.bf16.msra.mxu0 %v2116
  %2128 = vmatpush.bf16.msra.mxu0 %v2115
  %2129 = vmatpush.bf16.msra.mxu0 %v2114
  %2130 = vmatpush.bf16.msra.mxu0 %v2113
  %2131 = vmatpush.bf16.msra.mxu0 %v2112
  %2132 = vmatpush.bf16.msra.mxu0 %v2111
  %2133 = vmatpush.bf16.msra.mxu0 %v2110
  %2134 = vmatmul.bf16.gmra.mxu0 %v2057
  %v2135 = vpop.f32.mrf.mxu0
  %v2136 = vadd.f32 %v2076, %v2135
  %v2137 = vpop.f32.mrf.mxu0
  %2138 = vdwg.mxu0
  %v2139 = vmax.f32 %v2136, 0.0
  %v2140 = vpack.c.bf16 %v2139, %v2139
  %v2141 = vld [vmem:[%s5] sm:$0xf]
  %v2142 = vld [vmem:[%s5 + $0x4] sm:$0xf]
  %v2143 = vld [vmem:[%s5 + $0x8] sm:$0xf]
  %v2144 = vld [vmem:[%s5 + $0xc] sm:$0xf]
  %v2145 = vld [vmem:[%s5 + $0x10] sm:$0xf]
  %v2146 = vld [vmem:[%s5 + $0x14] sm:$0xf]
  %v2147 = vld [vmem:[%s5 + $0x18] sm:$0xf]
  %v2148 = vld [vmem:[%s5 + $0x1c] sm:$0xf]
  %v2149 = vld [vmem:[%s5 + $0x20] sm:$0xf]
  %v2150 = vld [vmem:[%s5 + $0x24] sm:$0xf]
  %v2151 = vld [vmem:[%s5 + $0x28] sm:$0xf]
  %v2152 = vld [vmem:[%s5 + $0x2c] sm:$0xf]
  %v2153 = vld [vmem:[%s5 + $0x30] sm:$0xf]
  %v2154 = vld [vmem:[%s5 + $0x34] sm:$0xf]
  %v2155 = vld [vmem:[%s5 + $0x38] sm:$0xf]
  %v2156 = vld [vmem:[%s5 + $0x3c] sm:$0xf]
  %v2157 = vld [vmem:[%s6] sm:$0x1]
  %v2159 = vperm.slane %v2157, 0
  %v2177 = vunpack.c.l.b16 %v2141
  %v2178 = vunpack.c.l.b16 %v2142
  %v2179 = vunpack.c.l.b16 %v2143
  %v2180 = vunpack.c.l.b16 %v2144
  %v2181 = vunpack.c.l.b16 %v2145
  %v2182 = vunpack.c.l.b16 %v2146
  %v2183 = vunpack.c.l.b16 %v2147
  %v2184 = vunpack.c.l.b16 %v2148
  %v2185 = vunpack.c.l.b16 %v2149
  %v2186 = vunpack.c.l.b16 %v2150
  %v2187 = vunpack.c.l.b16 %v2151
  %v2188 = vunpack.c.l.b16 %v2152
  %v2189 = vunpack.c.l.b16 %v2153
  %v2190 = vunpack.c.l.b16 %v2154
  %v2191 = vunpack.c.l.b16 %v2155
  %v2192 = vunpack.c.l.b16 %v2156
  %v2193 = vpack.c.b16 %v2178, %v2177
  %v2194 = vpack.c.b16 %v2180, %v2179
  %v2195 = vpack.c.b16 %v2182, %v2181
  %v2196 = vpack.c.b16 %v2184, %v2183
  %v2197 = vpack.c.b16 %v2186, %v2185
  %v2198 = vpack.c.b16 %v2188, %v2187
  %v2199 = vpack.c.b16 %v2190, %v2189
  %v2200 = vpack.c.b16 %v2192, %v2191
  %2209 = vmatpush.bf16.msra.mxu0 %v2200
  %2210 = vmatpush.bf16.msra.mxu0 %v2199
  %2211 = vmatpush.bf16.msra.mxu0 %v2198
  %2212 = vmatpush.bf16.msra.mxu0 %v2197
  %2213 = vmatpush.bf16.msra.mxu0 %v2196
  %2214 = vmatpush.bf16.msra.mxu0 %v2195
  %2215 = vmatpush.bf16.msra.mxu0 %v2194
  %2216 = vmatpush.bf16.msra.mxu0 %v2193
  %2217 = vmatmul.bf16.gmra.mxu0 %v2140
  %v2218 = vpop.f32.mrf.mxu0
  %v2219 = vadd.f32 %v2159, %v2218
  %v2220 = vpop.f32.mrf.mxu0
  %2221 = vdwg.mxu0
  %2222 = vst [vmem:[%s7] sm:$0xff] %v2219
  // Predicated region
  $region30: #{imagenet_forward.5} parent=0 // pred_check
    _
  $region31: #{imagenet_forward.5} parent=0 // pred_check_branch
    %2224 = sbr.rel (0) target = $region33
  $region32: #{imagenet_forward.5} parent=0 // pred_region
    _
  $region33: #{imagenet_forward.5} parent=0 // pred_fallthru
    _
  // Predicated region
  $region34: #{imagenet_forward.5} parent=0 // pred_check
    _
  $region35: #{imagenet_forward.5} parent=0 // pred_check_branch
    %2226 = sbr.rel (0) target = $region37
  $region36: #{imagenet_forward.5} parent=0 // pred_region
    _
  $region37: #{imagenet_forward.5} parent=0 // pred_fallthru
    _

</llo_original>
